<compile_context>
chip_gen: v5e
topology: v5e:2x2
jax: 0.10.0
libtpu: 0.0.40
codegen_flags: <defaults>
</compile_context>

<pallas_src>
import jax
import jax.numpy as jnp
from jax.experimental import pallas as pl
from jax.experimental.pallas import tpu as pltpu

NEG_SLOPE = 0.01           # nn.LeakyReLU() default
NUM_CLASSES = 5
NUM_CLASSES_PAD = 8        # sublane-aligned one-hot rows
EMB_DIM = 64
HIDDEN = 1024
OUT_DIM = 2
OUT_PAD = 128              # lane-dense output width


def _leaky_relu(x):
    # exact LeakyReLU for negative_slope < 1
    return jnp.maximum(x, NEG_SLOPE * x)


def mlp_kernel(lab_ref, x_ref, t_ref,
               w1t_ref, w1x_ref, w1e_ref, b1_ref,
               w2_ref, b2_ref, w3_ref, b3_ref, out_ref):
    """Entire conditional denoiser MLP, fully VMEM-resident (~2.3 MiB weights)."""
    B = lab_ref.shape[0]

    # ---- embedding lookup + fc1 embedding block as ONE one-hot matmul -------
    # w1e_ref is the pre-folded (8, 1024) bf16 table:  pad(E) @ W1[3:, :].
    labels = lab_ref[...]                                          # (B, 1) int32
    cls = jax.lax.broadcasted_iota(jnp.int32, (B, NUM_CLASSES_PAD), 1)
    onehot = (labels == cls).astype(jnp.bfloat16)                  # (B, 8) bf16
    hemb = jnp.dot(onehot, w1e_ref[...],
                   preferred_element_type=jnp.float32)             # (B, 1024) f32

    # ---- fc1 on the (t | x) rows, computed as split rank-1 updates ----------
    x = x_ref[...]                                                 # (B, 2) f32
    w1x = w1x_ref[...]                                             # (2, 1024) f32
    hx = x[:, 0:1] * w1x[0:1, :] + x[:, 1:2] * w1x[1:2, :]         # (B, 1024)
    ht = t_ref[...] * w1t_ref[...]                                 # (1, 1024) bcast over B
    h = hx + ht + hemb + b1_ref[...]
    h = _leaky_relu(h)

    # ---- fc2 -----------------------------------------------------------------
    h = jnp.dot(h.astype(jnp.bfloat16), w2_ref[...],
                preferred_element_type=jnp.float32) + b2_ref[...]
    h = _leaky_relu(h)

    # ---- fc3 (lane-padded to 128 outputs, unmasked store) --------------------
    o = jnp.dot(h.astype(jnp.bfloat16), w3_ref[...],
                preferred_element_type=jnp.float32) + b3_ref[...]
    out_ref[...] = o.astype(out_ref.dtype)


def diffusion_denoiser_forward(x, t, class_label, prep):
    """x: (B, 2) f32, t: (1, 1) f32, class_label: (B,) int32 -> (B, 2) f32."""
    B = x.shape[0]
    lab = class_label.reshape(B, 1).astype(jnp.int32)

    vmem = pl.BlockSpec(memory_space=pltpu.MemorySpace.VMEM)
    out_pad = pl.pallas_call(
        mlp_kernel,
        out_shape=jax.ShapeDtypeStruct((B, OUT_PAD), jnp.float32),
        in_specs=[vmem] * 11,
        out_specs=vmem,
    )(lab, x, t,
      prep["w1t"], prep["w1x"], prep["w1e"], prep["b1"],
      prep["w2"], prep["b2"],
      prep["w3"], prep["b3"])
    return out_pad[:, :OUT_DIM]


def init_params(key):
    """f32 'module' parameters, mirroring the PyTorch layer shapes."""
    ks = jax.random.split(key, 7)

    def u(k, shape, fan_in):
        bound = 1.0 / jnp.sqrt(fan_in)
        return jax.random.uniform(k, shape, jnp.float32, -bound, bound)

    in_dim = 3 + EMB_DIM
    return {
        "emb": jax.random.normal(ks[0], (NUM_CLASSES, EMB_DIM), jnp.float32),
        "w1": u(ks[1], (in_dim, HIDDEN), in_dim),
        "b1": u(ks[2], (HIDDEN,), in_dim),
        "w2": u(ks[3], (HIDDEN, HIDDEN), HIDDEN),
        "b2": u(ks[4], (HIDDEN,), HIDDEN),
        "w3": u(ks[5], (HIDDEN, OUT_DIM), HIDDEN),
        "b3": u(ks[6], (OUT_DIM,), HIDDEN),
    }


def prepare_params(p):
    """One-time repack: fold embedding into W1, cast big weights to bf16, pad W3/b3."""
    w1 = p["w1"]                                                  # (67, 1024) f32
    # Fold embedding table into the fc1 embedding-row block, in f32, then cast.
    emb_pad_f32 = (jnp.zeros((NUM_CLASSES_PAD, EMB_DIM), jnp.float32)
                   .at[:NUM_CLASSES, :].set(p["emb"]))
    w1e_folded = jnp.dot(emb_pad_f32, w1[3:, :]).astype(jnp.bfloat16)   # (8, 1024)
    w3_pad = (jnp.zeros((HIDDEN, OUT_PAD), jnp.bfloat16)
              .at[:, :OUT_DIM].set(p["w3"].astype(jnp.bfloat16)))
    b3_pad = jnp.zeros((1, OUT_PAD), jnp.float32).at[:, :OUT_DIM].set(p["b3"])
    return {
        "w1t": w1[0:1, :],                                        # (1, 1024)   f32
        "w1x": w1[1:3, :],                                        # (2, 1024)   f32
        "w1e": w1e_folded,                                        # (8, 1024)   bf16
        "b1": p["b1"].reshape(1, HIDDEN),                         # (1, 1024)   f32
        "w2": p["w2"].astype(jnp.bfloat16),                       # (1024,1024) bf16
        "b2": p["b2"].reshape(1, HIDDEN),                         # (1, 1024)   f32
        "w3": w3_pad,                                             # (1024, 128) bf16
        "b3": b3_pad,                                             # (1, 128)    f32
    }


def reference_matched(x, t, class_label, prep):
    """Pure-JAX reference with the SAME folded / bf16 mixed precision as the kernel."""
    onehot = jax.nn.one_hot(class_label, NUM_CLASSES_PAD, dtype=jnp.bfloat16)
    hemb = jnp.dot(onehot, prep["w1e"], preferred_element_type=jnp.float32)
    hx = x[:, 0:1] * prep["w1x"][0:1, :] + x[:, 1:2] * prep["w1x"][1:2, :]
    ht = t * prep["w1t"]
    h = _leaky_relu(hx + ht + hemb + prep["b1"])
    h = _leaky_relu(jnp.dot(h.astype(jnp.bfloat16), prep["w2"],
                            preferred_element_type=jnp.float32) + prep["b2"])
    o = jnp.dot(h.astype(jnp.bfloat16), prep["w3"],
                preferred_element_type=jnp.float32) + prep["b3"]
    return o[:, :OUT_DIM]


def reference_f32(x, t, class_label, p):
    """Full-precision reference matching the original PyTorch module."""
    emb = jnp.take(p["emb"], class_label, axis=0)
    h = jnp.concatenate([jnp.broadcast_to(t, (x.shape[0], 1)), x, emb], axis=1)
    h = _leaky_relu(h @ p["w1"] + p["b1"])
    h = _leaky_relu(h @ p["w2"] + p["b2"])
    return h @ p["w3"] + p["b3"]


if __name__ == "__main__":
    key = jax.random.PRNGKey(0)
    kp, kx, kt, kc = jax.random.split(key, 4)

    B = 8
    params = init_params(kp)
    prep = prepare_params(params)                                 # hoisted out of forward

    x = jax.random.normal(kx, (B, 2), jnp.float32)                # 2-D sample coords
    t = jax.random.uniform(kt, (1, 1), jnp.float32)               # diffusion timestep
    class_label = jax.random.randint(kc, (B,), 0, NUM_CLASSES, jnp.int32)

    fwd = jax.jit(diffusion_denoiser_forward)
    out = jax.block_until_ready(fwd(x, t, class_label, prep))

    ref_bf = reference_matched(x, t, class_label, prep)
    ref_fp = reference_f32(x, t, class_label, params)

    assert out.shape == (B, OUT_DIM)
    assert jnp.allclose(out, ref_bf, atol=2e-2, rtol=2e-2), "mismatch vs bf16-matched reference"
    assert jnp.allclose(out, ref_fp, atol=1e-1, rtol=1e-1), "mismatch vs f32 reference"

    print("KERNEL_OK")
</pallas_src>

<mosaic_0001>
module attributes {stable_mosaic.version = 11 : i64} {
  func.func @mlp_kernel(%arg0: memref<8x1xi32, #tpu.memory_space<vmem>>, %arg1: memref<8x2xf32, #tpu.memory_space<vmem>>, %arg2: memref<1x1xf32, #tpu.memory_space<vmem>>, %arg3: memref<1x1024xf32, #tpu.memory_space<vmem>>, %arg4: memref<2x1024xf32, #tpu.memory_space<vmem>>, %arg5: memref<8x1024xbf16, #tpu.memory_space<vmem>>, %arg6: memref<1x1024xf32, #tpu.memory_space<vmem>>, %arg7: memref<1024x1024xbf16, #tpu.memory_space<vmem>>, %arg8: memref<1x1024xf32, #tpu.memory_space<vmem>>, %arg9: memref<1024x128xbf16, #tpu.memory_space<vmem>>, %arg10: memref<1x128xf32, #tpu.memory_space<vmem>>, %arg11: memref<8x128xf32, #tpu.memory_space<vmem>>) attributes {dimension_semantics = [], scalar_prefetch = 0 : i64, scratch_operands = 0 : i64, tpu.core_type = #tpu.core_type<tc>} {
    %c0 = arith.constant 0 : index
    %c0_0 = arith.constant 0 : index
    %0 = vector.load %arg0[%c0, %c0_0] : memref<8x1xi32, #tpu.memory_space<vmem>>, vector<8x1xi32>
    %1 = tpu.iota {dimensions = array<i32: 1>} : vector<8x8xi32>
    %2 = vector.broadcast %0 : vector<8x1xi32> to vector<8x8xi32>
    %3 = arith.cmpi eq, %2, %1 : vector<8x8xi32>
    %4 = arith.extui %3 : vector<8x8xi1> to vector<8x8xi32>
    %5 = arith.sitofp %4 : vector<8x8xi32> to vector<8x8xf32>
    %6 = arith.truncf %5 : vector<8x8xf32> to vector<8x8xbf16>
    %c0_1 = arith.constant 0 : index
    %c0_2 = arith.constant 0 : index
    %7 = vector.load %arg5[%c0_1, %c0_2] : memref<8x1024xbf16, #tpu.memory_space<vmem>>, vector<8x1024xbf16>
    %cst = arith.constant dense<0.000000e+00> : vector<8x1024xf32>
    %8 = tpu.matmul %6, %7, %cst {dimension_numbers = #tpu.dot_dimension_numbers<[1], [0], [0], [1], [0, 0, 1, 1], [], []>} : vector<8x8xbf16>, vector<8x1024xbf16>, vector<8x1024xf32> -> vector<8x1024xf32>
    %c0_3 = arith.constant 0 : index
    %c0_4 = arith.constant 0 : index
    %9 = vector.load %arg1[%c0_3, %c0_4] : memref<8x2xf32, #tpu.memory_space<vmem>>, vector<8x2xf32>
    %c0_5 = arith.constant 0 : index
    %c0_6 = arith.constant 0 : index
    %10 = vector.load %arg4[%c0_5, %c0_6] : memref<2x1024xf32, #tpu.memory_space<vmem>>, vector<2x1024xf32>
    %11 = vector.extract_strided_slice %9 {offsets = [0, 0], sizes = [8, 1], strides = [1, 1]} : vector<8x2xf32> to vector<8x1xf32>
    %12 = vector.extract_strided_slice %10 {offsets = [0, 0], sizes = [1, 1024], strides = [1, 1]} : vector<2x1024xf32> to vector<1x1024xf32>
    %13 = vector.broadcast %11 : vector<8x1xf32> to vector<8x1024xf32>
    %14 = vector.broadcast %12 : vector<1x1024xf32> to vector<8x1024xf32>
    %15 = arith.mulf %13, %14 : vector<8x1024xf32>
    %16 = vector.extract_strided_slice %9 {offsets = [0, 1], sizes = [8, 1], strides = [1, 1]} : vector<8x2xf32> to vector<8x1xf32>
    %17 = vector.extract_strided_slice %10 {offsets = [1, 0], sizes = [1, 1024], strides = [1, 1]} : vector<2x1024xf32> to vector<1x1024xf32>
    %18 = vector.broadcast %16 : vector<8x1xf32> to vector<8x1024xf32>
    %19 = vector.broadcast %17 : vector<1x1024xf32> to vector<8x1024xf32>
    %20 = arith.mulf %18, %19 : vector<8x1024xf32>
    %21 = arith.addf %15, %20 : vector<8x1024xf32>
    %c0_7 = arith.constant 0 : index
    %c0_8 = arith.constant 0 : index
    %22 = vector.load %arg2[%c0_7, %c0_8] : memref<1x1xf32, #tpu.memory_space<vmem>>, vector<1x1xf32>
    %c0_9 = arith.constant 0 : index
    %c0_10 = arith.constant 0 : index
    %23 = vector.load %arg3[%c0_9, %c0_10] : memref<1x1024xf32, #tpu.memory_space<vmem>>, vector<1x1024xf32>
    %24 = vector.broadcast %22 : vector<1x1xf32> to vector<1x1024xf32>
    %25 = arith.mulf %24, %23 : vector<1x1024xf32>
    %26 = vector.broadcast %25 : vector<1x1024xf32> to vector<8x1024xf32>
    %27 = arith.addf %21, %26 : vector<8x1024xf32>
    %28 = arith.addf %27, %8 : vector<8x1024xf32>
    %c0_11 = arith.constant 0 : index
    %c0_12 = arith.constant 0 : index
    %29 = vector.load %arg6[%c0_11, %c0_12] : memref<1x1024xf32, #tpu.memory_space<vmem>>, vector<1x1024xf32>
    %30 = vector.broadcast %29 : vector<1x1024xf32> to vector<8x1024xf32>
    %31 = arith.addf %28, %30 : vector<8x1024xf32>
    %cst_13 = arith.constant 0.00999999977 : f32
    %32 = vector.broadcast %cst_13 : f32 to vector<8x1024xf32>
    %33 = arith.mulf %32, %31 : vector<8x1024xf32>
    %34 = arith.maximumf %31, %33 : vector<8x1024xf32>
    %35 = arith.truncf %34 : vector<8x1024xf32> to vector<8x1024xbf16>
    %c0_14 = arith.constant 0 : index
    %c0_15 = arith.constant 0 : index
    %36 = vector.load %arg7[%c0_14, %c0_15] : memref<1024x1024xbf16, #tpu.memory_space<vmem>>, vector<1024x1024xbf16>
    %cst_16 = arith.constant dense<0.000000e+00> : vector<8x1024xf32>
    %37 = tpu.matmul %35, %36, %cst_16 {dimension_numbers = #tpu.dot_dimension_numbers<[1], [0], [0], [1], [0, 0, 1, 1], [], []>} : vector<8x1024xbf16>, vector<1024x1024xbf16>, vector<8x1024xf32> -> vector<8x1024xf32>
    %c0_17 = arith.constant 0 : index
    %c0_18 = arith.constant 0 : index
    %38 = vector.load %arg8[%c0_17, %c0_18] : memref<1x1024xf32, #tpu.memory_space<vmem>>, vector<1x1024xf32>
    %39 = vector.broadcast %38 : vector<1x1024xf32> to vector<8x1024xf32>
    %40 = arith.addf %37, %39 : vector<8x1024xf32>
    %cst_19 = arith.constant 0.00999999977 : f32
    %41 = vector.broadcast %cst_19 : f32 to vector<8x1024xf32>
    %42 = arith.mulf %41, %40 : vector<8x1024xf32>
    %43 = arith.maximumf %40, %42 : vector<8x1024xf32>
    %44 = arith.truncf %43 : vector<8x1024xf32> to vector<8x1024xbf16>
    %c0_20 = arith.constant 0 : index
    %c0_21 = arith.constant 0 : index
    %45 = vector.load %arg9[%c0_20, %c0_21] : memref<1024x128xbf16, #tpu.memory_space<vmem>>, vector<1024x128xbf16>
    %cst_22 = arith.constant dense<0.000000e+00> : vector<8x128xf32>
    %46 = tpu.matmul %44, %45, %cst_22 {dimension_numbers = #tpu.dot_dimension_numbers<[1], [0], [0], [1], [0, 0, 1, 1], [], []>} : vector<8x1024xbf16>, vector<1024x128xbf16>, vector<8x128xf32> -> vector<8x128xf32>
    %c0_23 = arith.constant 0 : index
    %c0_24 = arith.constant 0 : index
    %47 = vector.load %arg10[%c0_23, %c0_24] : memref<1x128xf32, #tpu.memory_space<vmem>>, vector<1x128xf32>
    %48 = vector.broadcast %47 : vector<1x128xf32> to vector<8x128xf32>
    %49 = arith.addf %46, %48 : vector<8x128xf32>
    %c0_25 = arith.constant 0 : index
    %c0_26 = arith.constant 0 : index
    %50 = vector.load %arg11[%c0_25, %c0_26] : memref<8x128xf32, #tpu.memory_space<vmem>>, vector<8x128xf32>
    tpu.vector_store %arg11[%c0_25, %c0_26], %49 {strides = array<i32>} : memref<8x128xf32, #tpu.memory_space<vmem>>, vector<8x128xf32>,
    return
  }
}

</mosaic_0001>

<llo_original>
// kernel: diffusion_denoiser_forward.1
$region0: #{diffusion_denoiser_forward.1}
  #allocation0 [shape = 'u32[]', space=smem, size = 0x4, offset = 0x4, fixed_abs, tag = 'smem constant byte address 0x4 - core index']
  #allocation1 [shape = 'u32[72,128]{1,0:T(1,128)}', space=vmem, size = 0x9000, scoped, tag = 'internal scratch']
  #allocation2 [shape = 'f32[1,1]{1,0:T(1,128)S(1)}', space=vmem, size = 0x200, scoped, tag = 'scoped memory for diffusion_denoiser_forward.1']
  %s0 = inlined_call_operand.vmem [shape: s32[8,1], index: 0, kind: input, shape index: {}]
  %s1 = inlined_call_operand.vmem [shape: f32[8,2], index: 1, kind: input, shape index: {}]
  %s2 = inlined_call_operand.<no memory space> [shape: f32[1,1], index: 2, kind: input, shape index: {}]
  %s3 = inlined_call_operand.hbm [shape: f32[1,1024], index: 3, kind: input, shape index: {}]
  %s4 = inlined_call_operand.hbm [shape: f32[2,1024], index: 4, kind: input, shape index: {}]
  %s5 = inlined_call_operand.hbm [shape: bf16[8,1024], index: 5, kind: input, shape index: {}]
  %s6 = inlined_call_operand.hbm [shape: f32[1,1024], index: 6, kind: input, shape index: {}]
  %s7 = inlined_call_operand.hbm [shape: bf16[1024,1024], index: 7, kind: input, shape index: {}]
  %s8 = inlined_call_operand.hbm [shape: f32[1,1024], index: 8, kind: input, shape index: {}]
  %s9 = inlined_call_operand.hbm [shape: bf16[1024,128], index: 9, kind: input, shape index: {}]
  %s10 = inlined_call_operand.hbm [shape: f32[1,128], index: 10, kind: input, shape index: {}]
  %s11 = inlined_call_operand.vmem [shape: f32[8,128], index: 11, kind: output, shape index: {}]
  %s12 = sld [smem:[#allocation0]]
  $region86: #{diffusion_denoiser_forward.1} parent=0
    _
  %s14 = ssub.s32 1, %s12
  %s15 = scalar_select 0, %s14, %s12
  %v16 = vstv %s2
  %17 = vst [vmem:[#allocation2] sm:$0x1] %v16
  $region1: #{diffusion_denoiser_forward.1} parent=0
    #allocation3 [shape = 'u8[4096]{0}', space=vmem, size = 0x1000, scoped, tag = 'input window, operand 3, single buffered']
    #allocation4 [shape = 's32[1]{0}', space=sflag, size = 0x4, scoped, tag = 'scoped memory for diffusion_denoiser_forward.1']
    #allocation5 [shape = 'u8[8192]{0}', space=vmem, size = 0x2000, scoped, tag = 'input window, operand 4, single buffered']
    #allocation6 [shape = 's32[1]{0}', space=sflag, size = 0x4, scoped, tag = 'scoped memory for diffusion_denoiser_forward.1']
    #allocation7 [shape = 'u8[16384]{0}', space=vmem, size = 0x4000, scoped, tag = 'input window, operand 5, single buffered']
    #allocation8 [shape = 'u8[4096]{0}', space=vmem, size = 0x1000, scoped, tag = 'input window, operand 6, single buffered']
    #allocation9 [shape = 's32[1]{0}', space=sflag, size = 0x4, scoped, tag = 'scoped memory for diffusion_denoiser_forward.1']
    #allocation10 [shape = 'u8[2097152]{0}', space=vmem, size = 0x200000, scoped, tag = 'input window, operand 7, single buffered']
    #allocation11 [shape = 'u8[4096]{0}', space=vmem, size = 0x1000, scoped, tag = 'input window, operand 8, single buffered']
    #allocation12 [shape = 's32[1]{0}', space=sflag, size = 0x4, scoped, tag = 'scoped memory for diffusion_denoiser_forward.1']
    #allocation13 [shape = 'u8[262144]{0}', space=vmem, size = 0x40000, scoped, tag = 'input window, operand 9, single buffered']
    #allocation14 [shape = 'u8[512]{0}', space=vmem, size = 0x400, scoped, tag = 'input window, operand 10, single buffered']
    #allocation15 [shape = 's32[1]{0}', space=sflag, size = 0x4, scoped, tag = 'scoped memory for diffusion_denoiser_forward.1']
    %18 = vsyncpa [#allocation4], 0
    %19 = vsyncpa [#allocation6], 0
    %20 = vsyncpa [#allocation9], 0
    %21 = vsyncpa [#allocation12], 0
    %22 = vsyncpa [#allocation15], 0
    // Predicated region
    $region2: #{diffusion_denoiser_forward.1} parent=1 // pred_check
      _
    $region3: #{diffusion_denoiser_forward.1} parent=1 // pred_check_branch
      %24 = sbr.rel (0) target = $region5
    $region4: #{diffusion_denoiser_forward.1} parent=1 // pred_region
      _
    $region5: #{diffusion_denoiser_forward.1} parent=1 // pred_fallthru
      _
    // Predicated region
    $region6: #{diffusion_denoiser_forward.1} parent=1 // pred_check
      _
    $region7: #{diffusion_denoiser_forward.1} parent=1 // pred_check_branch
      %26 = sbr.rel (0) target = $region9
    $region8: #{diffusion_denoiser_forward.1} parent=1 // pred_region
      _
    $region9: #{diffusion_denoiser_forward.1} parent=1 // pred_fallthru
      _
    // Predicated region
    $region10: #{diffusion_denoiser_forward.1} parent=1 // pred_check
      _
    $region11: #{diffusion_denoiser_forward.1} parent=1 // pred_check_branch
      %28 = sbr.rel (0) target = $region13
    $region12: #{diffusion_denoiser_forward.1} parent=1 // pred_region
      _
    $region13: #{diffusion_denoiser_forward.1} parent=1 // pred_fallthru
      _
    // Predicated region
    $region14: #{diffusion_denoiser_forward.1} parent=1 // pred_check
      _
    $region15: #{diffusion_denoiser_forward.1} parent=1 // pred_check_branch
      %30 = sbr.rel (0) target = $region17
    $region16: #{diffusion_denoiser_forward.1} parent=1 // pred_region
      %32 = vsyncadd [#allocation4], 0
      %s34 = sshll.u32 %s3, 4
      %s35 = int_to_ptr.hbm [resolvable:$true] %s34
      %s36 = sshll.u32 [#allocation3], 4
      %s37 = int_to_ptr.vmem [resolvable:$true] %s36
      %39 = dma.hbm_to_vmem [thread:$0]  %s35, 128, %s37, [#allocation4]
    $region17: #{diffusion_denoiser_forward.1} parent=1 // pred_fallthru
      _
    // Predicated region
    $region18: #{diffusion_denoiser_forward.1} parent=1 // pred_check
      _
    $region19: #{diffusion_denoiser_forward.1} parent=1 // pred_check_branch
      %41 = sbr.rel (0) target = $region21
    $region20: #{diffusion_denoiser_forward.1} parent=1 // pred_region
      %43 = vsyncadd [#allocation6], 0
      %s45 = sshll.u32 %s4, 4
      %s46 = int_to_ptr.hbm [resolvable:$true] %s45
      %s47 = sshll.u32 [#allocation5], 4
      %s48 = int_to_ptr.vmem [resolvable:$true] %s47
      %50 = dma.hbm_to_vmem [thread:$0]  %s46, 256, %s48, [#allocation6]
    $region21: #{diffusion_denoiser_forward.1} parent=1 // pred_fallthru
      _
    // Predicated region
    $region22: #{diffusion_denoiser_forward.1} parent=1 // pred_check
      _
    $region23: #{diffusion_denoiser_forward.1} parent=1 // pred_check_branch
      %52 = sbr.rel (0) target = $region25
    $region24: #{diffusion_denoiser_forward.1} parent=1 // pred_region
      %54 = vsyncadd [#allocation6], 0
      %s56 = sshll.u32 %s5, 4
      %s57 = int_to_ptr.hbm [resolvable:$true] %s56
      %s58 = sshll.u32 [#allocation7], 4
      %s59 = int_to_ptr.vmem [resolvable:$true] %s58
      %61 = dma.hbm_to_vmem [thread:$0]  %s57, 512, %s59, [#allocation6]
    $region25: #{diffusion_denoiser_forward.1} parent=1 // pred_fallthru
      _
    // Predicated region
    $region26: #{diffusion_denoiser_forward.1} parent=1 // pred_check
      _
    $region27: #{diffusion_denoiser_forward.1} parent=1 // pred_check_branch
      %63 = sbr.rel (0) target = $region29
    $region28: #{diffusion_denoiser_forward.1} parent=1 // pred_region
      %65 = vsyncadd [#allocation9], 0
      %s67 = sshll.u32 %s6, 4
      %s68 = int_to_ptr.hbm [resolvable:$true] %s67
      %s69 = sshll.u32 [#allocation8], 4
      %s70 = int_to_ptr.vmem [resolvable:$true] %s69
      %72 = dma.hbm_to_vmem [thread:$0]  %s68, 128, %s70, [#allocation9]
    $region29: #{diffusion_denoiser_forward.1} parent=1 // pred_fallthru
      _
    // Predicated region
    $region30: #{diffusion_denoiser_forward.1} parent=1 // pred_check
      _
    $region31: #{diffusion_denoiser_forward.1} parent=1 // pred_check_branch
      %74 = sbr.rel (0) target = $region33
    $region32: #{diffusion_denoiser_forward.1} parent=1 // pred_region
      %76 = vsyncadd [#allocation9], 0
      %s77 = sshll.u32 %s7, 4
      %s78 = int_to_ptr.hbm [resolvable:$true] %s77
      %s79 = sshll.u32 [#allocation10], 4
      %s80 = int_to_ptr.vmem [resolvable:$true] %s79
      %85 = dma.hbm_to_vmem [thread:$0]  %s78, 65536, %s80, [#allocation9], 512, 512, 32
    $region33: #{diffusion_denoiser_forward.1} parent=1 // pred_fallthru
      _
    // Predicated region
    $region34: #{diffusion_denoiser_forward.1} parent=1 // pred_check
      _
    $region35: #{diffusion_denoiser_forward.1} parent=1 // pred_check_branch
      %87 = sbr.rel (0) target = $region37
    $region36: #{diffusion_denoiser_forward.1} parent=1 // pred_region
      %89 = vsyncadd [#allocation12], 0
      %s91 = sshll.u32 %s8, 4
      %s92 = int_to_ptr.hbm [resolvable:$true] %s91
      %s93 = sshll.u32 [#allocation11], 4
      %s94 = int_to_ptr.vmem [resolvable:$true] %s93
      %96 = dma.hbm_to_vmem [thread:$0]  %s92, 128, %s94, [#allocation12]
    $region37: #{diffusion_denoiser_forward.1} parent=1 // pred_fallthru
      _
    // Predicated region
    $region38: #{diffusion_denoiser_forward.1} parent=1 // pred_check
      _
    $region39: #{diffusion_denoiser_forward.1} parent=1 // pred_check_branch
      %98 = sbr.rel (0) target = $region41
    $region40: #{diffusion_denoiser_forward.1} parent=1 // pred_region
      %100 = vsyncadd [#allocation12], 0
      %s101 = sshll.u32 %s9, 4
      %s102 = int_to_ptr.hbm [resolvable:$true] %s101
      %s103 = sshll.u32 [#allocation13], 4
      %s104 = int_to_ptr.vmem [resolvable:$true] %s103
      %109 = dma.hbm_to_vmem [thread:$0]  %s102, 8192, %s104, [#allocation12], 64, 64, 4
    $region41: #{diffusion_denoiser_forward.1} parent=1 // pred_fallthru
      _
    // Predicated region
    $region42: #{diffusion_denoiser_forward.1} parent=1 // pred_check
      _
    $region43: #{diffusion_denoiser_forward.1} parent=1 // pred_check_branch
      %111 = sbr.rel (0) target = $region45
    $region44: #{diffusion_denoiser_forward.1} parent=1 // pred_region
      %113 = vsyncadd [#allocation15], 0
      %s115 = sshll.u32 %s10, 4
      %s116 = int_to_ptr.hbm [resolvable:$true] %s115
      %s117 = sshll.u32 [#allocation14], 4
      %s118 = int_to_ptr.vmem [resolvable:$true] %s117
      %120 = dma.hbm_to_vmem [thread:$0]  %s116, 16, %s118, [#allocation15]
    $region45: #{diffusion_denoiser_forward.1} parent=1 // pred_fallthru
      _
    // Predicated region
    $region46: #{diffusion_denoiser_forward.1} parent=1 // pred_check
      _
    $region47: #{diffusion_denoiser_forward.1} parent=1 // pred_check_branch
      %122 = sbr.rel (0) target = $region49
    $region48: #{diffusion_denoiser_forward.1} parent=1 // pred_region
      %124 = dma.done [#allocation4], 128
    $region49: #{diffusion_denoiser_forward.1} parent=1 // pred_fallthru
      _
    // Predicated region
    $region50: #{diffusion_denoiser_forward.1} parent=1 // pred_check
      _
    $region51: #{diffusion_denoiser_forward.1} parent=1 // pred_check_branch
      %126 = sbr.rel (0) target = $region53
    $region52: #{diffusion_denoiser_forward.1} parent=1 // pred_region
      %128 = dma.done [#allocation6], 256
    $region53: #{diffusion_denoiser_forward.1} parent=1 // pred_fallthru
      _
    // Predicated region
    $region54: #{diffusion_denoiser_forward.1} parent=1 // pred_check
      _
    $region55: #{diffusion_denoiser_forward.1} parent=1 // pred_check_branch
      %130 = sbr.rel (0) target = $region57
    $region56: #{diffusion_denoiser_forward.1} parent=1 // pred_region
      %132 = dma.done [#allocation6], 512
    $region57: #{diffusion_denoiser_forward.1} parent=1 // pred_fallthru
      _
    // Predicated region
    $region58: #{diffusion_denoiser_forward.1} parent=1 // pred_check
      _
    $region59: #{diffusion_denoiser_forward.1} parent=1 // pred_check_branch
      %134 = sbr.rel (0) target = $region61
    $region60: #{diffusion_denoiser_forward.1} parent=1 // pred_region
      %136 = dma.done [#allocation9], 128
    $region61: #{diffusion_denoiser_forward.1} parent=1 // pred_fallthru
      _
    // Predicated region
    $region62: #{diffusion_denoiser_forward.1} parent=1 // pred_check
      _
    $region63: #{diffusion_denoiser_forward.1} parent=1 // pred_check_branch
      %138 = sbr.rel (0) target = $region65
    $region64: #{diffusion_denoiser_forward.1} parent=1 // pred_region
      %140 = dma.done [#allocation9], 65536
    $region65: #{diffusion_denoiser_forward.1} parent=1 // pred_fallthru
      _
    // Predicated region
    $region66: #{diffusion_denoiser_forward.1} parent=1 // pred_check
      _
    $region67: #{diffusion_denoiser_forward.1} parent=1 // pred_check_branch
      %142 = sbr.rel (0) target = $region69
    $region68: #{diffusion_denoiser_forward.1} parent=1 // pred_region
      %144 = dma.done [#allocation12], 128
    $region69: #{diffusion_denoiser_forward.1} parent=1 // pred_fallthru
      _
    // Predicated region
    $region70: #{diffusion_denoiser_forward.1} parent=1 // pred_check
      _
    $region71: #{diffusion_denoiser_forward.1} parent=1 // pred_check_branch
      %146 = sbr.rel (0) target = $region73
    $region72: #{diffusion_denoiser_forward.1} parent=1 // pred_region
      %148 = dma.done [#allocation12], 8192
    $region73: #{diffusion_denoiser_forward.1} parent=1 // pred_fallthru
      _
    // Predicated region
    $region74: #{diffusion_denoiser_forward.1} parent=1 // pred_check
      _
    $region75: #{diffusion_denoiser_forward.1} parent=1 // pred_check_branch
      %150 = sbr.rel (0) target = $region77
    $region76: #{diffusion_denoiser_forward.1} parent=1 // pred_region
      %152 = dma.done [#allocation15], 16
    $region77: #{diffusion_denoiser_forward.1} parent=1 // pred_fallthru
      _
    %v154 = vld [vmem:[%s0] sm:$0xff]
    %v155 = vlaneseq
    %v156 = vand.u32 %v155, 127
    %157 = vset.pattern.permute.xlu0 0
    %158 = vperm.xlu0 %157, %v154
    %v159 = vpop.permute.xlu0 %158
    %vm160 = vcmp.eq.s32.totalorder %v159, %v156
    %v161 = vsel %vm160, 1, 0
    %v162 = vcvt.s32.f32 %v161
    %v163 = vpack.c.bf16 %v162, %v162
    %v164 = vld [vmem:[#allocation7] sm:$0xff]
    %v165 = vld [vmem:[#allocation7 + $0x8] sm:$0xff]
    %v166 = vld [vmem:[#allocation7 + $0x10] sm:$0xff]
    %v167 = vld [vmem:[#allocation7 + $0x18] sm:$0xff]
    %v172 = vunpack.c.l.b16 %v164
    %v173 = vunpack.c.h.b16 %v164
    %v174 = vunpack.c.l.b16 %v165
    %v175 = vunpack.c.h.b16 %v165
    %v176 = vunpack.c.l.b16 %v166
    %v177 = vunpack.c.h.b16 %v166
    %v178 = vunpack.c.l.b16 %v167
    %v179 = vunpack.c.h.b16 %v167
    %v180 = vpack.c.b16 %v172, %v172
    %v181 = vpack.c.b16 %v173, %v173
    %v182 = vpack.c.b16 %v174, %v174
    %v183 = vpack.c.b16 %v175, %v175
    %v184 = vpack.c.b16 %v176, %v176
    %v185 = vpack.c.b16 %v177, %v177
    %v186 = vpack.c.b16 %v178, %v178
    %v187 = vpack.c.b16 %v179, %v179
    %vm188 = vcmask 64512
    %v190 = vsel %vm188, %v163, 0
    %vm192 = vcmask 1043456
    %v194 = vsel %vm192, %v180, 0
    %v197 = vsel %vm192, %v181, 0
    %v200 = vsel %vm192, %v182, 0
    %v203 = vsel %vm192, %v183, 0
    %v206 = vsel %vm192, %v184, 0
    %v209 = vsel %vm192, %v185, 0
    %v212 = vsel %vm192, %v186, 0
    %v215 = vsel %vm192, %v187, 0
    %217 = vmatpush.bf16.msra.mxu0 0
    %218 = vmatpush.bf16.msra.mxu0 0
    %219 = vmatpush.bf16.msra.mxu0 0
    %220 = vmatpush.bf16.msra.mxu0 0
    %221 = vmatpush.bf16.msra.mxu0 0
    %222 = vmatpush.bf16.msra.mxu0 0
    %223 = vmatpush.bf16.msra.mxu0 0
    %224 = vmatpush.bf16.msra.mxu0 %v194
    %225 = vmatmul.bf16.gmra.mxu0 %v190
    %v226 = vpop.f32.mrf.mxu0
    %v227 = vadd.f32 0.0, %v226
    %v228 = vpop.f32.mrf.mxu0
    %229 = vdwg.mxu0
    %230 = vmatpush.bf16.msra.mxu0 0
    %231 = vmatpush.bf16.msra.mxu0 0
    %232 = vmatpush.bf16.msra.mxu0 0
    %233 = vmatpush.bf16.msra.mxu0 0
    %234 = vmatpush.bf16.msra.mxu0 0
    %235 = vmatpush.bf16.msra.mxu0 0
    %236 = vmatpush.bf16.msra.mxu0 0
    %237 = vmatpush.bf16.msra.mxu0 %v197
    %238 = vmatmul.bf16.gmra.mxu0 %v190
    %v239 = vpop.f32.mrf.mxu0
    %v240 = vadd.f32 0.0, %v239
    %v241 = vpop.f32.mrf.mxu0
    %242 = vdwg.mxu0
    %243 = vmatpush.bf16.msra.mxu0 0
    %244 = vmatpush.bf16.msra.mxu0 0
    %245 = vmatpush.bf16.msra.mxu0 0
    %246 = vmatpush.bf16.msra.mxu0 0
    %247 = vmatpush.bf16.msra.mxu0 0
    %248 = vmatpush.bf16.msra.mxu0 0
    %249 = vmatpush.bf16.msra.mxu0 0
    %250 = vmatpush.bf16.msra.mxu0 %v200
    %251 = vmatmul.bf16.gmra.mxu0 %v190
    %v252 = vpop.f32.mrf.mxu0
    %v253 = vadd.f32 0.0, %v252
    %v254 = vpop.f32.mrf.mxu0
    %255 = vdwg.mxu0
    %256 = vmatpush.bf16.msra.mxu0 0
    %257 = vmatpush.bf16.msra.mxu0 0
    %258 = vmatpush.bf16.msra.mxu0 0
    %259 = vmatpush.bf16.msra.mxu0 0
    %260 = vmatpush.bf16.msra.mxu0 0
    %261 = vmatpush.bf16.msra.mxu0 0
    %262 = vmatpush.bf16.msra.mxu0 0
    %263 = vmatpush.bf16.msra.mxu0 %v203
    %264 = vmatmul.bf16.gmra.mxu0 %v190
    %v265 = vpop.f32.mrf.mxu0
    %v266 = vadd.f32 0.0, %v265
    %v267 = vpop.f32.mrf.mxu0
    %268 = vdwg.mxu0
    %269 = vmatpush.bf16.msra.mxu0 0
    %270 = vmatpush.bf16.msra.mxu0 0
    %271 = vmatpush.bf16.msra.mxu0 0
    %272 = vmatpush.bf16.msra.mxu0 0
    %273 = vmatpush.bf16.msra.mxu0 0
    %274 = vmatpush.bf16.msra.mxu0 0
    %275 = vmatpush.bf16.msra.mxu0 0
    %276 = vmatpush.bf16.msra.mxu0 %v206
    %277 = vmatmul.bf16.gmra.mxu0 %v190
    %v278 = vpop.f32.mrf.mxu0
    %v279 = vadd.f32 0.0, %v278
    %v280 = vpop.f32.mrf.mxu0
    %281 = vdwg.mxu0
    %282 = vmatpush.bf16.msra.mxu0 0
    %283 = vmatpush.bf16.msra.mxu0 0
    %284 = vmatpush.bf16.msra.mxu0 0
    %285 = vmatpush.bf16.msra.mxu0 0
    %286 = vmatpush.bf16.msra.mxu0 0
    %287 = vmatpush.bf16.msra.mxu0 0
    %288 = vmatpush.bf16.msra.mxu0 0
    %289 = vmatpush.bf16.msra.mxu0 %v209
    %290 = vmatmul.bf16.gmra.mxu0 %v190
    %v291 = vpop.f32.mrf.mxu0
    %v292 = vadd.f32 0.0, %v291
    %v293 = vpop.f32.mrf.mxu0
    %294 = vdwg.mxu0
    %295 = vmatpush.bf16.msra.mxu0 0
    %296 = vmatpush.bf16.msra.mxu0 0
    %297 = vmatpush.bf16.msra.mxu0 0
    %298 = vmatpush.bf16.msra.mxu0 0
    %299 = vmatpush.bf16.msra.mxu0 0
    %300 = vmatpush.bf16.msra.mxu0 0
    %301 = vmatpush.bf16.msra.mxu0 0
    %302 = vmatpush.bf16.msra.mxu0 %v212
    %303 = vmatmul.bf16.gmra.mxu0 %v190
    %v304 = vpop.f32.mrf.mxu0
    %v305 = vadd.f32 0.0, %v304
    %v306 = vpop.f32.mrf.mxu0
    %307 = vdwg.mxu0
    %308 = vmatpush.bf16.msra.mxu0 0
    %309 = vmatpush.bf16.msra.mxu0 0
    %310 = vmatpush.bf16.msra.mxu0 0
    %311 = vmatpush.bf16.msra.mxu0 0
    %312 = vmatpush.bf16.msra.mxu0 0
    %313 = vmatpush.bf16.msra.mxu0 0
    %314 = vmatpush.bf16.msra.mxu0 0
    %315 = vmatpush.bf16.msra.mxu0 %v215
    %316 = vmatmul.bf16.gmra.mxu0 %v190
    %v317 = vpop.f32.mrf.mxu0
    %v318 = vadd.f32 0.0, %v317
    %v319 = vpop.f32.mrf.mxu0
    %320 = vdwg.mxu0
    %v321 = vld [vmem:[%s1] sm:$0xff]
    %v322 = vld [vmem:[#allocation5] sm:$0xff]
    %v323 = vld [vmem:[#allocation5 + $0x8] sm:$0xff]
    %325 = vset.pattern.permute.xlu0 0
    %326 = vperm.xlu0 %325, %v321
    %v327 = vpop.permute.xlu0 %326
    %v331 = vperm.slane %v322, 0
    %v332 = vperm.slane %v322, 2
    %v333 = vperm.slane %v322, 4
    %v334 = vperm.slane %v322, 6
    %v335 = vperm.slane %v323, 0
    %v336 = vperm.slane %v323, 2
    %v337 = vperm.slane %v323, 4
    %v338 = vperm.slane %v323, 6
    %v347 = vperm.slane %v331, 0
    %v348 = vperm.slane %v332, 0
    %v349 = vperm.slane %v333, 0
    %v350 = vperm.slane %v334, 0
    %v351 = vperm.slane %v335, 0
    %v352 = vperm.slane %v336, 0
    %v353 = vperm.slane %v337, 0
    %v354 = vperm.slane %v338, 0
    %v355 = vmul.f32 %v327, %v347
    %v356 = vmul.f32 %v327, %v348
    %v357 = vmul.f32 %v327, %v349
    %v358 = vmul.f32 %v327, %v350
    %v359 = vmul.f32 %v327, %v351
    %v360 = vmul.f32 %v327, %v352
    %v361 = vmul.f32 %v327, %v353
    %v362 = vmul.f32 %v327, %v354
    %363 = vset.pattern.permute.xlu0 1
    %364 = vperm.xlu0 %363, %v321
    %v365 = vpop.permute.xlu0 %364
    %v367 = vperm.slane %v322, 1
    %v368 = vperm.slane %v322, 3
    %v369 = vperm.slane %v322, 5
    %v370 = vperm.slane %v322, 7
    %v371 = vperm.slane %v323, 1
    %v372 = vperm.slane %v323, 3
    %v373 = vperm.slane %v323, 5
    %v374 = vperm.slane %v323, 7
    %v383 = vperm.slane %v367, 1
    %v384 = vperm.slane %v368, 1
    %v385 = vperm.slane %v369, 1
    %v386 = vperm.slane %v370, 1
    %v387 = vperm.slane %v371, 1
    %v388 = vperm.slane %v372, 1
    %v389 = vperm.slane %v373, 1
    %v390 = vperm.slane %v374, 1
    %v391 = vmul.f32 %v365, %v383
    %v392 = vmul.f32 %v365, %v384
    %v393 = vmul.f32 %v365, %v385
    %v394 = vmul.f32 %v365, %v386
    %v395 = vmul.f32 %v365, %v387
    %v396 = vmul.f32 %v365, %v388
    %v397 = vmul.f32 %v365, %v389
    %v398 = vmul.f32 %v365, %v390
    %v399 = vadd.f32 %v355, %v391
    %v400 = vadd.f32 %v356, %v392
    %v401 = vadd.f32 %v357, %v393
    %v402 = vadd.f32 %v358, %v394
    %v403 = vadd.f32 %v359, %v395
    %v404 = vadd.f32 %v360, %v396
    %v405 = vadd.f32 %v361, %v397
    %v406 = vadd.f32 %v362, %v398
    %v407 = vld [vmem:[#allocation2] sm:$0x1]
    %v408 = vld [vmem:[#allocation3] sm:$0xff]
    %410 = vset.pattern.permute.xlu0 0
    %411 = vperm.xlu0 %410, %v407
    %v412 = vpop.permute.xlu0 %411
    %v414 = vperm.slane %v412, 0
    %v415 = vmul.f32 %v414, %v408
    %v417 = vperm.slane %v415, 0
    %v418 = vperm.slane %v415, 1
    %v419 = vperm.slane %v415, 2
    %v420 = vperm.slane %v415, 3
    %v421 = vperm.slane %v415, 4
    %v422 = vperm.slane %v415, 5
    %v423 = vperm.slane %v415, 6
    %v424 = vperm.slane %v415, 7
    %v433 = vadd.f32 %v399, %v417
    %v434 = vadd.f32 %v400, %v418
    %v435 = vadd.f32 %v401, %v419
    %v436 = vadd.f32 %v402, %v420
    %v437 = vadd.f32 %v403, %v421
    %v438 = vadd.f32 %v404, %v422
    %v439 = vadd.f32 %v405, %v423
    %v440 = vadd.f32 %v406, %v424
    %v441 = vadd.f32 %v433, %v227
    %v442 = vadd.f32 %v434, %v240
    %v443 = vadd.f32 %v435, %v253
    %v444 = vadd.f32 %v436, %v266
    %v445 = vadd.f32 %v437, %v279
    %v446 = vadd.f32 %v438, %v292
    %v447 = vadd.f32 %v439, %v305
    %v448 = vadd.f32 %v440, %v318
    %v449 = vld [vmem:[#allocation8] sm:$0xff]
    %v451 = vperm.slane %v449, 0
    %v452 = vperm.slane %v449, 1
    %v453 = vperm.slane %v449, 2
    %v454 = vperm.slane %v449, 3
    %v455 = vperm.slane %v449, 4
    %v456 = vperm.slane %v449, 5
    %v457 = vperm.slane %v449, 6
    %v458 = vperm.slane %v449, 7
    %v467 = vadd.f32 %v441, %v451
    %v468 = vadd.f32 %v442, %v452
    %v469 = vadd.f32 %v443, %v453
    %v470 = vadd.f32 %v444, %v454
    %v471 = vadd.f32 %v445, %v455
    %v472 = vadd.f32 %v446, %v456
    %v473 = vadd.f32 %v447, %v457
    %v474 = vadd.f32 %v448, %v458
    %v475 = vmul.f32 %v467, 0.01
    %v476 = vmul.f32 %v468, 0.01
    %v477 = vmul.f32 %v469, 0.01
    %v478 = vmul.f32 %v470, 0.01
    %v479 = vmul.f32 %v471, 0.01
    %v480 = vmul.f32 %v472, 0.01
    %v481 = vmul.f32 %v473, 0.01
    %v482 = vmul.f32 %v474, 0.01
    %v483 = vmax.f32 %v467, %v475
    %v484 = vmax.f32 %v468, %v476
    %v485 = vmax.f32 %v469, %v477
    %v486 = vmax.f32 %v470, %v478
    %v487 = vmax.f32 %v471, %v479
    %v488 = vmax.f32 %v472, %v480
    %v489 = vmax.f32 %v473, %v481
    %v490 = vmax.f32 %v474, %v482
    %v491 = vpack.c.bf16 %v483, %v483
    %v492 = vpack.c.bf16 %v484, %v484
    %v493 = vpack.c.bf16 %v485, %v485
    %v494 = vpack.c.bf16 %v486, %v486
    %v495 = vpack.c.bf16 %v487, %v487
    %v496 = vpack.c.bf16 %v488, %v488
    %v497 = vpack.c.bf16 %v489, %v489
    %v498 = vpack.c.bf16 %v490, %v490
    %v499 = vld [vmem:[#allocation10] sm:$0xff]
    %v500 = vld [vmem:[#allocation10 + $0x8] sm:$0xff]
    %v501 = vld [vmem:[#allocation10 + $0x10] sm:$0xff]
    %v502 = vld [vmem:[#allocation10 + $0x18] sm:$0xff]
    %v503 = vld [vmem:[#allocation10 + $0x20] sm:$0xff]
    %v504 = vld [vmem:[#allocation10 + $0x28] sm:$0xff]
    %v505 = vld [vmem:[#allocation10 + $0x30] sm:$0xff]
    %v506 = vld [vmem:[#allocation10 + $0x38] sm:$0xff]
    %v507 = vld [vmem:[#allocation10 + $0x40] sm:$0xff]
    %v508 = vld [vmem:[#allocation10 + $0x48] sm:$0xff]
    %v509 = vld [vmem:[#allocation10 + $0x50] sm:$0xff]
    %v510 = vld [vmem:[#allocation10 + $0x58] sm:$0xff]
    %v511 = vld [vmem:[#allocation10 + $0x60] sm:$0xff]
    %v512 = vld [vmem:[#allocation10 + $0x68] sm:$0xff]
    %v513 = vld [vmem:[#allocation10 + $0x70] sm:$0xff]
    %v514 = vld [vmem:[#allocation10 + $0x78] sm:$0xff]
    %v515 = vld [vmem:[#allocation10 + $0x80] sm:$0xff]
    %v516 = vld [vmem:[#allocation10 + $0x88] sm:$0xff]
    %v517 = vld [vmem:[#allocation10 + $0x90] sm:$0xff]
    %v518 = vld [vmem:[#allocation10 + $0x98] sm:$0xff]
    %v519 = vld [vmem:[#allocation10 + $0xa0] sm:$0xff]
    %v520 = vld [vmem:[#allocation10 + $0xa8] sm:$0xff]
    %v521 = vld [vmem:[#allocation10 + $0xb0] sm:$0xff]
    %v522 = vld [vmem:[#allocation10 + $0xb8] sm:$0xff]
    %v523 = vld [vmem:[#allocation10 + $0xc0] sm:$0xff]
    %v524 = vld [vmem:[#allocation10 + $0xc8] sm:$0xff]
    %v525 = vld [vmem:[#allocation10 + $0xd0] sm:$0xff]
    %v526 = vld [vmem:[#allocation10 + $0xd8] sm:$0xff]
    %v527 = vld [vmem:[#allocation10 + $0xe0] sm:$0xff]
    %v528 = vld [vmem:[#allocation10 + $0xe8] sm:$0xff]
    %v529 = vld [vmem:[#allocation10 + $0xf0] sm:$0xff]
    %v530 = vld [vmem:[#allocation10 + $0xf8] sm:$0xff]
    %v531 = vld [vmem:[#allocation10 + $0x100] sm:$0xff]
    %v532 = vld [vmem:[#allocation10 + $0x108] sm:$0xff]
    %v533 = vld [vmem:[#allocation10 + $0x110] sm:$0xff]
    %v534 = vld [vmem:[#allocation10 + $0x118] sm:$0xff]
    %v535 = vld [vmem:[#allocation10 + $0x120] sm:$0xff]
    %v536 = vld [vmem:[#allocation10 + $0x128] sm:$0xff]
    %v537 = vld [vmem:[#allocation10 + $0x130] sm:$0xff]
    %v538 = vld [vmem:[#allocation10 + $0x138] sm:$0xff]
    %v539 = vld [vmem:[#allocation10 + $0x140] sm:$0xff]
    %v540 = vld [vmem:[#allocation10 + $0x148] sm:$0xff]
    %v541 = vld [vmem:[#allocation10 + $0x150] sm:$0xff]
    %v542 = vld [vmem:[#allocation10 + $0x158] sm:$0xff]
    %v543 = vld [vmem:[#allocation10 + $0x160] sm:$0xff]
    %v544 = vld [vmem:[#allocation10 + $0x168] sm:$0xff]
    %v545 = vld [vmem:[#allocation10 + $0x170] sm:$0xff]
    %v546 = vld [vmem:[#allocation10 + $0x178] sm:$0xff]
    %v547 = vld [vmem:[#allocation10 + $0x180] sm:$0xff]
    %v548 = vld [vmem:[#allocation10 + $0x188] sm:$0xff]
    %v549 = vld [vmem:[#allocation10 + $0x190] sm:$0xff]
    %v550 = vld [vmem:[#allocation10 + $0x198] sm:$0xff]
    %v551 = vld [vmem:[#allocation10 + $0x1a0] sm:$0xff]
    %v552 = vld [vmem:[#allocation10 + $0x1a8] sm:$0xff]
    %v553 = vld [vmem:[#allocation10 + $0x1b0] sm:$0xff]
    %v554 = vld [vmem:[#allocation10 + $0x1b8] sm:$0xff]
    %v555 = vld [vmem:[#allocation10 + $0x1c0] sm:$0xff]
    %v556 = vld [vmem:[#allocation10 + $0x1c8] sm:$0xff]
    %v557 = vld [vmem:[#allocation10 + $0x1d0] sm:$0xff]
    %v558 = vld [vmem:[#allocation10 + $0x1d8] sm:$0xff]
    %v559 = vld [vmem:[#allocation10 + $0x1e0] sm:$0xff]
    %v560 = vld [vmem:[#allocation10 + $0x1e8] sm:$0xff]
    %v561 = vld [vmem:[#allocation10 + $0x1f0] sm:$0xff]
    %v562 = vld [vmem:[#allocation10 + $0x1f8] sm:$0xff]
    %v563 = vld [vmem:[#allocation10 + $0x200] sm:$0xff]
    %v564 = vld [vmem:[#allocation10 + $0x208] sm:$0xff]
    %v565 = vld [vmem:[#allocation10 + $0x210] sm:$0xff]
    %v566 = vld [vmem:[#allocation10 + $0x218] sm:$0xff]
    %v567 = vld [vmem:[#allocation10 + $0x220] sm:$0xff]
    %v568 = vld [vmem:[#allocation10 + $0x228] sm:$0xff]
    %v569 = vld [vmem:[#allocation10 + $0x230] sm:$0xff]
    %v570 = vld [vmem:[#allocation10 + $0x238] sm:$0xff]
    %v571 = vld [vmem:[#allocation10 + $0x240] sm:$0xff]
    %v572 = vld [vmem:[#allocation10 + $0x248] sm:$0xff]
    %v573 = vld [vmem:[#allocation10 + $0x250] sm:$0xff]
    %v574 = vld [vmem:[#allocation10 + $0x258] sm:$0xff]
    %v575 = vld [vmem:[#allocation10 + $0x260] sm:$0xff]
    %v576 = vld [vmem:[#allocation10 + $0x268] sm:$0xff]
    %v577 = vld [vmem:[#allocation10 + $0x270] sm:$0xff]
    %v578 = vld [vmem:[#allocation10 + $0x278] sm:$0xff]
    %v579 = vld [vmem:[#allocation10 + $0x280] sm:$0xff]
    %v580 = vld [vmem:[#allocation10 + $0x288] sm:$0xff]
    %v581 = vld [vmem:[#allocation10 + $0x290] sm:$0xff]
    %v582 = vld [vmem:[#allocation10 + $0x298] sm:$0xff]
    %v583 = vld [vmem:[#allocation10 + $0x2a0] sm:$0xff]
    %v584 = vld [vmem:[#allocation10 + $0x2a8] sm:$0xff]
    %v585 = vld [vmem:[#allocation10 + $0x2b0] sm:$0xff]
    %v586 = vld [vmem:[#allocation10 + $0x2b8] sm:$0xff]
    %v587 = vld [vmem:[#allocation10 + $0x2c0] sm:$0xff]
    %v588 = vld [vmem:[#allocation10 + $0x2c8] sm:$0xff]
    %v589 = vld [vmem:[#allocation10 + $0x2d0] sm:$0xff]
    %v590 = vld [vmem:[#allocation10 + $0x2d8] sm:$0xff]
    %v591 = vld [vmem:[#allocation10 + $0x2e0] sm:$0xff]
    %v592 = vld [vmem:[#allocation10 + $0x2e8] sm:$0xff]
    %v593 = vld [vmem:[#allocation10 + $0x2f0] sm:$0xff]
    %v594 = vld [vmem:[#allocation10 + $0x2f8] sm:$0xff]
    %v595 = vld [vmem:[#allocation10 + $0x300] sm:$0xff]
    %v596 = vld [vmem:[#allocation10 + $0x308] sm:$0xff]
    %v597 = vld [vmem:[#allocation10 + $0x310] sm:$0xff]
    %v598 = vld [vmem:[#allocation10 + $0x318] sm:$0xff]
    %v599 = vld [vmem:[#allocation10 + $0x320] sm:$0xff]
    %v600 = vld [vmem:[#allocation10 + $0x328] sm:$0xff]
    %v601 = vld [vmem:[#allocation10 + $0x330] sm:$0xff]
    %v602 = vld [vmem:[#allocation10 + $0x338] sm:$0xff]
    %v603 = vld [vmem:[#allocation10 + $0x340] sm:$0xff]
    %v604 = vld [vmem:[#allocation10 + $0x348] sm:$0xff]
    %v605 = vld [vmem:[#allocation10 + $0x350] sm:$0xff]
    %v606 = vld [vmem:[#allocation10 + $0x358] sm:$0xff]
    %v607 = vld [vmem:[#allocation10 + $0x360] sm:$0xff]
    %v608 = vld [vmem:[#allocation10 + $0x368] sm:$0xff]
    %v609 = vld [vmem:[#allocation10 + $0x370] sm:$0xff]
    %v610 = vld [vmem:[#allocation10 + $0x378] sm:$0xff]
    %v611 = vld [vmem:[#allocation10 + $0x380] sm:$0xff]
    %v612 = vld [vmem:[#allocation10 + $0x388] sm:$0xff]
    %v613 = vld [vmem:[#allocation10 + $0x390] sm:$0xff]
    %v614 = vld [vmem:[#allocation10 + $0x398] sm:$0xff]
    %v615 = vld [vmem:[#allocation10 + $0x3a0] sm:$0xff]
    %v616 = vld [vmem:[#allocation10 + $0x3a8] sm:$0xff]
    %v617 = vld [vmem:[#allocation10 + $0x3b0] sm:$0xff]
    %v618 = vld [vmem:[#allocation10 + $0x3b8] sm:$0xff]
    %v619 = vld [vmem:[#allocation10 + $0x3c0] sm:$0xff]
    %v620 = vld [vmem:[#allocation10 + $0x3c8] sm:$0xff]
    %v621 = vld [vmem:[#allocation10 + $0x3d0] sm:$0xff]
    %v622 = vld [vmem:[#allocation10 + $0x3d8] sm:$0xff]
    %v623 = vld [vmem:[#allocation10 + $0x3e0] sm:$0xff]
    %v624 = vld [vmem:[#allocation10 + $0x3e8] sm:$0xff]
    %v625 = vld [vmem:[#allocation10 + $0x3f0] sm:$0xff]
    %v626 = vld [vmem:[#allocation10 + $0x3f8] sm:$0xff]
    %v627 = vld [vmem:[#allocation10 + $0x400] sm:$0xff]
    %v628 = vld [vmem:[#allocation10 + $0x408] sm:$0xff]
    %v629 = vld [vmem:[#allocation10 + $0x410] sm:$0xff]
    %v630 = vld [vmem:[#allocation10 + $0x418] sm:$0xff]
    %v631 = vld [vmem:[#allocation10 + $0x420] sm:$0xff]
    %v632 = vld [vmem:[#allocation10 + $0x428] sm:$0xff]
    %v633 = vld [vmem:[#allocation10 + $0x430] sm:$0xff]
    %v634 = vld [vmem:[#allocation10 + $0x438] sm:$0xff]
    %v635 = vld [vmem:[#allocation10 + $0x440] sm:$0xff]
    %v636 = vld [vmem:[#allocation10 + $0x448] sm:$0xff]
    %v637 = vld [vmem:[#allocation10 + $0x450] sm:$0xff]
    %v638 = vld [vmem:[#allocation10 + $0x458] sm:$0xff]
    %v639 = vld [vmem:[#allocation10 + $0x460] sm:$0xff]
    %v640 = vld [vmem:[#allocation10 + $0x468] sm:$0xff]
    %v641 = vld [vmem:[#allocation10 + $0x470] sm:$0xff]
    %v642 = vld [vmem:[#allocation10 + $0x478] sm:$0xff]
    %v643 = vld [vmem:[#allocation10 + $0x480] sm:$0xff]
    %v644 = vld [vmem:[#allocation10 + $0x488] sm:$0xff]
    %v645 = vld [vmem:[#allocation10 + $0x490] sm:$0xff]
    %v646 = vld [vmem:[#allocation10 + $0x498] sm:$0xff]
    %v647 = vld [vmem:[#allocation10 + $0x4a0] sm:$0xff]
    %v648 = vld [vmem:[#allocation10 + $0x4a8] sm:$0xff]
    %v649 = vld [vmem:[#allocation10 + $0x4b0] sm:$0xff]
    %v650 = vld [vmem:[#allocation10 + $0x4b8] sm:$0xff]
    %v651 = vld [vmem:[#allocation10 + $0x4c0] sm:$0xff]
    %v652 = vld [vmem:[#allocation10 + $0x4c8] sm:$0xff]
    %v653 = vld [vmem:[#allocation10 + $0x4d0] sm:$0xff]
    %v654 = vld [vmem:[#allocation10 + $0x4d8] sm:$0xff]
    %v655 = vld [vmem:[#allocation10 + $0x4e0] sm:$0xff]
    %v656 = vld [vmem:[#allocation10 + $0x4e8] sm:$0xff]
    %v657 = vld [vmem:[#allocation10 + $0x4f0] sm:$0xff]
    %v658 = vld [vmem:[#allocation10 + $0x4f8] sm:$0xff]
    %v659 = vld [vmem:[#allocation10 + $0x500] sm:$0xff]
    %v660 = vld [vmem:[#allocation10 + $0x508] sm:$0xff]
    %v661 = vld [vmem:[#allocation10 + $0x510] sm:$0xff]
    %v662 = vld [vmem:[#allocation10 + $0x518] sm:$0xff]
    %v663 = vld [vmem:[#allocation10 + $0x520] sm:$0xff]
    %v664 = vld [vmem:[#allocation10 + $0x528] sm:$0xff]
    %v665 = vld [vmem:[#allocation10 + $0x530] sm:$0xff]
    %v666 = vld [vmem:[#allocation10 + $0x538] sm:$0xff]
    %v667 = vld [vmem:[#allocation10 + $0x540] sm:$0xff]
    %v668 = vld [vmem:[#allocation10 + $0x548] sm:$0xff]
    %v669 = vld [vmem:[#allocation10 + $0x550] sm:$0xff]
    %v670 = vld [vmem:[#allocation10 + $0x558] sm:$0xff]
    %v671 = vld [vmem:[#allocation10 + $0x560] sm:$0xff]
    %v672 = vld [vmem:[#allocation10 + $0x568] sm:$0xff]
    %v673 = vld [vmem:[#allocation10 + $0x570] sm:$0xff]
    %v674 = vld [vmem:[#allocation10 + $0x578] sm:$0xff]
    %v675 = vld [vmem:[#allocation10 + $0x580] sm:$0xff]
    %v676 = vld [vmem:[#allocation10 + $0x588] sm:$0xff]
    %v677 = vld [vmem:[#allocation10 + $0x590] sm:$0xff]
    %v678 = vld [vmem:[#allocation10 + $0x598] sm:$0xff]
    %v679 = vld [vmem:[#allocation10 + $0x5a0] sm:$0xff]
    %v680 = vld [vmem:[#allocation10 + $0x5a8] sm:$0xff]
    %v681 = vld [vmem:[#allocation10 + $0x5b0] sm:$0xff]
    %v682 = vld [vmem:[#allocation10 + $0x5b8] sm:$0xff]
    %v683 = vld [vmem:[#allocation10 + $0x5c0] sm:$0xff]
    %v684 = vld [vmem:[#allocation10 + $0x5c8] sm:$0xff]
    %v685 = vld [vmem:[#allocation10 + $0x5d0] sm:$0xff]
    %v686 = vld [vmem:[#allocation10 + $0x5d8] sm:$0xff]
    %v687 = vld [vmem:[#allocation10 + $0x5e0] sm:$0xff]
    %v688 = vld [vmem:[#allocation10 + $0x5e8] sm:$0xff]
    %v689 = vld [vmem:[#allocation10 + $0x5f0] sm:$0xff]
    %v690 = vld [vmem:[#allocation10 + $0x5f8] sm:$0xff]
    %v691 = vld [vmem:[#allocation10 + $0x600] sm:$0xff]
    %v692 = vld [vmem:[#allocation10 + $0x608] sm:$0xff]
    %v693 = vld [vmem:[#allocation10 + $0x610] sm:$0xff]
    %v694 = vld [vmem:[#allocation10 + $0x618] sm:$0xff]
    %v695 = vld [vmem:[#allocation10 + $0x620] sm:$0xff]
    %v696 = vld [vmem:[#allocation10 + $0x628] sm:$0xff]
    %v697 = vld [vmem:[#allocation10 + $0x630] sm:$0xff]
    %v698 = vld [vmem:[#allocation10 + $0x638] sm:$0xff]
    %v699 = vld [vmem:[#allocation10 + $0x640] sm:$0xff]
    %v700 = vld [vmem:[#allocation10 + $0x648] sm:$0xff]
    %v701 = vld [vmem:[#allocation10 + $0x650] sm:$0xff]
    %v702 = vld [vmem:[#allocation10 + $0x658] sm:$0xff]
    %v703 = vld [vmem:[#allocation10 + $0x660] sm:$0xff]
    %v704 = vld [vmem:[#allocation10 + $0x668] sm:$0xff]
    %v705 = vld [vmem:[#allocation10 + $0x670] sm:$0xff]
    %v706 = vld [vmem:[#allocation10 + $0x678] sm:$0xff]
    %v707 = vld [vmem:[#allocation10 + $0x680] sm:$0xff]
    %v708 = vld [vmem:[#allocation10 + $0x688] sm:$0xff]
    %v709 = vld [vmem:[#allocation10 + $0x690] sm:$0xff]
    %v710 = vld [vmem:[#allocation10 + $0x698] sm:$0xff]
    %v711 = vld [vmem:[#allocation10 + $0x6a0] sm:$0xff]
    %v712 = vld [vmem:[#allocation10 + $0x6a8] sm:$0xff]
    %v713 = vld [vmem:[#allocation10 + $0x6b0] sm:$0xff]
    %v714 = vld [vmem:[#allocation10 + $0x6b8] sm:$0xff]
    %v715 = vld [vmem:[#allocation10 + $0x6c0] sm:$0xff]
    %v716 = vld [vmem:[#allocation10 + $0x6c8] sm:$0xff]
    %v717 = vld [vmem:[#allocation10 + $0x6d0] sm:$0xff]
    %v718 = vld [vmem:[#allocation10 + $0x6d8] sm:$0xff]
    %v719 = vld [vmem:[#allocation10 + $0x6e0] sm:$0xff]
    %v720 = vld [vmem:[#allocation10 + $0x6e8] sm:$0xff]
    %v721 = vld [vmem:[#allocation10 + $0x6f0] sm:$0xff]
    %v722 = vld [vmem:[#allocation10 + $0x6f8] sm:$0xff]
    %v723 = vld [vmem:[#allocation10 + $0x700] sm:$0xff]
    %v724 = vld [vmem:[#allocation10 + $0x708] sm:$0xff]
    %v725 = vld [vmem:[#allocation10 + $0x710] sm:$0xff]
    %v726 = vld [vmem:[#allocation10 + $0x718] sm:$0xff]
    %v727 = vld [vmem:[#allocation10 + $0x720] sm:$0xff]
    %v728 = vld [vmem:[#allocation10 + $0x728] sm:$0xff]
    %v729 = vld [vmem:[#allocation10 + $0x730] sm:$0xff]
    %v730 = vld [vmem:[#allocation10 + $0x738] sm:$0xff]
    %v731 = vld [vmem:[#allocation10 + $0x740] sm:$0xff]
    %v732 = vld [vmem:[#allocation10 + $0x748] sm:$0xff]
    %v733 = vld [vmem:[#allocation10 + $0x750] sm:$0xff]
    %v734 = vld [vmem:[#allocation10 + $0x758] sm:$0xff]
    %v735 = vld [vmem:[#allocation10 + $0x760] sm:$0xff]
    %v736 = vld [vmem:[#allocation10 + $0x768] sm:$0xff]
    %v737 = vld [vmem:[#allocation10 + $0x770] sm:$0xff]
    %v738 = vld [vmem:[#allocation10 + $0x778] sm:$0xff]
    %v739 = vld [vmem:[#allocation10 + $0x780] sm:$0xff]
    %v740 = vld [vmem:[#allocation10 + $0x788] sm:$0xff]
    %v741 = vld [vmem:[#allocation10 + $0x790] sm:$0xff]
    %v742 = vld [vmem:[#allocation10 + $0x798] sm:$0xff]
    %v743 = vld [vmem:[#allocation10 + $0x7a0] sm:$0xff]
    %v744 = vld [vmem:[#allocation10 + $0x7a8] sm:$0xff]
    %v745 = vld [vmem:[#allocation10 + $0x7b0] sm:$0xff]
    %v746 = vld [vmem:[#allocation10 + $0x7b8] sm:$0xff]
    %v747 = vld [vmem:[#allocation10 + $0x7c0] sm:$0xff]
    %v748 = vld [vmem:[#allocation10 + $0x7c8] sm:$0xff]
    %v749 = vld [vmem:[#allocation10 + $0x7d0] sm:$0xff]
    %v750 = vld [vmem:[#allocation10 + $0x7d8] sm:$0xff]
    %v751 = vld [vmem:[#allocation10 + $0x7e0] sm:$0xff]
    %v752 = vld [vmem:[#allocation10 + $0x7e8] sm:$0xff]
    %v753 = vld [vmem:[#allocation10 + $0x7f0] sm:$0xff]
    %v754 = vld [vmem:[#allocation10 + $0x7f8] sm:$0xff]
    %v755 = vld [vmem:[#allocation10 + $0x800] sm:$0xff]
    %v756 = vld [vmem:[#allocation10 + $0x808] sm:$0xff]
    %v757 = vld [vmem:[#allocation10 + $0x810] sm:$0xff]
    %v758 = vld [vmem:[#allocation10 + $0x818] sm:$0xff]
    %v759 = vld [vmem:[#allocation10 + $0x820] sm:$0xff]
    %v760 = vld [vmem:[#allocation10 + $0x828] sm:$0xff]
    %v761 = vld [vmem:[#allocation10 + $0x830] sm:$0xff]
    %v762 = vld [vmem:[#allocation10 + $0x838] sm:$0xff]
    %v763 = vld [vmem:[#allocation10 + $0x840] sm:$0xff]
    %v764 = vld [vmem:[#allocation10 + $0x848] sm:$0xff]
    %v765 = vld [vmem:[#allocation10 + $0x850] sm:$0xff]
    %v766 = vld [vmem:[#allocation10 + $0x858] sm:$0xff]
    %v767 = vld [vmem:[#allocation10 + $0x860] sm:$0xff]
    %v768 = vld [vmem:[#allocation10 + $0x868] sm:$0xff]
    %v769 = vld [vmem:[#allocation10 + $0x870] sm:$0xff]
    %v770 = vld [vmem:[#allocation10 + $0x878] sm:$0xff]
    %v771 = vld [vmem:[#allocation10 + $0x880] sm:$0xff]
    %v772 = vld [vmem:[#allocation10 + $0x888] sm:$0xff]
    %v773 = vld [vmem:[#allocation10 + $0x890] sm:$0xff]
    %v774 = vld [vmem:[#allocation10 + $0x898] sm:$0xff]
    %v775 = vld [vmem:[#allocation10 + $0x8a0] sm:$0xff]
    %v776 = vld [vmem:[#allocation10 + $0x8a8] sm:$0xff]
    %v777 = vld [vmem:[#allocation10 + $0x8b0] sm:$0xff]
    %v778 = vld [vmem:[#allocation10 + $0x8b8] sm:$0xff]
    %v779 = vld [vmem:[#allocation10 + $0x8c0] sm:$0xff]
    %v780 = vld [vmem:[#allocation10 + $0x8c8] sm:$0xff]
    %v781 = vld [vmem:[#allocation10 + $0x8d0] sm:$0xff]
    %v782 = vld [vmem:[#allocation10 + $0x8d8] sm:$0xff]
    %v783 = vld [vmem:[#allocation10 + $0x8e0] sm:$0xff]
    %v784 = vld [vmem:[#allocation10 + $0x8e8] sm:$0xff]
    %v785 = vld [vmem:[#allocation10 + $0x8f0] sm:$0xff]
    %v786 = vld [vmem:[#allocation10 + $0x8f8] sm:$0xff]
    %v787 = vld [vmem:[#allocation10 + $0x900] sm:$0xff]
    %v788 = vld [vmem:[#allocation10 + $0x908] sm:$0xff]
    %v789 = vld [vmem:[#allocation10 + $0x910] sm:$0xff]
    %v790 = vld [vmem:[#allocation10 + $0x918] sm:$0xff]
    %v791 = vld [vmem:[#allocation10 + $0x920] sm:$0xff]
    %v792 = vld [vmem:[#allocation10 + $0x928] sm:$0xff]
    %v793 = vld [vmem:[#allocation10 + $0x930] sm:$0xff]
    %v794 = vld [vmem:[#allocation10 + $0x938] sm:$0xff]
    %v795 = vld [vmem:[#allocation10 + $0x940] sm:$0xff]
    %v796 = vld [vmem:[#allocation10 + $0x948] sm:$0xff]
    %v797 = vld [vmem:[#allocation10 + $0x950] sm:$0xff]
    %v798 = vld [vmem:[#allocation10 + $0x958] sm:$0xff]
    %v799 = vld [vmem:[#allocation10 + $0x960] sm:$0xff]
    %v800 = vld [vmem:[#allocation10 + $0x968] sm:$0xff]
    %v801 = vld [vmem:[#allocation10 + $0x970] sm:$0xff]
    %v802 = vld [vmem:[#allocation10 + $0x978] sm:$0xff]
    %v803 = vld [vmem:[#allocation10 + $0x980] sm:$0xff]
    %v804 = vld [vmem:[#allocation10 + $0x988] sm:$0xff]
    %v805 = vld [vmem:[#allocation10 + $0x990] sm:$0xff]
    %v806 = vld [vmem:[#allocation10 + $0x998] sm:$0xff]
    %v807 = vld [vmem:[#allocation10 + $0x9a0] sm:$0xff]
    %v808 = vld [vmem:[#allocation10 + $0x9a8] sm:$0xff]
    %v809 = vld [vmem:[#allocation10 + $0x9b0] sm:$0xff]
    %v810 = vld [vmem:[#allocation10 + $0x9b8] sm:$0xff]
    %v811 = vld [vmem:[#allocation10 + $0x9c0] sm:$0xff]
    %v812 = vld [vmem:[#allocation10 + $0x9c8] sm:$0xff]
    %v813 = vld [vmem:[#allocation10 + $0x9d0] sm:$0xff]
    %v814 = vld [vmem:[#allocation10 + $0x9d8] sm:$0xff]
    %v815 = vld [vmem:[#allocation10 + $0x9e0] sm:$0xff]
    %v816 = vld [vmem:[#allocation10 + $0x9e8] sm:$0xff]
    %v817 = vld [vmem:[#allocation10 + $0x9f0] sm:$0xff]
    %v818 = vld [vmem:[#allocation10 + $0x9f8] sm:$0xff]
    %v819 = vld [vmem:[#allocation10 + $0xa00] sm:$0xff]
    %v820 = vld [vmem:[#allocation10 + $0xa08] sm:$0xff]
    %v821 = vld [vmem:[#allocation10 + $0xa10] sm:$0xff]
    %v822 = vld [vmem:[#allocation10 + $0xa18] sm:$0xff]
    %v823 = vld [vmem:[#allocation10 + $0xa20] sm:$0xff]
    %v824 = vld [vmem:[#allocation10 + $0xa28] sm:$0xff]
    %v825 = vld [vmem:[#allocation10 + $0xa30] sm:$0xff]
    %v826 = vld [vmem:[#allocation10 + $0xa38] sm:$0xff]
    %v827 = vld [vmem:[#allocation10 + $0xa40] sm:$0xff]
    %v828 = vld [vmem:[#allocation10 + $0xa48] sm:$0xff]
    %v829 = vld [vmem:[#allocation10 + $0xa50] sm:$0xff]
    %v830 = vld [vmem:[#allocation10 + $0xa58] sm:$0xff]
    %v831 = vld [vmem:[#allocation10 + $0xa60] sm:$0xff]
    %v832 = vld [vmem:[#allocation10 + $0xa68] sm:$0xff]
    %v833 = vld [vmem:[#allocation10 + $0xa70] sm:$0xff]
    %v834 = vld [vmem:[#allocation10 + $0xa78] sm:$0xff]
    %v835 = vld [vmem:[#allocation10 + $0xa80] sm:$0xff]
    %v836 = vld [vmem:[#allocation10 + $0xa88] sm:$0xff]
    %v837 = vld [vmem:[#allocation10 + $0xa90] sm:$0xff]
    %v838 = vld [vmem:[#allocation10 + $0xa98] sm:$0xff]
    %v839 = vld [vmem:[#allocation10 + $0xaa0] sm:$0xff]
    %v840 = vld [vmem:[#allocation10 + $0xaa8] sm:$0xff]
    %v841 = vld [vmem:[#allocation10 + $0xab0] sm:$0xff]
    %v842 = vld [vmem:[#allocation10 + $0xab8] sm:$0xff]
    %v843 = vld [vmem:[#allocation10 + $0xac0] sm:$0xff]
    %v844 = vld [vmem:[#allocation10 + $0xac8] sm:$0xff]
    %v845 = vld [vmem:[#allocation10 + $0xad0] sm:$0xff]
    %v846 = vld [vmem:[#allocation10 + $0xad8] sm:$0xff]
    %v847 = vld [vmem:[#allocation10 + $0xae0] sm:$0xff]
    %v848 = vld [vmem:[#allocation10 + $0xae8] sm:$0xff]
    %v849 = vld [vmem:[#allocation10 + $0xaf0] sm:$0xff]
    %v850 = vld [vmem:[#allocation10 + $0xaf8] sm:$0xff]
    %v851 = vld [vmem:[#allocation10 + $0xb00] sm:$0xff]
    %v852 = vld [vmem:[#allocation10 + $0xb08] sm:$0xff]
    %v853 = vld [vmem:[#allocation10 + $0xb10] sm:$0xff]
    %v854 = vld [vmem:[#allocation10 + $0xb18] sm:$0xff]
    %v855 = vld [vmem:[#allocation10 + $0xb20] sm:$0xff]
    %v856 = vld [vmem:[#allocation10 + $0xb28] sm:$0xff]
    %v857 = vld [vmem:[#allocation10 + $0xb30] sm:$0xff]
    %v858 = vld [vmem:[#allocation10 + $0xb38] sm:$0xff]
    %v859 = vld [vmem:[#allocation10 + $0xb40] sm:$0xff]
    %v860 = vld [vmem:[#allocation10 + $0xb48] sm:$0xff]
    %v861 = vld [vmem:[#allocation10 + $0xb50] sm:$0xff]
    %v862 = vld [vmem:[#allocation10 + $0xb58] sm:$0xff]
    %v863 = vld [vmem:[#allocation10 + $0xb60] sm:$0xff]
    %v864 = vld [vmem:[#allocation10 + $0xb68] sm:$0xff]
    %v865 = vld [vmem:[#allocation10 + $0xb70] sm:$0xff]
    %v866 = vld [vmem:[#allocation10 + $0xb78] sm:$0xff]
    %v867 = vld [vmem:[#allocation10 + $0xb80] sm:$0xff]
    %v868 = vld [vmem:[#allocation10 + $0xb88] sm:$0xff]
    %v869 = vld [vmem:[#allocation10 + $0xb90] sm:$0xff]
    %v870 = vld [vmem:[#allocation10 + $0xb98] sm:$0xff]
    %v871 = vld [vmem:[#allocation10 + $0xba0] sm:$0xff]
    %v872 = vld [vmem:[#allocation10 + $0xba8] sm:$0xff]
    %v873 = vld [vmem:[#allocation10 + $0xbb0] sm:$0xff]
    %v874 = vld [vmem:[#allocation10 + $0xbb8] sm:$0xff]
    %v875 = vld [vmem:[#allocation10 + $0xbc0] sm:$0xff]
    %v876 = vld [vmem:[#allocation10 + $0xbc8] sm:$0xff]
    %v877 = vld [vmem:[#allocation10 + $0xbd0] sm:$0xff]
    %v878 = vld [vmem:[#allocation10 + $0xbd8] sm:$0xff]
    %v879 = vld [vmem:[#allocation10 + $0xbe0] sm:$0xff]
    %v880 = vld [vmem:[#allocation10 + $0xbe8] sm:$0xff]
    %v881 = vld [vmem:[#allocation10 + $0xbf0] sm:$0xff]
    %v882 = vld [vmem:[#allocation10 + $0xbf8] sm:$0xff]
    %v883 = vld [vmem:[#allocation10 + $0xc00] sm:$0xff]
    %v884 = vld [vmem:[#allocation10 + $0xc08] sm:$0xff]
    %v885 = vld [vmem:[#allocation10 + $0xc10] sm:$0xff]
    %v886 = vld [vmem:[#allocation10 + $0xc18] sm:$0xff]
    %v887 = vld [vmem:[#allocation10 + $0xc20] sm:$0xff]
    %v888 = vld [vmem:[#allocation10 + $0xc28] sm:$0xff]
    %v889 = vld [vmem:[#allocation10 + $0xc30] sm:$0xff]
    %v890 = vld [vmem:[#allocation10 + $0xc38] sm:$0xff]
    %v891 = vld [vmem:[#allocation10 + $0xc40] sm:$0xff]
    %v892 = vld [vmem:[#allocation10 + $0xc48] sm:$0xff]
    %v893 = vld [vmem:[#allocation10 + $0xc50] sm:$0xff]
    %v894 = vld [vmem:[#allocation10 + $0xc58] sm:$0xff]
    %v895 = vld [vmem:[#allocation10 + $0xc60] sm:$0xff]
    %v896 = vld [vmem:[#allocation10 + $0xc68] sm:$0xff]
    %v897 = vld [vmem:[#allocation10 + $0xc70] sm:$0xff]
    %v898 = vld [vmem:[#allocation10 + $0xc78] sm:$0xff]
    %v899 = vld [vmem:[#allocation10 + $0xc80] sm:$0xff]
    %v900 = vld [vmem:[#allocation10 + $0xc88] sm:$0xff]
    %v901 = vld [vmem:[#allocation10 + $0xc90] sm:$0xff]
    %v902 = vld [vmem:[#allocation10 + $0xc98] sm:$0xff]
    %v903 = vld [vmem:[#allocation10 + $0xca0] sm:$0xff]
    %v904 = vld [vmem:[#allocation10 + $0xca8] sm:$0xff]
    %v905 = vld [vmem:[#allocation10 + $0xcb0] sm:$0xff]
    %v906 = vld [vmem:[#allocation10 + $0xcb8] sm:$0xff]
    %v907 = vld [vmem:[#allocation10 + $0xcc0] sm:$0xff]
    %v908 = vld [vmem:[#allocation10 + $0xcc8] sm:$0xff]
    %v909 = vld [vmem:[#allocation10 + $0xcd0] sm:$0xff]
    %v910 = vld [vmem:[#allocation10 + $0xcd8] sm:$0xff]
    %v911 = vld [vmem:[#allocation10 + $0xce0] sm:$0xff]
    %v912 = vld [vmem:[#allocation10 + $0xce8] sm:$0xff]
    %v913 = vld [vmem:[#allocation10 + $0xcf0] sm:$0xff]
    %v914 = vld [vmem:[#allocation10 + $0xcf8] sm:$0xff]
    %v915 = vld [vmem:[#allocation10 + $0xd00] sm:$0xff]
    %v916 = vld [vmem:[#allocation10 + $0xd08] sm:$0xff]
    %v917 = vld [vmem:[#allocation10 + $0xd10] sm:$0xff]
    %v918 = vld [vmem:[#allocation10 + $0xd18] sm:$0xff]
    %v919 = vld [vmem:[#allocation10 + $0xd20] sm:$0xff]
    %v920 = vld [vmem:[#allocation10 + $0xd28] sm:$0xff]
    %v921 = vld [vmem:[#allocation10 + $0xd30] sm:$0xff]
    %v922 = vld [vmem:[#allocation10 + $0xd38] sm:$0xff]
    %v923 = vld [vmem:[#allocation10 + $0xd40] sm:$0xff]
    %v924 = vld [vmem:[#allocation10 + $0xd48] sm:$0xff]
    %v925 = vld [vmem:[#allocation10 + $0xd50] sm:$0xff]
    %v926 = vld [vmem:[#allocation10 + $0xd58] sm:$0xff]
    %v927 = vld [vmem:[#allocation10 + $0xd60] sm:$0xff]
    %v928 = vld [vmem:[#allocation10 + $0xd68] sm:$0xff]
    %v929 = vld [vmem:[#allocation10 + $0xd70] sm:$0xff]
    %v930 = vld [vmem:[#allocation10 + $0xd78] sm:$0xff]
    %v931 = vld [vmem:[#allocation10 + $0xd80] sm:$0xff]
    %v932 = vld [vmem:[#allocation10 + $0xd88] sm:$0xff]
    %v933 = vld [vmem:[#allocation10 + $0xd90] sm:$0xff]
    %v934 = vld [vmem:[#allocation10 + $0xd98] sm:$0xff]
    %v935 = vld [vmem:[#allocation10 + $0xda0] sm:$0xff]
    %v936 = vld [vmem:[#allocation10 + $0xda8] sm:$0xff]
    %v937 = vld [vmem:[#allocation10 + $0xdb0] sm:$0xff]
    %v938 = vld [vmem:[#allocation10 + $0xdb8] sm:$0xff]
    %v939 = vld [vmem:[#allocation10 + $0xdc0] sm:$0xff]
    %v940 = vld [vmem:[#allocation10 + $0xdc8] sm:$0xff]
    %v941 = vld [vmem:[#allocation10 + $0xdd0] sm:$0xff]
    %v942 = vld [vmem:[#allocation10 + $0xdd8] sm:$0xff]
    %v943 = vld [vmem:[#allocation10 + $0xde0] sm:$0xff]
    %v944 = vld [vmem:[#allocation10 + $0xde8] sm:$0xff]
    %v945 = vld [vmem:[#allocation10 + $0xdf0] sm:$0xff]
    %v946 = vld [vmem:[#allocation10 + $0xdf8] sm:$0xff]
    %v947 = vld [vmem:[#allocation10 + $0xe00] sm:$0xff]
    %v948 = vld [vmem:[#allocation10 + $0xe08] sm:$0xff]
    %v949 = vld [vmem:[#allocation10 + $0xe10] sm:$0xff]
    %v950 = vld [vmem:[#allocation10 + $0xe18] sm:$0xff]
    %v951 = vld [vmem:[#allocation10 + $0xe20] sm:$0xff]
    %v952 = vld [vmem:[#allocation10 + $0xe28] sm:$0xff]
    %v953 = vld [vmem:[#allocation10 + $0xe30] sm:$0xff]
    %v954 = vld [vmem:[#allocation10 + $0xe38] sm:$0xff]
    %v955 = vld [vmem:[#allocation10 + $0xe40] sm:$0xff]
    %v956 = vld [vmem:[#allocation10 + $0xe48] sm:$0xff]
    %v957 = vld [vmem:[#allocation10 + $0xe50] sm:$0xff]
    %v958 = vld [vmem:[#allocation10 + $0xe58] sm:$0xff]
    %v959 = vld [vmem:[#allocation10 + $0xe60] sm:$0xff]
    %v960 = vld [vmem:[#allocation10 + $0xe68] sm:$0xff]
    %v961 = vld [vmem:[#allocation10 + $0xe70] sm:$0xff]
    %v962 = vld [vmem:[#allocation10 + $0xe78] sm:$0xff]
    %v963 = vld [vmem:[#allocation10 + $0xe80] sm:$0xff]
    %v964 = vld [vmem:[#allocation10 + $0xe88] sm:$0xff]
    %v965 = vld [vmem:[#allocation10 + $0xe90] sm:$0xff]
    %v966 = vld [vmem:[#allocation10 + $0xe98] sm:$0xff]
    %v967 = vld [vmem:[#allocation10 + $0xea0] sm:$0xff]
    %v968 = vld [vmem:[#allocation10 + $0xea8] sm:$0xff]
    %v969 = vld [vmem:[#allocation10 + $0xeb0] sm:$0xff]
    %v970 = vld [vmem:[#allocation10 + $0xeb8] sm:$0xff]
    %v971 = vld [vmem:[#allocation10 + $0xec0] sm:$0xff]
    %v972 = vld [vmem:[#allocation10 + $0xec8] sm:$0xff]
    %v973 = vld [vmem:[#allocation10 + $0xed0] sm:$0xff]
    %v974 = vld [vmem:[#allocation10 + $0xed8] sm:$0xff]
    %v975 = vld [vmem:[#allocation10 + $0xee0] sm:$0xff]
    %v976 = vld [vmem:[#allocation10 + $0xee8] sm:$0xff]
    %v977 = vld [vmem:[#allocation10 + $0xef0] sm:$0xff]
    %v978 = vld [vmem:[#allocation10 + $0xef8] sm:$0xff]
    %v979 = vld [vmem:[#allocation10 + $0xf00] sm:$0xff]
    %v980 = vld [vmem:[#allocation10 + $0xf08] sm:$0xff]
    %v981 = vld [vmem:[#allocation10 + $0xf10] sm:$0xff]
    %v982 = vld [vmem:[#allocation10 + $0xf18] sm:$0xff]
    %v983 = vld [vmem:[#allocation10 + $0xf20] sm:$0xff]
    %v984 = vld [vmem:[#allocation10 + $0xf28] sm:$0xff]
    %v985 = vld [vmem:[#allocation10 + $0xf30] sm:$0xff]
    %v986 = vld [vmem:[#allocation10 + $0xf38] sm:$0xff]
    %v987 = vld [vmem:[#allocation10 + $0xf40] sm:$0xff]
    %v988 = vld [vmem:[#allocation10 + $0xf48] sm:$0xff]
    %v989 = vld [vmem:[#allocation10 + $0xf50] sm:$0xff]
    %v990 = vld [vmem:[#allocation10 + $0xf58] sm:$0xff]
    %v991 = vld [vmem:[#allocation10 + $0xf60] sm:$0xff]
    %v992 = vld [vmem:[#allocation10 + $0xf68] sm:$0xff]
    %v993 = vld [vmem:[#allocation10 + $0xf70] sm:$0xff]
    %v994 = vld [vmem:[#allocation10 + $0xf78] sm:$0xff]
    %v995 = vld [vmem:[#allocation10 + $0xf80] sm:$0xff]
    %v996 = vld [vmem:[#allocation10 + $0xf88] sm:$0xff]
    %v997 = vld [vmem:[#allocation10 + $0xf90] sm:$0xff]
    %v998 = vld [vmem:[#allocation10 + $0xf98] sm:$0xff]
    %v999 = vld [vmem:[#allocation10 + $0xfa0] sm:$0xff]
    %v1000 = vld [vmem:[#allocation10 + $0xfa8] sm:$0xff]
    %v1001 = vld [vmem:[#allocation10 + $0xfb0] sm:$0xff]
    %v1002 = vld [vmem:[#allocation10 + $0xfb8] sm:$0xff]
    %v1003 = vld [vmem:[#allocation10 + $0xfc0] sm:$0xff]
    %v1004 = vld [vmem:[#allocation10 + $0xfc8] sm:$0xff]
    %v1005 = vld [vmem:[#allocation10 + $0xfd0] sm:$0xff]
    %v1006 = vld [vmem:[#allocation10 + $0xfd8] sm:$0xff]
    %v1007 = vld [vmem:[#allocation10 + $0xfe0] sm:$0xff]
    %v1008 = vld [vmem:[#allocation10 + $0xfe8] sm:$0xff]
    %v1009 = vld [vmem:[#allocation10 + $0xff0] sm:$0xff]
    %v1010 = vld [vmem:[#allocation10 + $0xff8] sm:$0xff]
    %v1011 = vld [vmem:[#allocation11] sm:$0xff]
    %v1013 = vperm.slane %v1011, 0
    %v1014 = vperm.slane %v1011, 1
    %v1015 = vperm.slane %v1011, 2
    %v1016 = vperm.slane %v1011, 3
    %v1017 = vperm.slane %v1011, 4
    %v1018 = vperm.slane %v1011, 5
    %v1019 = vperm.slane %v1011, 6
    %v1020 = vperm.slane %v1011, 7
    %v1541 = vunpack.c.l.b16 %v499
    %v1542 = vunpack.c.h.b16 %v499
    %v1543 = vunpack.c.l.b16 %v500
    %v1544 = vunpack.c.h.b16 %v500
    %v1545 = vunpack.c.l.b16 %v501
    %v1546 = vunpack.c.h.b16 %v501
    %v1547 = vunpack.c.l.b16 %v502
    %v1548 = vunpack.c.h.b16 %v502
    %v1549 = vunpack.c.l.b16 %v503
    %v1550 = vunpack.c.h.b16 %v503
    %v1551 = vunpack.c.l.b16 %v504
    %v1552 = vunpack.c.h.b16 %v504
    %v1553 = vunpack.c.l.b16 %v505
    %v1554 = vunpack.c.h.b16 %v505
    %v1555 = vunpack.c.l.b16 %v506
    %v1556 = vunpack.c.h.b16 %v506
    %v1557 = vunpack.c.l.b16 %v507
    %v1558 = vunpack.c.h.b16 %v507
    %v1559 = vunpack.c.l.b16 %v508
    %v1560 = vunpack.c.h.b16 %v508
    %v1561 = vunpack.c.l.b16 %v509
    %v1562 = vunpack.c.h.b16 %v509
    %v1563 = vunpack.c.l.b16 %v510
    %v1564 = vunpack.c.h.b16 %v510
    %v1565 = vunpack.c.l.b16 %v511
    %v1566 = vunpack.c.h.b16 %v511
    %v1567 = vunpack.c.l.b16 %v512
    %v1568 = vunpack.c.h.b16 %v512
    %v1569 = vunpack.c.l.b16 %v513
    %v1570 = vunpack.c.h.b16 %v513
    %v1571 = vunpack.c.l.b16 %v514
    %v1572 = vunpack.c.h.b16 %v514
    %v1573 = vunpack.c.l.b16 %v515
    %v1574 = vunpack.c.h.b16 %v515
    %v1575 = vunpack.c.l.b16 %v516
    %v1576 = vunpack.c.h.b16 %v516
    %v1577 = vunpack.c.l.b16 %v517
    %v1578 = vunpack.c.h.b16 %v517
    %v1579 = vunpack.c.l.b16 %v518
    %v1580 = vunpack.c.h.b16 %v518
    %v1581 = vunpack.c.l.b16 %v519
    %v1582 = vunpack.c.h.b16 %v519
    %v1583 = vunpack.c.l.b16 %v520
    %v1584 = vunpack.c.h.b16 %v520
    %v1585 = vunpack.c.l.b16 %v521
    %v1586 = vunpack.c.h.b16 %v521
    %v1587 = vunpack.c.l.b16 %v522
    %v1588 = vunpack.c.h.b16 %v522
    %v1589 = vunpack.c.l.b16 %v523
    %v1590 = vunpack.c.h.b16 %v523
    %v1591 = vunpack.c.l.b16 %v524
    %v1592 = vunpack.c.h.b16 %v524
    %v1593 = vunpack.c.l.b16 %v525
    %v1594 = vunpack.c.h.b16 %v525
    %v1595 = vunpack.c.l.b16 %v526
    %v1596 = vunpack.c.h.b16 %v526
    %v1597 = vunpack.c.l.b16 %v527
    %v1598 = vunpack.c.h.b16 %v527
    %v1599 = vunpack.c.l.b16 %v528
    %v1600 = vunpack.c.h.b16 %v528
    %v1601 = vunpack.c.l.b16 %v529
    %v1602 = vunpack.c.h.b16 %v529
    %v1603 = vunpack.c.l.b16 %v530
    %v1604 = vunpack.c.h.b16 %v530
    %v1605 = vunpack.c.l.b16 %v531
    %v1606 = vunpack.c.h.b16 %v531
    %v1607 = vunpack.c.l.b16 %v532
    %v1608 = vunpack.c.h.b16 %v532
    %v1609 = vunpack.c.l.b16 %v533
    %v1610 = vunpack.c.h.b16 %v533
    %v1611 = vunpack.c.l.b16 %v534
    %v1612 = vunpack.c.h.b16 %v534
    %v1613 = vunpack.c.l.b16 %v535
    %v1614 = vunpack.c.h.b16 %v535
    %v1615 = vunpack.c.l.b16 %v536
    %v1616 = vunpack.c.h.b16 %v536
    %v1617 = vunpack.c.l.b16 %v537
    %v1618 = vunpack.c.h.b16 %v537
    %v1619 = vunpack.c.l.b16 %v538
    %v1620 = vunpack.c.h.b16 %v538
    %v1621 = vunpack.c.l.b16 %v539
    %v1622 = vunpack.c.h.b16 %v539
    %v1623 = vunpack.c.l.b16 %v540
    %v1624 = vunpack.c.h.b16 %v540
    %v1625 = vunpack.c.l.b16 %v541
    %v1626 = vunpack.c.h.b16 %v541
    %v1627 = vunpack.c.l.b16 %v542
    %v1628 = vunpack.c.h.b16 %v542
    %v1629 = vunpack.c.l.b16 %v543
    %v1630 = vunpack.c.h.b16 %v543
    %v1631 = vunpack.c.l.b16 %v544
    %v1632 = vunpack.c.h.b16 %v544
    %v1633 = vunpack.c.l.b16 %v545
    %v1634 = vunpack.c.h.b16 %v545
    %v1635 = vunpack.c.l.b16 %v546
    %v1636 = vunpack.c.h.b16 %v546
    %v1637 = vunpack.c.l.b16 %v547
    %v1638 = vunpack.c.h.b16 %v547
    %v1639 = vunpack.c.l.b16 %v548
    %v1640 = vunpack.c.h.b16 %v548
    %v1641 = vunpack.c.l.b16 %v549
    %v1642 = vunpack.c.h.b16 %v549
    %v1643 = vunpack.c.l.b16 %v550
    %v1644 = vunpack.c.h.b16 %v550
    %v1645 = vunpack.c.l.b16 %v551
    %v1646 = vunpack.c.h.b16 %v551
    %v1647 = vunpack.c.l.b16 %v552
    %v1648 = vunpack.c.h.b16 %v552
    %v1649 = vunpack.c.l.b16 %v553
    %v1650 = vunpack.c.h.b16 %v553
    %v1651 = vunpack.c.l.b16 %v554
    %v1652 = vunpack.c.h.b16 %v554
    %v1653 = vunpack.c.l.b16 %v555
    %v1654 = vunpack.c.h.b16 %v555
    %v1655 = vunpack.c.l.b16 %v556
    %v1656 = vunpack.c.h.b16 %v556
    %v1657 = vunpack.c.l.b16 %v557
    %v1658 = vunpack.c.h.b16 %v557
    %v1659 = vunpack.c.l.b16 %v558
    %v1660 = vunpack.c.h.b16 %v558
    %v1661 = vunpack.c.l.b16 %v559
    %v1662 = vunpack.c.h.b16 %v559
    %v1663 = vunpack.c.l.b16 %v560
    %v1664 = vunpack.c.h.b16 %v560
    %v1665 = vunpack.c.l.b16 %v561
    %v1666 = vunpack.c.h.b16 %v561
    %v1667 = vunpack.c.l.b16 %v562
    %v1668 = vunpack.c.h.b16 %v562
    %v1669 = vunpack.c.l.b16 %v563
    %v1670 = vunpack.c.h.b16 %v563
    %v1671 = vunpack.c.l.b16 %v564
    %v1672 = vunpack.c.h.b16 %v564
    %v1673 = vunpack.c.l.b16 %v565
    %v1674 = vunpack.c.h.b16 %v565
    %v1675 = vunpack.c.l.b16 %v566
    %v1676 = vunpack.c.h.b16 %v566
    %v1677 = vunpack.c.l.b16 %v567
    %v1678 = vunpack.c.h.b16 %v567
    %v1679 = vunpack.c.l.b16 %v568
    %v1680 = vunpack.c.h.b16 %v568
    %v1681 = vunpack.c.l.b16 %v569
    %v1682 = vunpack.c.h.b16 %v569
    %v1683 = vunpack.c.l.b16 %v570
    %v1684 = vunpack.c.h.b16 %v570
    %v1685 = vunpack.c.l.b16 %v571
    %v1686 = vunpack.c.h.b16 %v571
    %v1687 = vunpack.c.l.b16 %v572
    %v1688 = vunpack.c.h.b16 %v572
    %v1689 = vunpack.c.l.b16 %v573
    %v1690 = vunpack.c.h.b16 %v573
    %v1691 = vunpack.c.l.b16 %v574
    %v1692 = vunpack.c.h.b16 %v574
    %v1693 = vunpack.c.l.b16 %v575
    %v1694 = vunpack.c.h.b16 %v575
    %v1695 = vunpack.c.l.b16 %v576
    %v1696 = vunpack.c.h.b16 %v576
    %v1697 = vunpack.c.l.b16 %v577
    %v1698 = vunpack.c.h.b16 %v577
    %v1699 = vunpack.c.l.b16 %v578
    %v1700 = vunpack.c.h.b16 %v578
    %v1701 = vunpack.c.l.b16 %v579
    %v1702 = vunpack.c.h.b16 %v579
    %v1703 = vunpack.c.l.b16 %v580
    %v1704 = vunpack.c.h.b16 %v580
    %v1705 = vunpack.c.l.b16 %v581
    %v1706 = vunpack.c.h.b16 %v581
    %v1707 = vunpack.c.l.b16 %v582
    %v1708 = vunpack.c.h.b16 %v582
    %v1709 = vunpack.c.l.b16 %v583
    %v1710 = vunpack.c.h.b16 %v583
    %v1711 = vunpack.c.l.b16 %v584
    %v1712 = vunpack.c.h.b16 %v584
    %v1713 = vunpack.c.l.b16 %v585
    %v1714 = vunpack.c.h.b16 %v585
    %v1715 = vunpack.c.l.b16 %v586
    %v1716 = vunpack.c.h.b16 %v586
    %v1717 = vunpack.c.l.b16 %v587
    %v1718 = vunpack.c.h.b16 %v587
    %v1719 = vunpack.c.l.b16 %v588
    %v1720 = vunpack.c.h.b16 %v588
    %v1721 = vunpack.c.l.b16 %v589
    %v1722 = vunpack.c.h.b16 %v589
    %v1723 = vunpack.c.l.b16 %v590
    %v1724 = vunpack.c.h.b16 %v590
    %v1725 = vunpack.c.l.b16 %v591
    %v1726 = vunpack.c.h.b16 %v591
    %v1727 = vunpack.c.l.b16 %v592
    %v1728 = vunpack.c.h.b16 %v592
    %v1729 = vunpack.c.l.b16 %v593
    %v1730 = vunpack.c.h.b16 %v593
    %v1731 = vunpack.c.l.b16 %v594
    %v1732 = vunpack.c.h.b16 %v594
    %v1733 = vunpack.c.l.b16 %v595
    %v1734 = vunpack.c.h.b16 %v595
    %v1735 = vunpack.c.l.b16 %v596
    %v1736 = vunpack.c.h.b16 %v596
    %v1737 = vunpack.c.l.b16 %v597
    %v1738 = vunpack.c.h.b16 %v597
    %v1739 = vunpack.c.l.b16 %v598
    %v1740 = vunpack.c.h.b16 %v598
    %v1741 = vunpack.c.l.b16 %v599
    %v1742 = vunpack.c.h.b16 %v599
    %v1743 = vunpack.c.l.b16 %v600
    %v1744 = vunpack.c.h.b16 %v600
    %v1745 = vunpack.c.l.b16 %v601
    %v1746 = vunpack.c.h.b16 %v601
    %v1747 = vunpack.c.l.b16 %v602
    %v1748 = vunpack.c.h.b16 %v602
    %v1749 = vunpack.c.l.b16 %v603
    %v1750 = vunpack.c.h.b16 %v603
    %v1751 = vunpack.c.l.b16 %v604
    %v1752 = vunpack.c.h.b16 %v604
    %v1753 = vunpack.c.l.b16 %v605
    %v1754 = vunpack.c.h.b16 %v605
    %v1755 = vunpack.c.l.b16 %v606
    %v1756 = vunpack.c.h.b16 %v606
    %v1757 = vunpack.c.l.b16 %v607
    %v1758 = vunpack.c.h.b16 %v607
    %v1759 = vunpack.c.l.b16 %v608
    %v1760 = vunpack.c.h.b16 %v608
    %v1761 = vunpack.c.l.b16 %v609
    %v1762 = vunpack.c.h.b16 %v609
    %v1763 = vunpack.c.l.b16 %v610
    %v1764 = vunpack.c.h.b16 %v610
    %v1765 = vunpack.c.l.b16 %v611
    %v1766 = vunpack.c.h.b16 %v611
    %v1767 = vunpack.c.l.b16 %v612
    %v1768 = vunpack.c.h.b16 %v612
    %v1769 = vunpack.c.l.b16 %v613
    %v1770 = vunpack.c.h.b16 %v613
    %v1771 = vunpack.c.l.b16 %v614
    %v1772 = vunpack.c.h.b16 %v614
    %v1773 = vunpack.c.l.b16 %v615
    %v1774 = vunpack.c.h.b16 %v615
    %v1775 = vunpack.c.l.b16 %v616
    %v1776 = vunpack.c.h.b16 %v616
    %v1777 = vunpack.c.l.b16 %v617
    %v1778 = vunpack.c.h.b16 %v617
    %v1779 = vunpack.c.l.b16 %v618
    %v1780 = vunpack.c.h.b16 %v618
    %v1781 = vunpack.c.l.b16 %v619
    %v1782 = vunpack.c.h.b16 %v619
    %v1783 = vunpack.c.l.b16 %v620
    %v1784 = vunpack.c.h.b16 %v620
    %v1785 = vunpack.c.l.b16 %v621
    %v1786 = vunpack.c.h.b16 %v621
    %v1787 = vunpack.c.l.b16 %v622
    %v1788 = vunpack.c.h.b16 %v622
    %v1789 = vunpack.c.l.b16 %v623
    %v1790 = vunpack.c.h.b16 %v623
    %v1791 = vunpack.c.l.b16 %v624
    %v1792 = vunpack.c.h.b16 %v624
    %v1793 = vunpack.c.l.b16 %v625
    %v1794 = vunpack.c.h.b16 %v625
    %v1795 = vunpack.c.l.b16 %v626
    %v1796 = vunpack.c.h.b16 %v626
    %v1797 = vunpack.c.l.b16 %v627
    %v1798 = vunpack.c.h.b16 %v627
    %v1799 = vunpack.c.l.b16 %v628
    %v1800 = vunpack.c.h.b16 %v628
    %v1801 = vunpack.c.l.b16 %v629
    %v1802 = vunpack.c.h.b16 %v629
    %v1803 = vunpack.c.l.b16 %v630
    %v1804 = vunpack.c.h.b16 %v630
    %v1805 = vunpack.c.l.b16 %v631
    %v1806 = vunpack.c.h.b16 %v631
    %v1807 = vunpack.c.l.b16 %v632
    %v1808 = vunpack.c.h.b16 %v632
    %v1809 = vunpack.c.l.b16 %v633
    %v1810 = vunpack.c.h.b16 %v633
    %v1811 = vunpack.c.l.b16 %v634
    %v1812 = vunpack.c.h.b16 %v634
    %v1813 = vunpack.c.l.b16 %v635
    %v1814 = vunpack.c.h.b16 %v635
    %v1815 = vunpack.c.l.b16 %v636
    %v1816 = vunpack.c.h.b16 %v636
    %v1817 = vunpack.c.l.b16 %v637
    %v1818 = vunpack.c.h.b16 %v637
    %v1819 = vunpack.c.l.b16 %v638
    %v1820 = vunpack.c.h.b16 %v638
    %v1821 = vunpack.c.l.b16 %v639
    %v1822 = vunpack.c.h.b16 %v639
    %v1823 = vunpack.c.l.b16 %v640
    %v1824 = vunpack.c.h.b16 %v640
    %v1825 = vunpack.c.l.b16 %v641
    %v1826 = vunpack.c.h.b16 %v641
    %v1827 = vunpack.c.l.b16 %v642
    %v1828 = vunpack.c.h.b16 %v642
    %v1829 = vunpack.c.l.b16 %v643
    %v1830 = vunpack.c.h.b16 %v643
    %v1831 = vunpack.c.l.b16 %v644
    %v1832 = vunpack.c.h.b16 %v644
    %v1833 = vunpack.c.l.b16 %v645
    %v1834 = vunpack.c.h.b16 %v645
    %v1835 = vunpack.c.l.b16 %v646
    %v1836 = vunpack.c.h.b16 %v646
    %v1837 = vunpack.c.l.b16 %v647
    %v1838 = vunpack.c.h.b16 %v647
    %v1839 = vunpack.c.l.b16 %v648
    %v1840 = vunpack.c.h.b16 %v648
    %v1841 = vunpack.c.l.b16 %v649
    %v1842 = vunpack.c.h.b16 %v649
    %v1843 = vunpack.c.l.b16 %v650
    %v1844 = vunpack.c.h.b16 %v650
    %v1845 = vunpack.c.l.b16 %v651
    %v1846 = vunpack.c.h.b16 %v651
    %v1847 = vunpack.c.l.b16 %v652
    %v1848 = vunpack.c.h.b16 %v652
    %v1849 = vunpack.c.l.b16 %v653
    %v1850 = vunpack.c.h.b16 %v653
    %v1851 = vunpack.c.l.b16 %v654
    %v1852 = vunpack.c.h.b16 %v654
    %v1853 = vunpack.c.l.b16 %v655
    %v1854 = vunpack.c.h.b16 %v655
    %v1855 = vunpack.c.l.b16 %v656
    %v1856 = vunpack.c.h.b16 %v656
    %v1857 = vunpack.c.l.b16 %v657
    %v1858 = vunpack.c.h.b16 %v657
    %v1859 = vunpack.c.l.b16 %v658
    %v1860 = vunpack.c.h.b16 %v658
    %v1861 = vunpack.c.l.b16 %v659
    %v1862 = vunpack.c.h.b16 %v659
    %v1863 = vunpack.c.l.b16 %v660
    %v1864 = vunpack.c.h.b16 %v660
    %v1865 = vunpack.c.l.b16 %v661
    %v1866 = vunpack.c.h.b16 %v661
    %v1867 = vunpack.c.l.b16 %v662
    %v1868 = vunpack.c.h.b16 %v662
    %v1869 = vunpack.c.l.b16 %v663
    %v1870 = vunpack.c.h.b16 %v663
    %v1871 = vunpack.c.l.b16 %v664
    %v1872 = vunpack.c.h.b16 %v664
    %v1873 = vunpack.c.l.b16 %v665
    %v1874 = vunpack.c.h.b16 %v665
    %v1875 = vunpack.c.l.b16 %v666
    %v1876 = vunpack.c.h.b16 %v666
    %v1877 = vunpack.c.l.b16 %v667
    %v1878 = vunpack.c.h.b16 %v667
    %v1879 = vunpack.c.l.b16 %v668
    %v1880 = vunpack.c.h.b16 %v668
    %v1881 = vunpack.c.l.b16 %v669
    %v1882 = vunpack.c.h.b16 %v669
    %v1883 = vunpack.c.l.b16 %v670
    %v1884 = vunpack.c.h.b16 %v670
    %v1885 = vunpack.c.l.b16 %v671
    %v1886 = vunpack.c.h.b16 %v671
    %v1887 = vunpack.c.l.b16 %v672
    %v1888 = vunpack.c.h.b16 %v672
    %v1889 = vunpack.c.l.b16 %v673
    %v1890 = vunpack.c.h.b16 %v673
    %v1891 = vunpack.c.l.b16 %v674
    %v1892 = vunpack.c.h.b16 %v674
    %v1893 = vunpack.c.l.b16 %v675
    %v1894 = vunpack.c.h.b16 %v675
    %v1895 = vunpack.c.l.b16 %v676
    %v1896 = vunpack.c.h.b16 %v676
    %v1897 = vunpack.c.l.b16 %v677
    %v1898 = vunpack.c.h.b16 %v677
    %v1899 = vunpack.c.l.b16 %v678
    %v1900 = vunpack.c.h.b16 %v678
    %v1901 = vunpack.c.l.b16 %v679
    %v1902 = vunpack.c.h.b16 %v679
    %v1903 = vunpack.c.l.b16 %v680
    %v1904 = vunpack.c.h.b16 %v680
    %v1905 = vunpack.c.l.b16 %v681
    %v1906 = vunpack.c.h.b16 %v681
    %v1907 = vunpack.c.l.b16 %v682
    %v1908 = vunpack.c.h.b16 %v682
    %v1909 = vunpack.c.l.b16 %v683
    %v1910 = vunpack.c.h.b16 %v683
    %v1911 = vunpack.c.l.b16 %v684
    %v1912 = vunpack.c.h.b16 %v684
    %v1913 = vunpack.c.l.b16 %v685
    %v1914 = vunpack.c.h.b16 %v685
    %v1915 = vunpack.c.l.b16 %v686
    %v1916 = vunpack.c.h.b16 %v686
    %v1917 = vunpack.c.l.b16 %v687
    %v1918 = vunpack.c.h.b16 %v687
    %v1919 = vunpack.c.l.b16 %v688
    %v1920 = vunpack.c.h.b16 %v688
    %v1921 = vunpack.c.l.b16 %v689
    %v1922 = vunpack.c.h.b16 %v689
    %v1923 = vunpack.c.l.b16 %v690
    %v1924 = vunpack.c.h.b16 %v690
    %v1925 = vunpack.c.l.b16 %v691
    %v1926 = vunpack.c.h.b16 %v691
    %v1927 = vunpack.c.l.b16 %v692
    %v1928 = vunpack.c.h.b16 %v692
    %v1929 = vunpack.c.l.b16 %v693
    %v1930 = vunpack.c.h.b16 %v693
    %v1931 = vunpack.c.l.b16 %v694
    %v1932 = vunpack.c.h.b16 %v694
    %v1933 = vunpack.c.l.b16 %v695
    %v1934 = vunpack.c.h.b16 %v695
    %v1935 = vunpack.c.l.b16 %v696
    %v1936 = vunpack.c.h.b16 %v696
    %v1937 = vunpack.c.l.b16 %v697
    %v1938 = vunpack.c.h.b16 %v697
    %v1939 = vunpack.c.l.b16 %v698
    %v1940 = vunpack.c.h.b16 %v698
    %v1941 = vunpack.c.l.b16 %v699
    %v1942 = vunpack.c.h.b16 %v699
    %v1943 = vunpack.c.l.b16 %v700
    %v1944 = vunpack.c.h.b16 %v700
    %v1945 = vunpack.c.l.b16 %v701
    %v1946 = vunpack.c.h.b16 %v701
    %v1947 = vunpack.c.l.b16 %v702
    %v1948 = vunpack.c.h.b16 %v702
    %v1949 = vunpack.c.l.b16 %v703
    %v1950 = vunpack.c.h.b16 %v703
    %v1951 = vunpack.c.l.b16 %v704
    %v1952 = vunpack.c.h.b16 %v704
    %v1953 = vunpack.c.l.b16 %v705
    %v1954 = vunpack.c.h.b16 %v705
    %v1955 = vunpack.c.l.b16 %v706
    %v1956 = vunpack.c.h.b16 %v706
    %v1957 = vunpack.c.l.b16 %v707
    %v1958 = vunpack.c.h.b16 %v707
    %v1959 = vunpack.c.l.b16 %v708
    %v1960 = vunpack.c.h.b16 %v708
    %v1961 = vunpack.c.l.b16 %v709
    %v1962 = vunpack.c.h.b16 %v709
    %v1963 = vunpack.c.l.b16 %v710
    %v1964 = vunpack.c.h.b16 %v710
    %v1965 = vunpack.c.l.b16 %v711
    %v1966 = vunpack.c.h.b16 %v711
    %v1967 = vunpack.c.l.b16 %v712
    %v1968 = vunpack.c.h.b16 %v712
    %v1969 = vunpack.c.l.b16 %v713
    %v1970 = vunpack.c.h.b16 %v713
    %v1971 = vunpack.c.l.b16 %v714
    %v1972 = vunpack.c.h.b16 %v714
    %v1973 = vunpack.c.l.b16 %v715
    %v1974 = vunpack.c.h.b16 %v715
    %v1975 = vunpack.c.l.b16 %v716
    %v1976 = vunpack.c.h.b16 %v716
    %v1977 = vunpack.c.l.b16 %v717
    %v1978 = vunpack.c.h.b16 %v717
    %v1979 = vunpack.c.l.b16 %v718
    %v1980 = vunpack.c.h.b16 %v718
    %v1981 = vunpack.c.l.b16 %v719
    %v1982 = vunpack.c.h.b16 %v719
    %v1983 = vunpack.c.l.b16 %v720
    %v1984 = vunpack.c.h.b16 %v720
    %v1985 = vunpack.c.l.b16 %v721
    %v1986 = vunpack.c.h.b16 %v721
    %v1987 = vunpack.c.l.b16 %v722
    %v1988 = vunpack.c.h.b16 %v722
    %v1989 = vunpack.c.l.b16 %v723
    %v1990 = vunpack.c.h.b16 %v723
    %v1991 = vunpack.c.l.b16 %v724
    %v1992 = vunpack.c.h.b16 %v724
    %v1993 = vunpack.c.l.b16 %v725
    %v1994 = vunpack.c.h.b16 %v725
    %v1995 = vunpack.c.l.b16 %v726
    %v1996 = vunpack.c.h.b16 %v726
    %v1997 = vunpack.c.l.b16 %v727
    %v1998 = vunpack.c.h.b16 %v727
    %v1999 = vunpack.c.l.b16 %v728
    %v2000 = vunpack.c.h.b16 %v728
    %v2001 = vunpack.c.l.b16 %v729
    %v2002 = vunpack.c.h.b16 %v729
    %v2003 = vunpack.c.l.b16 %v730
    %v2004 = vunpack.c.h.b16 %v730
    %v2005 = vunpack.c.l.b16 %v731
    %v2006 = vunpack.c.h.b16 %v731
    %v2007 = vunpack.c.l.b16 %v732
    %v2008 = vunpack.c.h.b16 %v732
    %v2009 = vunpack.c.l.b16 %v733
    %v2010 = vunpack.c.h.b16 %v733
    %v2011 = vunpack.c.l.b16 %v734
    %v2012 = vunpack.c.h.b16 %v734
    %v2013 = vunpack.c.l.b16 %v735
    %v2014 = vunpack.c.h.b16 %v735
    %v2015 = vunpack.c.l.b16 %v736
    %v2016 = vunpack.c.h.b16 %v736
    %v2017 = vunpack.c.l.b16 %v737
    %v2018 = vunpack.c.h.b16 %v737
    %v2019 = vunpack.c.l.b16 %v738
    %v2020 = vunpack.c.h.b16 %v738
    %v2021 = vunpack.c.l.b16 %v739
    %v2022 = vunpack.c.h.b16 %v739
    %v2023 = vunpack.c.l.b16 %v740
    %v2024 = vunpack.c.h.b16 %v740
    %v2025 = vunpack.c.l.b16 %v741
    %v2026 = vunpack.c.h.b16 %v741
    %v2027 = vunpack.c.l.b16 %v742
    %v2028 = vunpack.c.h.b16 %v742
    %v2029 = vunpack.c.l.b16 %v743
    %v2030 = vunpack.c.h.b16 %v743
    %v2031 = vunpack.c.l.b16 %v744
    %v2032 = vunpack.c.h.b16 %v744
    %v2033 = vunpack.c.l.b16 %v745
    %v2034 = vunpack.c.h.b16 %v745
    %v2035 = vunpack.c.l.b16 %v746
    %v2036 = vunpack.c.h.b16 %v746
    %v2037 = vunpack.c.l.b16 %v747
    %v2038 = vunpack.c.h.b16 %v747
    %v2039 = vunpack.c.l.b16 %v748
    %v2040 = vunpack.c.h.b16 %v748
    %v2041 = vunpack.c.l.b16 %v749
    %v2042 = vunpack.c.h.b16 %v749
    %v2043 = vunpack.c.l.b16 %v750
    %v2044 = vunpack.c.h.b16 %v750
    %v2045 = vunpack.c.l.b16 %v751
    %v2046 = vunpack.c.h.b16 %v751
    %v2047 = vunpack.c.l.b16 %v752
    %v2048 = vunpack.c.h.b16 %v752
    %v2049 = vunpack.c.l.b16 %v753
    %v2050 = vunpack.c.h.b16 %v753
    %v2051 = vunpack.c.l.b16 %v754
    %v2052 = vunpack.c.h.b16 %v754
    %v2053 = vunpack.c.l.b16 %v755
    %v2054 = vunpack.c.h.b16 %v755
    %v2055 = vunpack.c.l.b16 %v756
    %v2056 = vunpack.c.h.b16 %v756
    %v2057 = vunpack.c.l.b16 %v757
    %v2058 = vunpack.c.h.b16 %v757
    %v2059 = vunpack.c.l.b16 %v758
    %v2060 = vunpack.c.h.b16 %v758
    %v2061 = vunpack.c.l.b16 %v759
    %v2062 = vunpack.c.h.b16 %v759
    %v2063 = vunpack.c.l.b16 %v760
    %v2064 = vunpack.c.h.b16 %v760
    %v2065 = vunpack.c.l.b16 %v761
    %v2066 = vunpack.c.h.b16 %v761
    %v2067 = vunpack.c.l.b16 %v762
    %v2068 = vunpack.c.h.b16 %v762
    %v2069 = vunpack.c.l.b16 %v763
    %v2070 = vunpack.c.h.b16 %v763
    %v2071 = vunpack.c.l.b16 %v764
    %v2072 = vunpack.c.h.b16 %v764
    %v2073 = vunpack.c.l.b16 %v765
    %v2074 = vunpack.c.h.b16 %v765
    %v2075 = vunpack.c.l.b16 %v766
    %v2076 = vunpack.c.h.b16 %v766
    %v2077 = vunpack.c.l.b16 %v767
    %v2078 = vunpack.c.h.b16 %v767
    %v2079 = vunpack.c.l.b16 %v768
    %v2080 = vunpack.c.h.b16 %v768
    %v2081 = vunpack.c.l.b16 %v769
    %v2082 = vunpack.c.h.b16 %v769
    %v2083 = vunpack.c.l.b16 %v770
    %v2084 = vunpack.c.h.b16 %v770
    %v2085 = vunpack.c.l.b16 %v771
    %v2086 = vunpack.c.h.b16 %v771
    %v2087 = vunpack.c.l.b16 %v772
    %v2088 = vunpack.c.h.b16 %v772
    %v2089 = vunpack.c.l.b16 %v773
    %v2090 = vunpack.c.h.b16 %v773
    %v2091 = vunpack.c.l.b16 %v774
    %v2092 = vunpack.c.h.b16 %v774
    %v2093 = vunpack.c.l.b16 %v775
    %v2094 = vunpack.c.h.b16 %v775
    %v2095 = vunpack.c.l.b16 %v776
    %v2096 = vunpack.c.h.b16 %v776
    %v2097 = vunpack.c.l.b16 %v777
    %v2098 = vunpack.c.h.b16 %v777
    %v2099 = vunpack.c.l.b16 %v778
    %v2100 = vunpack.c.h.b16 %v778
    %v2101 = vunpack.c.l.b16 %v779
    %v2102 = vunpack.c.h.b16 %v779
    %v2103 = vunpack.c.l.b16 %v780
    %v2104 = vunpack.c.h.b16 %v780
    %v2105 = vunpack.c.l.b16 %v781
    %v2106 = vunpack.c.h.b16 %v781
    %v2107 = vunpack.c.l.b16 %v782
    %v2108 = vunpack.c.h.b16 %v782
    %v2109 = vunpack.c.l.b16 %v783
    %v2110 = vunpack.c.h.b16 %v783
    %v2111 = vunpack.c.l.b16 %v784
    %v2112 = vunpack.c.h.b16 %v784
    %v2113 = vunpack.c.l.b16 %v785
    %v2114 = vunpack.c.h.b16 %v785
    %v2115 = vunpack.c.l.b16 %v786
    %v2116 = vunpack.c.h.b16 %v786
    %v2117 = vunpack.c.l.b16 %v787
    %v2118 = vunpack.c.h.b16 %v787
    %v2119 = vunpack.c.l.b16 %v788
    %v2120 = vunpack.c.h.b16 %v788
    %v2121 = vunpack.c.l.b16 %v789
    %v2122 = vunpack.c.h.b16 %v789
    %v2123 = vunpack.c.l.b16 %v790
    %v2124 = vunpack.c.h.b16 %v790
    %v2125 = vunpack.c.l.b16 %v791
    %v2126 = vunpack.c.h.b16 %v791
    %v2127 = vunpack.c.l.b16 %v792
    %v2128 = vunpack.c.h.b16 %v792
    %v2129 = vunpack.c.l.b16 %v793
    %v2130 = vunpack.c.h.b16 %v793
    %v2131 = vunpack.c.l.b16 %v794
    %v2132 = vunpack.c.h.b16 %v794
    %v2133 = vunpack.c.l.b16 %v795
    %v2134 = vunpack.c.h.b16 %v795
    %v2135 = vunpack.c.l.b16 %v796
    %v2136 = vunpack.c.h.b16 %v796
    %v2137 = vunpack.c.l.b16 %v797
    %v2138 = vunpack.c.h.b16 %v797
    %v2139 = vunpack.c.l.b16 %v798
    %v2140 = vunpack.c.h.b16 %v798
    %v2141 = vunpack.c.l.b16 %v799
    %v2142 = vunpack.c.h.b16 %v799
    %v2143 = vunpack.c.l.b16 %v800
    %v2144 = vunpack.c.h.b16 %v800
    %v2145 = vunpack.c.l.b16 %v801
    %v2146 = vunpack.c.h.b16 %v801
    %v2147 = vunpack.c.l.b16 %v802
    %v2148 = vunpack.c.h.b16 %v802
    %v2149 = vunpack.c.l.b16 %v803
    %v2150 = vunpack.c.h.b16 %v803
    %v2151 = vunpack.c.l.b16 %v804
    %v2152 = vunpack.c.h.b16 %v804
    %v2153 = vunpack.c.l.b16 %v805
    %v2154 = vunpack.c.h.b16 %v805
    %v2155 = vunpack.c.l.b16 %v806
    %v2156 = vunpack.c.h.b16 %v806
    %v2157 = vunpack.c.l.b16 %v807
    %v2158 = vunpack.c.h.b16 %v807
    %v2159 = vunpack.c.l.b16 %v808
    %v2160 = vunpack.c.h.b16 %v808
    %v2161 = vunpack.c.l.b16 %v809
    %v2162 = vunpack.c.h.b16 %v809
    %v2163 = vunpack.c.l.b16 %v810
    %v2164 = vunpack.c.h.b16 %v810
    %v2165 = vunpack.c.l.b16 %v811
    %v2166 = vunpack.c.h.b16 %v811
    %v2167 = vunpack.c.l.b16 %v812
    %v2168 = vunpack.c.h.b16 %v812
    %v2169 = vunpack.c.l.b16 %v813
    %v2170 = vunpack.c.h.b16 %v813
    %v2171 = vunpack.c.l.b16 %v814
    %v2172 = vunpack.c.h.b16 %v814
    %v2173 = vunpack.c.l.b16 %v815
    %v2174 = vunpack.c.h.b16 %v815
    %v2175 = vunpack.c.l.b16 %v816
    %v2176 = vunpack.c.h.b16 %v816
    %v2177 = vunpack.c.l.b16 %v817
    %v2178 = vunpack.c.h.b16 %v817
    %v2179 = vunpack.c.l.b16 %v818
    %v2180 = vunpack.c.h.b16 %v818
    %v2181 = vunpack.c.l.b16 %v819
    %v2182 = vunpack.c.h.b16 %v819
    %v2183 = vunpack.c.l.b16 %v820
    %v2184 = vunpack.c.h.b16 %v820
    %v2185 = vunpack.c.l.b16 %v821
    %v2186 = vunpack.c.h.b16 %v821
    %v2187 = vunpack.c.l.b16 %v822
    %v2188 = vunpack.c.h.b16 %v822
    %v2189 = vunpack.c.l.b16 %v823
    %v2190 = vunpack.c.h.b16 %v823
    %v2191 = vunpack.c.l.b16 %v824
    %v2192 = vunpack.c.h.b16 %v824
    %v2193 = vunpack.c.l.b16 %v825
    %v2194 = vunpack.c.h.b16 %v825
    %v2195 = vunpack.c.l.b16 %v826
    %v2196 = vunpack.c.h.b16 %v826
    %v2197 = vunpack.c.l.b16 %v827
    %v2198 = vunpack.c.h.b16 %v827
    %v2199 = vunpack.c.l.b16 %v828
    %v2200 = vunpack.c.h.b16 %v828
    %v2201 = vunpack.c.l.b16 %v829
    %v2202 = vunpack.c.h.b16 %v829
    %v2203 = vunpack.c.l.b16 %v830
    %v2204 = vunpack.c.h.b16 %v830
    %v2205 = vunpack.c.l.b16 %v831
    %v2206 = vunpack.c.h.b16 %v831
    %v2207 = vunpack.c.l.b16 %v832
    %v2208 = vunpack.c.h.b16 %v832
    %v2209 = vunpack.c.l.b16 %v833
    %v2210 = vunpack.c.h.b16 %v833
    %v2211 = vunpack.c.l.b16 %v834
    %v2212 = vunpack.c.h.b16 %v834
    %v2213 = vunpack.c.l.b16 %v835
    %v2214 = vunpack.c.h.b16 %v835
    %v2215 = vunpack.c.l.b16 %v836
    %v2216 = vunpack.c.h.b16 %v836
    %v2217 = vunpack.c.l.b16 %v837
    %v2218 = vunpack.c.h.b16 %v837
    %v2219 = vunpack.c.l.b16 %v838
    %v2220 = vunpack.c.h.b16 %v838
    %v2221 = vunpack.c.l.b16 %v839
    %v2222 = vunpack.c.h.b16 %v839
    %v2223 = vunpack.c.l.b16 %v840
    %v2224 = vunpack.c.h.b16 %v840
    %v2225 = vunpack.c.l.b16 %v841
    %v2226 = vunpack.c.h.b16 %v841
    %v2227 = vunpack.c.l.b16 %v842
    %v2228 = vunpack.c.h.b16 %v842
    %v2229 = vunpack.c.l.b16 %v843
    %v2230 = vunpack.c.h.b16 %v843
    %v2231 = vunpack.c.l.b16 %v844
    %v2232 = vunpack.c.h.b16 %v844
    %v2233 = vunpack.c.l.b16 %v845
    %v2234 = vunpack.c.h.b16 %v845
    %v2235 = vunpack.c.l.b16 %v846
    %v2236 = vunpack.c.h.b16 %v846
    %v2237 = vunpack.c.l.b16 %v847
    %v2238 = vunpack.c.h.b16 %v847
    %v2239 = vunpack.c.l.b16 %v848
    %v2240 = vunpack.c.h.b16 %v848
    %v2241 = vunpack.c.l.b16 %v849
    %v2242 = vunpack.c.h.b16 %v849
    %v2243 = vunpack.c.l.b16 %v850
    %v2244 = vunpack.c.h.b16 %v850
    %v2245 = vunpack.c.l.b16 %v851
    %v2246 = vunpack.c.h.b16 %v851
    %v2247 = vunpack.c.l.b16 %v852
    %v2248 = vunpack.c.h.b16 %v852
    %v2249 = vunpack.c.l.b16 %v853
    %v2250 = vunpack.c.h.b16 %v853
    %v2251 = vunpack.c.l.b16 %v854
    %v2252 = vunpack.c.h.b16 %v854
    %v2253 = vunpack.c.l.b16 %v855
    %v2254 = vunpack.c.h.b16 %v855
    %v2255 = vunpack.c.l.b16 %v856
    %v2256 = vunpack.c.h.b16 %v856
    %v2257 = vunpack.c.l.b16 %v857
    %v2258 = vunpack.c.h.b16 %v857
    %v2259 = vunpack.c.l.b16 %v858
    %v2260 = vunpack.c.h.b16 %v858
    %v2261 = vunpack.c.l.b16 %v859
    %v2262 = vunpack.c.h.b16 %v859
    %v2263 = vunpack.c.l.b16 %v860
    %v2264 = vunpack.c.h.b16 %v860
    %v2265 = vunpack.c.l.b16 %v861
    %v2266 = vunpack.c.h.b16 %v861
    %v2267 = vunpack.c.l.b16 %v862
    %v2268 = vunpack.c.h.b16 %v862
    %v2269 = vunpack.c.l.b16 %v863
    %v2270 = vunpack.c.h.b16 %v863
    %v2271 = vunpack.c.l.b16 %v864
    %v2272 = vunpack.c.h.b16 %v864
    %v2273 = vunpack.c.l.b16 %v865
    %v2274 = vunpack.c.h.b16 %v865
    %v2275 = vunpack.c.l.b16 %v866
    %v2276 = vunpack.c.h.b16 %v866
    %v2277 = vunpack.c.l.b16 %v867
    %v2278 = vunpack.c.h.b16 %v867
    %v2279 = vunpack.c.l.b16 %v868
    %v2280 = vunpack.c.h.b16 %v868
    %v2281 = vunpack.c.l.b16 %v869
    %v2282 = vunpack.c.h.b16 %v869
    %v2283 = vunpack.c.l.b16 %v870
    %v2284 = vunpack.c.h.b16 %v870
    %v2285 = vunpack.c.l.b16 %v871
    %v2286 = vunpack.c.h.b16 %v871
    %v2287 = vunpack.c.l.b16 %v872
    %v2288 = vunpack.c.h.b16 %v872
    %v2289 = vunpack.c.l.b16 %v873
    %v2290 = vunpack.c.h.b16 %v873
    %v2291 = vunpack.c.l.b16 %v874
    %v2292 = vunpack.c.h.b16 %v874
    %v2293 = vunpack.c.l.b16 %v875
    %v2294 = vunpack.c.h.b16 %v875
    %v2295 = vunpack.c.l.b16 %v876
    %v2296 = vunpack.c.h.b16 %v876
    %v2297 = vunpack.c.l.b16 %v877
    %v2298 = vunpack.c.h.b16 %v877
    %v2299 = vunpack.c.l.b16 %v878
    %v2300 = vunpack.c.h.b16 %v878
    %v2301 = vunpack.c.l.b16 %v879
    %v2302 = vunpack.c.h.b16 %v879
    %v2303 = vunpack.c.l.b16 %v880
    %v2304 = vunpack.c.h.b16 %v880
    %v2305 = vunpack.c.l.b16 %v881
    %v2306 = vunpack.c.h.b16 %v881
    %v2307 = vunpack.c.l.b16 %v882
    %v2308 = vunpack.c.h.b16 %v882
    %v2309 = vunpack.c.l.b16 %v883
    %v2310 = vunpack.c.h.b16 %v883
    %v2311 = vunpack.c.l.b16 %v884
    %v2312 = vunpack.c.h.b16 %v884
    %v2313 = vunpack.c.l.b16 %v885
    %v2314 = vunpack.c.h.b16 %v885
    %v2315 = vunpack.c.l.b16 %v886
    %v2316 = vunpack.c.h.b16 %v886
    %v2317 = vunpack.c.l.b16 %v887
    %v2318 = vunpack.c.h.b16 %v887
    %v2319 = vunpack.c.l.b16 %v888
    %v2320 = vunpack.c.h.b16 %v888
    %v2321 = vunpack.c.l.b16 %v889
    %v2322 = vunpack.c.h.b16 %v889
    %v2323 = vunpack.c.l.b16 %v890
    %v2324 = vunpack.c.h.b16 %v890
    %v2325 = vunpack.c.l.b16 %v891
    %v2326 = vunpack.c.h.b16 %v891
    %v2327 = vunpack.c.l.b16 %v892
    %v2328 = vunpack.c.h.b16 %v892
    %v2329 = vunpack.c.l.b16 %v893
    %v2330 = vunpack.c.h.b16 %v893
    %v2331 = vunpack.c.l.b16 %v894
    %v2332 = vunpack.c.h.b16 %v894
    %v2333 = vunpack.c.l.b16 %v895
    %v2334 = vunpack.c.h.b16 %v895
    %v2335 = vunpack.c.l.b16 %v896
    %v2336 = vunpack.c.h.b16 %v896
    %v2337 = vunpack.c.l.b16 %v897
    %v2338 = vunpack.c.h.b16 %v897
    %v2339 = vunpack.c.l.b16 %v898
    %v2340 = vunpack.c.h.b16 %v898
    %v2341 = vunpack.c.l.b16 %v899
    %v2342 = vunpack.c.h.b16 %v899
    %v2343 = vunpack.c.l.b16 %v900
    %v2344 = vunpack.c.h.b16 %v900
    %v2345 = vunpack.c.l.b16 %v901
    %v2346 = vunpack.c.h.b16 %v901
    %v2347 = vunpack.c.l.b16 %v902
    %v2348 = vunpack.c.h.b16 %v902
    %v2349 = vunpack.c.l.b16 %v903
    %v2350 = vunpack.c.h.b16 %v903
    %v2351 = vunpack.c.l.b16 %v904
    %v2352 = vunpack.c.h.b16 %v904
    %v2353 = vunpack.c.l.b16 %v905
    %v2354 = vunpack.c.h.b16 %v905
    %v2355 = vunpack.c.l.b16 %v906
    %v2356 = vunpack.c.h.b16 %v906
    %v2357 = vunpack.c.l.b16 %v907
    %v2358 = vunpack.c.h.b16 %v907
    %v2359 = vunpack.c.l.b16 %v908
    %v2360 = vunpack.c.h.b16 %v908
    %v2361 = vunpack.c.l.b16 %v909
    %v2362 = vunpack.c.h.b16 %v909
    %v2363 = vunpack.c.l.b16 %v910
    %v2364 = vunpack.c.h.b16 %v910
    %v2365 = vunpack.c.l.b16 %v911
    %v2366 = vunpack.c.h.b16 %v911
    %v2367 = vunpack.c.l.b16 %v912
    %v2368 = vunpack.c.h.b16 %v912
    %v2369 = vunpack.c.l.b16 %v913
    %v2370 = vunpack.c.h.b16 %v913
    %v2371 = vunpack.c.l.b16 %v914
    %v2372 = vunpack.c.h.b16 %v914
    %v2373 = vunpack.c.l.b16 %v915
    %v2374 = vunpack.c.h.b16 %v915
    %v2375 = vunpack.c.l.b16 %v916
    %v2376 = vunpack.c.h.b16 %v916
    %v2377 = vunpack.c.l.b16 %v917
    %v2378 = vunpack.c.h.b16 %v917
    %v2379 = vunpack.c.l.b16 %v918
    %v2380 = vunpack.c.h.b16 %v918
    %v2381 = vunpack.c.l.b16 %v919
    %v2382 = vunpack.c.h.b16 %v919
    %v2383 = vunpack.c.l.b16 %v920
    %v2384 = vunpack.c.h.b16 %v920
    %v2385 = vunpack.c.l.b16 %v921
    %v2386 = vunpack.c.h.b16 %v921
    %v2387 = vunpack.c.l.b16 %v922
    %v2388 = vunpack.c.h.b16 %v922
    %v2389 = vunpack.c.l.b16 %v923
    %v2390 = vunpack.c.h.b16 %v923
    %v2391 = vunpack.c.l.b16 %v924
    %v2392 = vunpack.c.h.b16 %v924
    %v2393 = vunpack.c.l.b16 %v925
    %v2394 = vunpack.c.h.b16 %v925
    %v2395 = vunpack.c.l.b16 %v926
    %v2396 = vunpack.c.h.b16 %v926
    %v2397 = vunpack.c.l.b16 %v927
    %v2398 = vunpack.c.h.b16 %v927
    %v2399 = vunpack.c.l.b16 %v928
    %v2400 = vunpack.c.h.b16 %v928
    %v2401 = vunpack.c.l.b16 %v929
    %v2402 = vunpack.c.h.b16 %v929
    %v2403 = vunpack.c.l.b16 %v930
    %v2404 = vunpack.c.h.b16 %v930
    %v2405 = vunpack.c.l.b16 %v931
    %v2406 = vunpack.c.h.b16 %v931
    %v2407 = vunpack.c.l.b16 %v932
    %v2408 = vunpack.c.h.b16 %v932
    %v2409 = vunpack.c.l.b16 %v933
    %v2410 = vunpack.c.h.b16 %v933
    %v2411 = vunpack.c.l.b16 %v934
    %v2412 = vunpack.c.h.b16 %v934
    %v2413 = vunpack.c.l.b16 %v935
    %v2414 = vunpack.c.h.b16 %v935
    %v2415 = vunpack.c.l.b16 %v936
    %v2416 = vunpack.c.h.b16 %v936
    %v2417 = vunpack.c.l.b16 %v937
    %v2418 = vunpack.c.h.b16 %v937
    %v2419 = vunpack.c.l.b16 %v938
    %v2420 = vunpack.c.h.b16 %v938
    %v2421 = vunpack.c.l.b16 %v939
    %v2422 = vunpack.c.h.b16 %v939
    %v2423 = vunpack.c.l.b16 %v940
    %v2424 = vunpack.c.h.b16 %v940
    %v2425 = vunpack.c.l.b16 %v941
    %v2426 = vunpack.c.h.b16 %v941
    %v2427 = vunpack.c.l.b16 %v942
    %v2428 = vunpack.c.h.b16 %v942
    %v2429 = vunpack.c.l.b16 %v943
    %v2430 = vunpack.c.h.b16 %v943
    %v2431 = vunpack.c.l.b16 %v944
    %v2432 = vunpack.c.h.b16 %v944
    %v2433 = vunpack.c.l.b16 %v945
    %v2434 = vunpack.c.h.b16 %v945
    %v2435 = vunpack.c.l.b16 %v946
    %v2436 = vunpack.c.h.b16 %v946
    %v2437 = vunpack.c.l.b16 %v947
    %v2438 = vunpack.c.h.b16 %v947
    %v2439 = vunpack.c.l.b16 %v948
    %v2440 = vunpack.c.h.b16 %v948
    %v2441 = vunpack.c.l.b16 %v949
    %v2442 = vunpack.c.h.b16 %v949
    %v2443 = vunpack.c.l.b16 %v950
    %v2444 = vunpack.c.h.b16 %v950
    %v2445 = vunpack.c.l.b16 %v951
    %v2446 = vunpack.c.h.b16 %v951
    %v2447 = vunpack.c.l.b16 %v952
    %v2448 = vunpack.c.h.b16 %v952
    %v2449 = vunpack.c.l.b16 %v953
    %v2450 = vunpack.c.h.b16 %v953
    %v2451 = vunpack.c.l.b16 %v954
    %v2452 = vunpack.c.h.b16 %v954
    %v2453 = vunpack.c.l.b16 %v955
    %v2454 = vunpack.c.h.b16 %v955
    %v2455 = vunpack.c.l.b16 %v956
    %v2456 = vunpack.c.h.b16 %v956
    %v2457 = vunpack.c.l.b16 %v957
    %v2458 = vunpack.c.h.b16 %v957
    %v2459 = vunpack.c.l.b16 %v958
    %v2460 = vunpack.c.h.b16 %v958
    %v2461 = vunpack.c.l.b16 %v959
    %v2462 = vunpack.c.h.b16 %v959
    %v2463 = vunpack.c.l.b16 %v960
    %v2464 = vunpack.c.h.b16 %v960
    %v2465 = vunpack.c.l.b16 %v961
    %v2466 = vunpack.c.h.b16 %v961
    %v2467 = vunpack.c.l.b16 %v962
    %v2468 = vunpack.c.h.b16 %v962
    %v2469 = vunpack.c.l.b16 %v963
    %v2470 = vunpack.c.h.b16 %v963
    %v2471 = vunpack.c.l.b16 %v964
    %v2472 = vunpack.c.h.b16 %v964
    %v2473 = vunpack.c.l.b16 %v965
    %v2474 = vunpack.c.h.b16 %v965
    %v2475 = vunpack.c.l.b16 %v966
    %v2476 = vunpack.c.h.b16 %v966
    %v2477 = vunpack.c.l.b16 %v967
    %v2478 = vunpack.c.h.b16 %v967
    %v2479 = vunpack.c.l.b16 %v968
    %v2480 = vunpack.c.h.b16 %v968
    %v2481 = vunpack.c.l.b16 %v969
    %v2482 = vunpack.c.h.b16 %v969
    %v2483 = vunpack.c.l.b16 %v970
    %v2484 = vunpack.c.h.b16 %v970
    %v2485 = vunpack.c.l.b16 %v971
    %v2486 = vunpack.c.h.b16 %v971
    %v2487 = vunpack.c.l.b16 %v972
    %v2488 = vunpack.c.h.b16 %v972
    %v2489 = vunpack.c.l.b16 %v973
    %v2490 = vunpack.c.h.b16 %v973
    %v2491 = vunpack.c.l.b16 %v974
    %v2492 = vunpack.c.h.b16 %v974
    %v2493 = vunpack.c.l.b16 %v975
    %v2494 = vunpack.c.h.b16 %v975
    %v2495 = vunpack.c.l.b16 %v976
    %v2496 = vunpack.c.h.b16 %v976
    %v2497 = vunpack.c.l.b16 %v977
    %v2498 = vunpack.c.h.b16 %v977
    %v2499 = vunpack.c.l.b16 %v978
    %v2500 = vunpack.c.h.b16 %v978
    %v2501 = vunpack.c.l.b16 %v979
    %v2502 = vunpack.c.h.b16 %v979
    %v2503 = vunpack.c.l.b16 %v980
    %v2504 = vunpack.c.h.b16 %v980
    %v2505 = vunpack.c.l.b16 %v981
    %v2506 = vunpack.c.h.b16 %v981
    %v2507 = vunpack.c.l.b16 %v982
    %v2508 = vunpack.c.h.b16 %v982
    %v2509 = vunpack.c.l.b16 %v983
    %v2510 = vunpack.c.h.b16 %v983
    %v2511 = vunpack.c.l.b16 %v984
    %v2512 = vunpack.c.h.b16 %v984
    %v2513 = vunpack.c.l.b16 %v985
    %v2514 = vunpack.c.h.b16 %v985
    %v2515 = vunpack.c.l.b16 %v986
    %v2516 = vunpack.c.h.b16 %v986
    %v2517 = vunpack.c.l.b16 %v987
    %v2518 = vunpack.c.h.b16 %v987
    %v2519 = vunpack.c.l.b16 %v988
    %v2520 = vunpack.c.h.b16 %v988
    %v2521 = vunpack.c.l.b16 %v989
    %v2522 = vunpack.c.h.b16 %v989
    %v2523 = vunpack.c.l.b16 %v990
    %v2524 = vunpack.c.h.b16 %v990
    %v2525 = vunpack.c.l.b16 %v991
    %v2526 = vunpack.c.h.b16 %v991
    %v2527 = vunpack.c.l.b16 %v992
    %v2528 = vunpack.c.h.b16 %v992
    %v2529 = vunpack.c.l.b16 %v993
    %v2530 = vunpack.c.h.b16 %v993
    %v2531 = vunpack.c.l.b16 %v994
    %v2532 = vunpack.c.h.b16 %v994
    %v2533 = vunpack.c.l.b16 %v995
    %v2534 = vunpack.c.h.b16 %v995
    %v2535 = vunpack.c.l.b16 %v996
    %v2536 = vunpack.c.h.b16 %v996
    %v2537 = vunpack.c.l.b16 %v997
    %v2538 = vunpack.c.h.b16 %v997
    %v2539 = vunpack.c.l.b16 %v998
    %v2540 = vunpack.c.h.b16 %v998
    %v2541 = vunpack.c.l.b16 %v999
    %v2542 = vunpack.c.h.b16 %v999
    %v2543 = vunpack.c.l.b16 %v1000
    %v2544 = vunpack.c.h.b16 %v1000
    %v2545 = vunpack.c.l.b16 %v1001
    %v2546 = vunpack.c.h.b16 %v1001
    %v2547 = vunpack.c.l.b16 %v1002
    %v2548 = vunpack.c.h.b16 %v1002
    %v2549 = vunpack.c.l.b16 %v1003
    %v2550 = vunpack.c.h.b16 %v1003
    %v2551 = vunpack.c.l.b16 %v1004
    %v2552 = vunpack.c.h.b16 %v1004
    %v2553 = vunpack.c.l.b16 %v1005
    %v2554 = vunpack.c.h.b16 %v1005
    %v2555 = vunpack.c.l.b16 %v1006
    %v2556 = vunpack.c.h.b16 %v1006
    %v2557 = vunpack.c.l.b16 %v1007
    %v2558 = vunpack.c.h.b16 %v1007
    %v2559 = vunpack.c.l.b16 %v1008
    %v2560 = vunpack.c.h.b16 %v1008
    %v2561 = vunpack.c.l.b16 %v1009
    %v2562 = vunpack.c.h.b16 %v1009
    %v2563 = vunpack.c.l.b16 %v1010
    %v2564 = vunpack.c.h.b16 %v1010
    %v2565 = vpack.c.b16 %v1549, %v1541
    %v2566 = vpack.c.b16 %v1550, %v1542
    %v2567 = vpack.c.b16 %v1551, %v1543
    %v2568 = vpack.c.b16 %v1552, %v1544
    %v2569 = vpack.c.b16 %v1553, %v1545
    %v2570 = vpack.c.b16 %v1554, %v1546
    %v2571 = vpack.c.b16 %v1555, %v1547
    %v2572 = vpack.c.b16 %v1556, %v1548
    %v2573 = vpack.c.b16 %v1565, %v1557
    %v2574 = vpack.c.b16 %v1566, %v1558
    %v2575 = vpack.c.b16 %v1567, %v1559
    %v2576 = vpack.c.b16 %v1568, %v1560
    %v2577 = vpack.c.b16 %v1569, %v1561
    %v2578 = vpack.c.b16 %v1570, %v1562
    %v2579 = vpack.c.b16 %v1571, %v1563
    %v2580 = vpack.c.b16 %v1572, %v1564
    %v2581 = vpack.c.b16 %v1581, %v1573
    %v2582 = vpack.c.b16 %v1582, %v1574
    %v2583 = vpack.c.b16 %v1583, %v1575
    %v2584 = vpack.c.b16 %v1584, %v1576
    %v2585 = vpack.c.b16 %v1585, %v1577
    %v2586 = vpack.c.b16 %v1586, %v1578
    %v2587 = vpack.c.b16 %v1587, %v1579
    %v2588 = vpack.c.b16 %v1588, %v1580
    %v2589 = vpack.c.b16 %v1597, %v1589
    %v2590 = vpack.c.b16 %v1598, %v1590
    %v2591 = vpack.c.b16 %v1599, %v1591
    %v2592 = vpack.c.b16 %v1600, %v1592
    %v2593 = vpack.c.b16 %v1601, %v1593
    %v2594 = vpack.c.b16 %v1602, %v1594
    %v2595 = vpack.c.b16 %v1603, %v1595
    %v2596 = vpack.c.b16 %v1604, %v1596
    %v2597 = vpack.c.b16 %v1613, %v1605
    %v2598 = vpack.c.b16 %v1614, %v1606
    %v2599 = vpack.c.b16 %v1615, %v1607
    %v2600 = vpack.c.b16 %v1616, %v1608
    %v2601 = vpack.c.b16 %v1617, %v1609
    %v2602 = vpack.c.b16 %v1618, %v1610
    %v2603 = vpack.c.b16 %v1619, %v1611
    %v2604 = vpack.c.b16 %v1620, %v1612
    %v2605 = vpack.c.b16 %v1629, %v1621
    %v2606 = vpack.c.b16 %v1630, %v1622
    %v2607 = vpack.c.b16 %v1631, %v1623
    %v2608 = vpack.c.b16 %v1632, %v1624
    %v2609 = vpack.c.b16 %v1633, %v1625
    %v2610 = vpack.c.b16 %v1634, %v1626
    %v2611 = vpack.c.b16 %v1635, %v1627
    %v2612 = vpack.c.b16 %v1636, %v1628
    %v2613 = vpack.c.b16 %v1645, %v1637
    %v2614 = vpack.c.b16 %v1646, %v1638
    %v2615 = vpack.c.b16 %v1647, %v1639
    %v2616 = vpack.c.b16 %v1648, %v1640
    %v2617 = vpack.c.b16 %v1649, %v1641
    %v2618 = vpack.c.b16 %v1650, %v1642
    %v2619 = vpack.c.b16 %v1651, %v1643
    %v2620 = vpack.c.b16 %v1652, %v1644
    %v2621 = vpack.c.b16 %v1661, %v1653
    %v2622 = vpack.c.b16 %v1662, %v1654
    %v2623 = vpack.c.b16 %v1663, %v1655
    %v2624 = vpack.c.b16 %v1664, %v1656
    %v2625 = vpack.c.b16 %v1665, %v1657
    %v2626 = vpack.c.b16 %v1666, %v1658
    %v2627 = vpack.c.b16 %v1667, %v1659
    %v2628 = vpack.c.b16 %v1668, %v1660
    %v2629 = vpack.c.b16 %v1677, %v1669
    %v2630 = vpack.c.b16 %v1678, %v1670
    %v2631 = vpack.c.b16 %v1679, %v1671
    %v2632 = vpack.c.b16 %v1680, %v1672
    %v2633 = vpack.c.b16 %v1681, %v1673
    %v2634 = vpack.c.b16 %v1682, %v1674
    %v2635 = vpack.c.b16 %v1683, %v1675
    %v2636 = vpack.c.b16 %v1684, %v1676
    %v2637 = vpack.c.b16 %v1693, %v1685
    %v2638 = vpack.c.b16 %v1694, %v1686
    %v2639 = vpack.c.b16 %v1695, %v1687
    %v2640 = vpack.c.b16 %v1696, %v1688
    %v2641 = vpack.c.b16 %v1697, %v1689
    %v2642 = vpack.c.b16 %v1698, %v1690
    %v2643 = vpack.c.b16 %v1699, %v1691
    %v2644 = vpack.c.b16 %v1700, %v1692
    %v2645 = vpack.c.b16 %v1709, %v1701
    %v2646 = vpack.c.b16 %v1710, %v1702
    %v2647 = vpack.c.b16 %v1711, %v1703
    %v2648 = vpack.c.b16 %v1712, %v1704
    %v2649 = vpack.c.b16 %v1713, %v1705
    %v2650 = vpack.c.b16 %v1714, %v1706
    %v2651 = vpack.c.b16 %v1715, %v1707
    %v2652 = vpack.c.b16 %v1716, %v1708
    %v2653 = vpack.c.b16 %v1725, %v1717
    %v2654 = vpack.c.b16 %v1726, %v1718
    %v2655 = vpack.c.b16 %v1727, %v1719
    %v2656 = vpack.c.b16 %v1728, %v1720
    %v2657 = vpack.c.b16 %v1729, %v1721
    %v2658 = vpack.c.b16 %v1730, %v1722
    %v2659 = vpack.c.b16 %v1731, %v1723
    %v2660 = vpack.c.b16 %v1732, %v1724
    %v2661 = vpack.c.b16 %v1741, %v1733
    %v2662 = vpack.c.b16 %v1742, %v1734
    %v2663 = vpack.c.b16 %v1743, %v1735
    %v2664 = vpack.c.b16 %v1744, %v1736
    %v2665 = vpack.c.b16 %v1745, %v1737
    %v2666 = vpack.c.b16 %v1746, %v1738
    %v2667 = vpack.c.b16 %v1747, %v1739
    %v2668 = vpack.c.b16 %v1748, %v1740
    %v2669 = vpack.c.b16 %v1757, %v1749
    %v2670 = vpack.c.b16 %v1758, %v1750
    %v2671 = vpack.c.b16 %v1759, %v1751
    %v2672 = vpack.c.b16 %v1760, %v1752
    %v2673 = vpack.c.b16 %v1761, %v1753
    %v2674 = vpack.c.b16 %v1762, %v1754
    %v2675 = vpack.c.b16 %v1763, %v1755
    %v2676 = vpack.c.b16 %v1764, %v1756
    %v2677 = vpack.c.b16 %v1773, %v1765
    %v2678 = vpack.c.b16 %v1774, %v1766
    %v2679 = vpack.c.b16 %v1775, %v1767
    %v2680 = vpack.c.b16 %v1776, %v1768
    %v2681 = vpack.c.b16 %v1777, %v1769
    %v2682 = vpack.c.b16 %v1778, %v1770
    %v2683 = vpack.c.b16 %v1779, %v1771
    %v2684 = vpack.c.b16 %v1780, %v1772
    %v2685 = vpack.c.b16 %v1789, %v1781
    %v2686 = vpack.c.b16 %v1790, %v1782
    %v2687 = vpack.c.b16 %v1791, %v1783
    %v2688 = vpack.c.b16 %v1792, %v1784
    %v2689 = vpack.c.b16 %v1793, %v1785
    %v2690 = vpack.c.b16 %v1794, %v1786
    %v2691 = vpack.c.b16 %v1795, %v1787
    %v2692 = vpack.c.b16 %v1796, %v1788
    %v2693 = vpack.c.b16 %v1805, %v1797
    %v2694 = vpack.c.b16 %v1806, %v1798
    %v2695 = vpack.c.b16 %v1807, %v1799
    %v2696 = vpack.c.b16 %v1808, %v1800
    %v2697 = vpack.c.b16 %v1809, %v1801
    %v2698 = vpack.c.b16 %v1810, %v1802
    %v2699 = vpack.c.b16 %v1811, %v1803
    %v2700 = vpack.c.b16 %v1812, %v1804
    %v2701 = vpack.c.b16 %v1821, %v1813
    %v2702 = vpack.c.b16 %v1822, %v1814
    %v2703 = vpack.c.b16 %v1823, %v1815
    %v2704 = vpack.c.b16 %v1824, %v1816
    %v2705 = vpack.c.b16 %v1825, %v1817
    %v2706 = vpack.c.b16 %v1826, %v1818
    %v2707 = vpack.c.b16 %v1827, %v1819
    %v2708 = vpack.c.b16 %v1828, %v1820
    %v2709 = vpack.c.b16 %v1837, %v1829
    %v2710 = vpack.c.b16 %v1838, %v1830
    %v2711 = vpack.c.b16 %v1839, %v1831
    %v2712 = vpack.c.b16 %v1840, %v1832
    %v2713 = vpack.c.b16 %v1841, %v1833
    %v2714 = vpack.c.b16 %v1842, %v1834
    %v2715 = vpack.c.b16 %v1843, %v1835
    %v2716 = vpack.c.b16 %v1844, %v1836
    %v2717 = vpack.c.b16 %v1853, %v1845
    %v2718 = vpack.c.b16 %v1854, %v1846
    %v2719 = vpack.c.b16 %v1855, %v1847
    %v2720 = vpack.c.b16 %v1856, %v1848
    %v2721 = vpack.c.b16 %v1857, %v1849
    %v2722 = vpack.c.b16 %v1858, %v1850
    %v2723 = vpack.c.b16 %v1859, %v1851
    %v2724 = vpack.c.b16 %v1860, %v1852
    %v2725 = vpack.c.b16 %v1869, %v1861
    %v2726 = vpack.c.b16 %v1870, %v1862
    %v2727 = vpack.c.b16 %v1871, %v1863
    %v2728 = vpack.c.b16 %v1872, %v1864
    %v2729 = vpack.c.b16 %v1873, %v1865
    %v2730 = vpack.c.b16 %v1874, %v1866
    %v2731 = vpack.c.b16 %v1875, %v1867
    %v2732 = vpack.c.b16 %v1876, %v1868
    %v2733 = vpack.c.b16 %v1885, %v1877
    %v2734 = vpack.c.b16 %v1886, %v1878
    %v2735 = vpack.c.b16 %v1887, %v1879
    %v2736 = vpack.c.b16 %v1888, %v1880
    %v2737 = vpack.c.b16 %v1889, %v1881
    %v2738 = vpack.c.b16 %v1890, %v1882
    %v2739 = vpack.c.b16 %v1891, %v1883
    %v2740 = vpack.c.b16 %v1892, %v1884
    %v2741 = vpack.c.b16 %v1901, %v1893
    %v2742 = vpack.c.b16 %v1902, %v1894
    %v2743 = vpack.c.b16 %v1903, %v1895
    %v2744 = vpack.c.b16 %v1904, %v1896
    %v2745 = vpack.c.b16 %v1905, %v1897
    %v2746 = vpack.c.b16 %v1906, %v1898
    %v2747 = vpack.c.b16 %v1907, %v1899
    %v2748 = vpack.c.b16 %v1908, %v1900
    %v2749 = vpack.c.b16 %v1917, %v1909
    %v2750 = vpack.c.b16 %v1918, %v1910
    %v2751 = vpack.c.b16 %v1919, %v1911
    %v2752 = vpack.c.b16 %v1920, %v1912
    %v2753 = vpack.c.b16 %v1921, %v1913
    %v2754 = vpack.c.b16 %v1922, %v1914
    %v2755 = vpack.c.b16 %v1923, %v1915
    %v2756 = vpack.c.b16 %v1924, %v1916
    %v2757 = vpack.c.b16 %v1933, %v1925
    %v2758 = vpack.c.b16 %v1934, %v1926
    %v2759 = vpack.c.b16 %v1935, %v1927
    %v2760 = vpack.c.b16 %v1936, %v1928
    %v2761 = vpack.c.b16 %v1937, %v1929
    %v2762 = vpack.c.b16 %v1938, %v1930
    %v2763 = vpack.c.b16 %v1939, %v1931
    %v2764 = vpack.c.b16 %v1940, %v1932
    %v2765 = vpack.c.b16 %v1949, %v1941
    %v2766 = vpack.c.b16 %v1950, %v1942
    %v2767 = vpack.c.b16 %v1951, %v1943
    %v2768 = vpack.c.b16 %v1952, %v1944
    %v2769 = vpack.c.b16 %v1953, %v1945
    %v2770 = vpack.c.b16 %v1954, %v1946
    %v2771 = vpack.c.b16 %v1955, %v1947
    %v2772 = vpack.c.b16 %v1956, %v1948
    %v2773 = vpack.c.b16 %v1965, %v1957
    %v2774 = vpack.c.b16 %v1966, %v1958
    %v2775 = vpack.c.b16 %v1967, %v1959
    %v2776 = vpack.c.b16 %v1968, %v1960
    %v2777 = vpack.c.b16 %v1969, %v1961
    %v2778 = vpack.c.b16 %v1970, %v1962
    %v2779 = vpack.c.b16 %v1971, %v1963
    %v2780 = vpack.c.b16 %v1972, %v1964
    %v2781 = vpack.c.b16 %v1981, %v1973
    %v2782 = vpack.c.b16 %v1982, %v1974
    %v2783 = vpack.c.b16 %v1983, %v1975
    %v2784 = vpack.c.b16 %v1984, %v1976
    %v2785 = vpack.c.b16 %v1985, %v1977
    %v2786 = vpack.c.b16 %v1986, %v1978
    %v2787 = vpack.c.b16 %v1987, %v1979
    %v2788 = vpack.c.b16 %v1988, %v1980
    %v2789 = vpack.c.b16 %v1997, %v1989
    %v2790 = vpack.c.b16 %v1998, %v1990
    %v2791 = vpack.c.b16 %v1999, %v1991
    %v2792 = vpack.c.b16 %v2000, %v1992
    %v2793 = vpack.c.b16 %v2001, %v1993
    %v2794 = vpack.c.b16 %v2002, %v1994
    %v2795 = vpack.c.b16 %v2003, %v1995
    %v2796 = vpack.c.b16 %v2004, %v1996
    %v2797 = vpack.c.b16 %v2013, %v2005
    %v2798 = vpack.c.b16 %v2014, %v2006
    %v2799 = vpack.c.b16 %v2015, %v2007
    %v2800 = vpack.c.b16 %v2016, %v2008
    %v2801 = vpack.c.b16 %v2017, %v2009
    %v2802 = vpack.c.b16 %v2018, %v2010
    %v2803 = vpack.c.b16 %v2019, %v2011
    %v2804 = vpack.c.b16 %v2020, %v2012
    %v2805 = vpack.c.b16 %v2029, %v2021
    %v2806 = vpack.c.b16 %v2030, %v2022
    %v2807 = vpack.c.b16 %v2031, %v2023
    %v2808 = vpack.c.b16 %v2032, %v2024
    %v2809 = vpack.c.b16 %v2033, %v2025
    %v2810 = vpack.c.b16 %v2034, %v2026
    %v2811 = vpack.c.b16 %v2035, %v2027
    %v2812 = vpack.c.b16 %v2036, %v2028
    %v2813 = vpack.c.b16 %v2045, %v2037
    %v2814 = vpack.c.b16 %v2046, %v2038
    %v2815 = vpack.c.b16 %v2047, %v2039
    %v2816 = vpack.c.b16 %v2048, %v2040
    %v2817 = vpack.c.b16 %v2049, %v2041
    %v2818 = vpack.c.b16 %v2050, %v2042
    %v2819 = vpack.c.b16 %v2051, %v2043
    %v2820 = vpack.c.b16 %v2052, %v2044
    %v2821 = vpack.c.b16 %v2061, %v2053
    %v2822 = vpack.c.b16 %v2062, %v2054
    %v2823 = vpack.c.b16 %v2063, %v2055
    %v2824 = vpack.c.b16 %v2064, %v2056
    %v2825 = vpack.c.b16 %v2065, %v2057
    %v2826 = vpack.c.b16 %v2066, %v2058
    %v2827 = vpack.c.b16 %v2067, %v2059
    %v2828 = vpack.c.b16 %v2068, %v2060
    %v2829 = vpack.c.b16 %v2077, %v2069
    %v2830 = vpack.c.b16 %v2078, %v2070
    %v2831 = vpack.c.b16 %v2079, %v2071
    %v2832 = vpack.c.b16 %v2080, %v2072
    %v2833 = vpack.c.b16 %v2081, %v2073
    %v2834 = vpack.c.b16 %v2082, %v2074
    %v2835 = vpack.c.b16 %v2083, %v2075
    %v2836 = vpack.c.b16 %v2084, %v2076
    %v2837 = vpack.c.b16 %v2093, %v2085
    %v2838 = vpack.c.b16 %v2094, %v2086
    %v2839 = vpack.c.b16 %v2095, %v2087
    %v2840 = vpack.c.b16 %v2096, %v2088
    %v2841 = vpack.c.b16 %v2097, %v2089
    %v2842 = vpack.c.b16 %v2098, %v2090
    %v2843 = vpack.c.b16 %v2099, %v2091
    %v2844 = vpack.c.b16 %v2100, %v2092
    %v2845 = vpack.c.b16 %v2109, %v2101
    %v2846 = vpack.c.b16 %v2110, %v2102
    %v2847 = vpack.c.b16 %v2111, %v2103
    %v2848 = vpack.c.b16 %v2112, %v2104
    %v2849 = vpack.c.b16 %v2113, %v2105
    %v2850 = vpack.c.b16 %v2114, %v2106
    %v2851 = vpack.c.b16 %v2115, %v2107
    %v2852 = vpack.c.b16 %v2116, %v2108
    %v2853 = vpack.c.b16 %v2125, %v2117
    %v2854 = vpack.c.b16 %v2126, %v2118
    %v2855 = vpack.c.b16 %v2127, %v2119
    %v2856 = vpack.c.b16 %v2128, %v2120
    %v2857 = vpack.c.b16 %v2129, %v2121
    %v2858 = vpack.c.b16 %v2130, %v2122
    %v2859 = vpack.c.b16 %v2131, %v2123
    %v2860 = vpack.c.b16 %v2132, %v2124
    %v2861 = vpack.c.b16 %v2141, %v2133
    %v2862 = vpack.c.b16 %v2142, %v2134
    %v2863 = vpack.c.b16 %v2143, %v2135
    %v2864 = vpack.c.b16 %v2144, %v2136
    %v2865 = vpack.c.b16 %v2145, %v2137
    %v2866 = vpack.c.b16 %v2146, %v2138
    %v2867 = vpack.c.b16 %v2147, %v2139
    %v2868 = vpack.c.b16 %v2148, %v2140
    %v2869 = vpack.c.b16 %v2157, %v2149
    %v2870 = vpack.c.b16 %v2158, %v2150
    %v2871 = vpack.c.b16 %v2159, %v2151
    %v2872 = vpack.c.b16 %v2160, %v2152
    %v2873 = vpack.c.b16 %v2161, %v2153
    %v2874 = vpack.c.b16 %v2162, %v2154
    %v2875 = vpack.c.b16 %v2163, %v2155
    %v2876 = vpack.c.b16 %v2164, %v2156
    %v2877 = vpack.c.b16 %v2173, %v2165
    %v2878 = vpack.c.b16 %v2174, %v2166
    %v2879 = vpack.c.b16 %v2175, %v2167
    %v2880 = vpack.c.b16 %v2176, %v2168
    %v2881 = vpack.c.b16 %v2177, %v2169
    %v2882 = vpack.c.b16 %v2178, %v2170
    %v2883 = vpack.c.b16 %v2179, %v2171
    %v2884 = vpack.c.b16 %v2180, %v2172
    %v2885 = vpack.c.b16 %v2189, %v2181
    %v2886 = vpack.c.b16 %v2190, %v2182
    %v2887 = vpack.c.b16 %v2191, %v2183
    %v2888 = vpack.c.b16 %v2192, %v2184
    %v2889 = vpack.c.b16 %v2193, %v2185
    %v2890 = vpack.c.b16 %v2194, %v2186
    %v2891 = vpack.c.b16 %v2195, %v2187
    %v2892 = vpack.c.b16 %v2196, %v2188
    %v2893 = vpack.c.b16 %v2205, %v2197
    %v2894 = vpack.c.b16 %v2206, %v2198
    %v2895 = vpack.c.b16 %v2207, %v2199
    %v2896 = vpack.c.b16 %v2208, %v2200
    %v2897 = vpack.c.b16 %v2209, %v2201
    %v2898 = vpack.c.b16 %v2210, %v2202
    %v2899 = vpack.c.b16 %v2211, %v2203
    %v2900 = vpack.c.b16 %v2212, %v2204
    %v2901 = vpack.c.b16 %v2221, %v2213
    %v2902 = vpack.c.b16 %v2222, %v2214
    %v2903 = vpack.c.b16 %v2223, %v2215
    %v2904 = vpack.c.b16 %v2224, %v2216
    %v2905 = vpack.c.b16 %v2225, %v2217
    %v2906 = vpack.c.b16 %v2226, %v2218
    %v2907 = vpack.c.b16 %v2227, %v2219
    %v2908 = vpack.c.b16 %v2228, %v2220
    %v2909 = vpack.c.b16 %v2237, %v2229
    %v2910 = vpack.c.b16 %v2238, %v2230
    %v2911 = vpack.c.b16 %v2239, %v2231
    %v2912 = vpack.c.b16 %v2240, %v2232
    %v2913 = vpack.c.b16 %v2241, %v2233
    %v2914 = vpack.c.b16 %v2242, %v2234
    %v2915 = vpack.c.b16 %v2243, %v2235
    %v2916 = vpack.c.b16 %v2244, %v2236
    %v2917 = vpack.c.b16 %v2253, %v2245
    %v2918 = vpack.c.b16 %v2254, %v2246
    %v2919 = vpack.c.b16 %v2255, %v2247
    %v2920 = vpack.c.b16 %v2256, %v2248
    %v2921 = vpack.c.b16 %v2257, %v2249
    %v2922 = vpack.c.b16 %v2258, %v2250
    %v2923 = vpack.c.b16 %v2259, %v2251
    %v2924 = vpack.c.b16 %v2260, %v2252
    %v2925 = vpack.c.b16 %v2269, %v2261
    %v2926 = vpack.c.b16 %v2270, %v2262
    %v2927 = vpack.c.b16 %v2271, %v2263
    %v2928 = vpack.c.b16 %v2272, %v2264
    %v2929 = vpack.c.b16 %v2273, %v2265
    %v2930 = vpack.c.b16 %v2274, %v2266
    %v2931 = vpack.c.b16 %v2275, %v2267
    %v2932 = vpack.c.b16 %v2276, %v2268
    %v2933 = vpack.c.b16 %v2285, %v2277
    %v2934 = vpack.c.b16 %v2286, %v2278
    %v2935 = vpack.c.b16 %v2287, %v2279
    %v2936 = vpack.c.b16 %v2288, %v2280
    %v2937 = vpack.c.b16 %v2289, %v2281
    %v2938 = vpack.c.b16 %v2290, %v2282
    %v2939 = vpack.c.b16 %v2291, %v2283
    %v2940 = vpack.c.b16 %v2292, %v2284
    %v2941 = vpack.c.b16 %v2301, %v2293
    %v2942 = vpack.c.b16 %v2302, %v2294
    %v2943 = vpack.c.b16 %v2303, %v2295
    %v2944 = vpack.c.b16 %v2304, %v2296
    %v2945 = vpack.c.b16 %v2305, %v2297
    %v2946 = vpack.c.b16 %v2306, %v2298
    %v2947 = vpack.c.b16 %v2307, %v2299
    %v2948 = vpack.c.b16 %v2308, %v2300
    %v2949 = vpack.c.b16 %v2317, %v2309
    %v2950 = vpack.c.b16 %v2318, %v2310
    %v2951 = vpack.c.b16 %v2319, %v2311
    %v2952 = vpack.c.b16 %v2320, %v2312
    %v2953 = vpack.c.b16 %v2321, %v2313
    %v2954 = vpack.c.b16 %v2322, %v2314
    %v2955 = vpack.c.b16 %v2323, %v2315
    %v2956 = vpack.c.b16 %v2324, %v2316
    %v2957 = vpack.c.b16 %v2333, %v2325
    %v2958 = vpack.c.b16 %v2334, %v2326
    %v2959 = vpack.c.b16 %v2335, %v2327
    %v2960 = vpack.c.b16 %v2336, %v2328
    %v2961 = vpack.c.b16 %v2337, %v2329
    %v2962 = vpack.c.b16 %v2338, %v2330
    %v2963 = vpack.c.b16 %v2339, %v2331
    %v2964 = vpack.c.b16 %v2340, %v2332
    %v2965 = vpack.c.b16 %v2349, %v2341
    %v2966 = vpack.c.b16 %v2350, %v2342
    %v2967 = vpack.c.b16 %v2351, %v2343
    %v2968 = vpack.c.b16 %v2352, %v2344
    %v2969 = vpack.c.b16 %v2353, %v2345
    %v2970 = vpack.c.b16 %v2354, %v2346
    %v2971 = vpack.c.b16 %v2355, %v2347
    %v2972 = vpack.c.b16 %v2356, %v2348
    %v2973 = vpack.c.b16 %v2365, %v2357
    %v2974 = vpack.c.b16 %v2366, %v2358
    %v2975 = vpack.c.b16 %v2367, %v2359
    %v2976 = vpack.c.b16 %v2368, %v2360
    %v2977 = vpack.c.b16 %v2369, %v2361
    %v2978 = vpack.c.b16 %v2370, %v2362
    %v2979 = vpack.c.b16 %v2371, %v2363
    %v2980 = vpack.c.b16 %v2372, %v2364
    %v2981 = vpack.c.b16 %v2381, %v2373
    %v2982 = vpack.c.b16 %v2382, %v2374
    %v2983 = vpack.c.b16 %v2383, %v2375
    %v2984 = vpack.c.b16 %v2384, %v2376
    %v2985 = vpack.c.b16 %v2385, %v2377
    %v2986 = vpack.c.b16 %v2386, %v2378
    %v2987 = vpack.c.b16 %v2387, %v2379
    %v2988 = vpack.c.b16 %v2388, %v2380
    %v2989 = vpack.c.b16 %v2397, %v2389
    %v2990 = vpack.c.b16 %v2398, %v2390
    %v2991 = vpack.c.b16 %v2399, %v2391
    %v2992 = vpack.c.b16 %v2400, %v2392
    %v2993 = vpack.c.b16 %v2401, %v2393
    %v2994 = vpack.c.b16 %v2402, %v2394
    %v2995 = vpack.c.b16 %v2403, %v2395
    %v2996 = vpack.c.b16 %v2404, %v2396
    %v2997 = vpack.c.b16 %v2413, %v2405
    %v2998 = vpack.c.b16 %v2414, %v2406
    %v2999 = vpack.c.b16 %v2415, %v2407
    %v3000 = vpack.c.b16 %v2416, %v2408
    %v3001 = vpack.c.b16 %v2417, %v2409
    %v3002 = vpack.c.b16 %v2418, %v2410
    %v3003 = vpack.c.b16 %v2419, %v2411
    %v3004 = vpack.c.b16 %v2420, %v2412
    %v3005 = vpack.c.b16 %v2429, %v2421
    %v3006 = vpack.c.b16 %v2430, %v2422
    %v3007 = vpack.c.b16 %v2431, %v2423
    %v3008 = vpack.c.b16 %v2432, %v2424
    %v3009 = vpack.c.b16 %v2433, %v2425
    %v3010 = vpack.c.b16 %v2434, %v2426
    %v3011 = vpack.c.b16 %v2435, %v2427
    %v3012 = vpack.c.b16 %v2436, %v2428
    %v3013 = vpack.c.b16 %v2445, %v2437
    %v3014 = vpack.c.b16 %v2446, %v2438
    %v3015 = vpack.c.b16 %v2447, %v2439
    %v3016 = vpack.c.b16 %v2448, %v2440
    %v3017 = vpack.c.b16 %v2449, %v2441
    %v3018 = vpack.c.b16 %v2450, %v2442
    %v3019 = vpack.c.b16 %v2451, %v2443
    %v3020 = vpack.c.b16 %v2452, %v2444
    %v3021 = vpack.c.b16 %v2461, %v2453
    %v3022 = vpack.c.b16 %v2462, %v2454
    %v3023 = vpack.c.b16 %v2463, %v2455
    %v3024 = vpack.c.b16 %v2464, %v2456
    %v3025 = vpack.c.b16 %v2465, %v2457
    %v3026 = vpack.c.b16 %v2466, %v2458
    %v3027 = vpack.c.b16 %v2467, %v2459
    %v3028 = vpack.c.b16 %v2468, %v2460
    %v3029 = vpack.c.b16 %v2477, %v2469
    %v3030 = vpack.c.b16 %v2478, %v2470
    %v3031 = vpack.c.b16 %v2479, %v2471
    %v3032 = vpack.c.b16 %v2480, %v2472
    %v3033 = vpack.c.b16 %v2481, %v2473
    %v3034 = vpack.c.b16 %v2482, %v2474
    %v3035 = vpack.c.b16 %v2483, %v2475
    %v3036 = vpack.c.b16 %v2484, %v2476
    %v3037 = vpack.c.b16 %v2493, %v2485
    %v3038 = vpack.c.b16 %v2494, %v2486
    %v3039 = vpack.c.b16 %v2495, %v2487
    %v3040 = vpack.c.b16 %v2496, %v2488
    %v3041 = vpack.c.b16 %v2497, %v2489
    %v3042 = vpack.c.b16 %v2498, %v2490
    %v3043 = vpack.c.b16 %v2499, %v2491
    %v3044 = vpack.c.b16 %v2500, %v2492
    %v3045 = vpack.c.b16 %v2509, %v2501
    %v3046 = vpack.c.b16 %v2510, %v2502
    %v3047 = vpack.c.b16 %v2511, %v2503
    %v3048 = vpack.c.b16 %v2512, %v2504
    %v3049 = vpack.c.b16 %v2513, %v2505
    %v3050 = vpack.c.b16 %v2514, %v2506
    %v3051 = vpack.c.b16 %v2515, %v2507
    %v3052 = vpack.c.b16 %v2516, %v2508
    %v3053 = vpack.c.b16 %v2525, %v2517
    %v3054 = vpack.c.b16 %v2526, %v2518
    %v3055 = vpack.c.b16 %v2527, %v2519
    %v3056 = vpack.c.b16 %v2528, %v2520
    %v3057 = vpack.c.b16 %v2529, %v2521
    %v3058 = vpack.c.b16 %v2530, %v2522
    %v3059 = vpack.c.b16 %v2531, %v2523
    %v3060 = vpack.c.b16 %v2532, %v2524
    %v3061 = vpack.c.b16 %v2541, %v2533
    %v3062 = vpack.c.b16 %v2542, %v2534
    %v3063 = vpack.c.b16 %v2543, %v2535
    %v3064 = vpack.c.b16 %v2544, %v2536
    %v3065 = vpack.c.b16 %v2545, %v2537
    %v3066 = vpack.c.b16 %v2546, %v2538
    %v3067 = vpack.c.b16 %v2547, %v2539
    %v3068 = vpack.c.b16 %v2548, %v2540
    %v3069 = vpack.c.b16 %v2557, %v2549
    %v3070 = vpack.c.b16 %v2558, %v2550
    %v3071 = vpack.c.b16 %v2559, %v2551
    %v3072 = vpack.c.b16 %v2560, %v2552
    %v3073 = vpack.c.b16 %v2561, %v2553
    %v3074 = vpack.c.b16 %v2562, %v2554
    %v3075 = vpack.c.b16 %v2563, %v2555
    %v3076 = vpack.c.b16 %v2564, %v2556
    %3589 = vmatpush.bf16.msra.mxu0 %v2621
    %3590 = vmatpush.bf16.msra.mxu0 %v2613
    %3591 = vmatpush.bf16.msra.mxu0 %v2605
    %3592 = vmatpush.bf16.msra.mxu0 %v2597
    %3593 = vmatpush.bf16.msra.mxu0 %v2589
    %3594 = vmatpush.bf16.msra.mxu0 %v2581
    %3595 = vmatpush.bf16.msra.mxu0 %v2573
    %3596 = vmatpush.bf16.msra.mxu0 %v2565
    %3597 = vmatmul.bf16.gmra.mxu0 %v491
    %v3598 = vpop.f32.mrf.mxu0
    %v3599 = vadd.f32 %v1013, %v3598
    %v3600 = vpop.f32.mrf.mxu0
    %3601 = vdwg.mxu0
    %3602 = vmatpush.bf16.msra.mxu0 %v2685
    %3603 = vmatpush.bf16.msra.mxu0 %v2677
    %3604 = vmatpush.bf16.msra.mxu0 %v2669
    %3605 = vmatpush.bf16.msra.mxu0 %v2661
    %3606 = vmatpush.bf16.msra.mxu0 %v2653
    %3607 = vmatpush.bf16.msra.mxu0 %v2645
    %3608 = vmatpush.bf16.msra.mxu0 %v2637
    %3609 = vmatpush.bf16.msra.mxu0 %v2629
    %3610 = vmatmul.bf16.gmra.mxu0 %v492
    %v3611 = vpop.f32.mrf.mxu0
    %v3612 = vadd.f32 %v3599, %v3611
    %v3613 = vpop.f32.mrf.mxu0
    %3614 = vdwg.mxu0
    %3615 = vmatpush.bf16.msra.mxu0 %v2749
    %3616 = vmatpush.bf16.msra.mxu0 %v2741
    %3617 = vmatpush.bf16.msra.mxu0 %v2733
    %3618 = vmatpush.bf16.msra.mxu0 %v2725
    %3619 = vmatpush.bf16.msra.mxu0 %v2717
    %3620 = vmatpush.bf16.msra.mxu0 %v2709
    %3621 = vmatpush.bf16.msra.mxu0 %v2701
    %3622 = vmatpush.bf16.msra.mxu0 %v2693
    %3623 = vmatmul.bf16.gmra.mxu0 %v493
    %v3624 = vpop.f32.mrf.mxu0
    %v3625 = vadd.f32 %v3612, %v3624
    %v3626 = vpop.f32.mrf.mxu0
    %3627 = vdwg.mxu0
    %3628 = vmatpush.bf16.msra.mxu0 %v2813
    %3629 = vmatpush.bf16.msra.mxu0 %v2805
    %3630 = vmatpush.bf16.msra.mxu0 %v2797
    %3631 = vmatpush.bf16.msra.mxu0 %v2789
    %3632 = vmatpush.bf16.msra.mxu0 %v2781
    %3633 = vmatpush.bf16.msra.mxu0 %v2773
    %3634 = vmatpush.bf16.msra.mxu0 %v2765
    %3635 = vmatpush.bf16.msra.mxu0 %v2757
    %3636 = vmatmul.bf16.gmra.mxu0 %v494
    %v3637 = vpop.f32.mrf.mxu0
    %v3638 = vadd.f32 %v3625, %v3637
    %v3639 = vpop.f32.mrf.mxu0
    %3640 = vdwg.mxu0
    %3641 = vmatpush.bf16.msra.mxu0 %v2877
    %3642 = vmatpush.bf16.msra.mxu0 %v2869
    %3643 = vmatpush.bf16.msra.mxu0 %v2861
    %3644 = vmatpush.bf16.msra.mxu0 %v2853
    %3645 = vmatpush.bf16.msra.mxu0 %v2845
    %3646 = vmatpush.bf16.msra.mxu0 %v2837
    %3647 = vmatpush.bf16.msra.mxu0 %v2829
    %3648 = vmatpush.bf16.msra.mxu0 %v2821
    %3649 = vmatmul.bf16.gmra.mxu0 %v495
    %v3650 = vpop.f32.mrf.mxu0
    %v3651 = vadd.f32 %v3638, %v3650
    %v3652 = vpop.f32.mrf.mxu0
    %3653 = vdwg.mxu0
    %3654 = vmatpush.bf16.msra.mxu0 %v2941
    %3655 = vmatpush.bf16.msra.mxu0 %v2933
    %3656 = vmatpush.bf16.msra.mxu0 %v2925
    %3657 = vmatpush.bf16.msra.mxu0 %v2917
    %3658 = vmatpush.bf16.msra.mxu0 %v2909
    %3659 = vmatpush.bf16.msra.mxu0 %v2901
    %3660 = vmatpush.bf16.msra.mxu0 %v2893
    %3661 = vmatpush.bf16.msra.mxu0 %v2885
    %3662 = vmatmul.bf16.gmra.mxu0 %v496
    %v3663 = vpop.f32.mrf.mxu0
    %v3664 = vadd.f32 %v3651, %v3663
    %v3665 = vpop.f32.mrf.mxu0
    %3666 = vdwg.mxu0
    %3667 = vmatpush.bf16.msra.mxu0 %v3005
    %3668 = vmatpush.bf16.msra.mxu0 %v2997
    %3669 = vmatpush.bf16.msra.mxu0 %v2989
    %3670 = vmatpush.bf16.msra.mxu0 %v2981
    %3671 = vmatpush.bf16.msra.mxu0 %v2973
    %3672 = vmatpush.bf16.msra.mxu0 %v2965
    %3673 = vmatpush.bf16.msra.mxu0 %v2957
    %3674 = vmatpush.bf16.msra.mxu0 %v2949
    %3675 = vmatmul.bf16.gmra.mxu0 %v497
    %v3676 = vpop.f32.mrf.mxu0
    %v3677 = vadd.f32 %v3664, %v3676
    %v3678 = vpop.f32.mrf.mxu0
    %3679 = vdwg.mxu0
    %3680 = vmatpush.bf16.msra.mxu0 %v3069
    %3681 = vmatpush.bf16.msra.mxu0 %v3061
    %3682 = vmatpush.bf16.msra.mxu0 %v3053
    %3683 = vmatpush.bf16.msra.mxu0 %v3045
    %3684 = vmatpush.bf16.msra.mxu0 %v3037
    %3685 = vmatpush.bf16.msra.mxu0 %v3029
    %3686 = vmatpush.bf16.msra.mxu0 %v3021
    %3687 = vmatpush.bf16.msra.mxu0 %v3013
    %3688 = vmatmul.bf16.gmra.mxu0 %v498
    %v3689 = vpop.f32.mrf.mxu0
    %v3690 = vadd.f32 %v3677, %v3689
    %v3691 = vpop.f32.mrf.mxu0
    %3692 = vdwg.mxu0
    %3693 = vmatpush.bf16.msra.mxu0 %v2622
    %3694 = vmatpush.bf16.msra.mxu0 %v2614
    %3695 = vmatpush.bf16.msra.mxu0 %v2606
    %3696 = vmatpush.bf16.msra.mxu0 %v2598
    %3697 = vmatpush.bf16.msra.mxu0 %v2590
    %3698 = vmatpush.bf16.msra.mxu0 %v2582
    %3699 = vmatpush.bf16.msra.mxu0 %v2574
    %3700 = vmatpush.bf16.msra.mxu0 %v2566
    %3701 = vmatmul.bf16.gmra.mxu0 %v491
    %v3702 = vpop.f32.mrf.mxu0
    %v3703 = vadd.f32 %v1014, %v3702
    %v3704 = vpop.f32.mrf.mxu0
    %3705 = vdwg.mxu0
    %3706 = vmatpush.bf16.msra.mxu0 %v2686
    %3707 = vmatpush.bf16.msra.mxu0 %v2678
    %3708 = vmatpush.bf16.msra.mxu0 %v2670
    %3709 = vmatpush.bf16.msra.mxu0 %v2662
    %3710 = vmatpush.bf16.msra.mxu0 %v2654
    %3711 = vmatpush.bf16.msra.mxu0 %v2646
    %3712 = vmatpush.bf16.msra.mxu0 %v2638
    %3713 = vmatpush.bf16.msra.mxu0 %v2630
    %3714 = vmatmul.bf16.gmra.mxu0 %v492
    %v3715 = vpop.f32.mrf.mxu0
    %v3716 = vadd.f32 %v3703, %v3715
    %v3717 = vpop.f32.mrf.mxu0
    %3718 = vdwg.mxu0
    %3719 = vmatpush.bf16.msra.mxu0 %v2750
    %3720 = vmatpush.bf16.msra.mxu0 %v2742
    %3721 = vmatpush.bf16.msra.mxu0 %v2734
    %3722 = vmatpush.bf16.msra.mxu0 %v2726
    %3723 = vmatpush.bf16.msra.mxu0 %v2718
    %3724 = vmatpush.bf16.msra.mxu0 %v2710
    %3725 = vmatpush.bf16.msra.mxu0 %v2702
    %3726 = vmatpush.bf16.msra.mxu0 %v2694
    %3727 = vmatmul.bf16.gmra.mxu0 %v493
    %v3728 = vpop.f32.mrf.mxu0
    %v3729 = vadd.f32 %v3716, %v3728
    %v3730 = vpop.f32.mrf.mxu0
    %3731 = vdwg.mxu0
    %3732 = vmatpush.bf16.msra.mxu0 %v2814
    %3733 = vmatpush.bf16.msra.mxu0 %v2806
    %3734 = vmatpush.bf16.msra.mxu0 %v2798
    %3735 = vmatpush.bf16.msra.mxu0 %v2790
    %3736 = vmatpush.bf16.msra.mxu0 %v2782
    %3737 = vmatpush.bf16.msra.mxu0 %v2774
    %3738 = vmatpush.bf16.msra.mxu0 %v2766
    %3739 = vmatpush.bf16.msra.mxu0 %v2758
    %3740 = vmatmul.bf16.gmra.mxu0 %v494
    %v3741 = vpop.f32.mrf.mxu0
    %v3742 = vadd.f32 %v3729, %v3741
    %v3743 = vpop.f32.mrf.mxu0
    %3744 = vdwg.mxu0
    %3745 = vmatpush.bf16.msra.mxu0 %v2878
    %3746 = vmatpush.bf16.msra.mxu0 %v2870
    %3747 = vmatpush.bf16.msra.mxu0 %v2862
    %3748 = vmatpush.bf16.msra.mxu0 %v2854
    %3749 = vmatpush.bf16.msra.mxu0 %v2846
    %3750 = vmatpush.bf16.msra.mxu0 %v2838
    %3751 = vmatpush.bf16.msra.mxu0 %v2830
    %3752 = vmatpush.bf16.msra.mxu0 %v2822
    %3753 = vmatmul.bf16.gmra.mxu0 %v495
    %v3754 = vpop.f32.mrf.mxu0
    %v3755 = vadd.f32 %v3742, %v3754
    %v3756 = vpop.f32.mrf.mxu0
    %3757 = vdwg.mxu0
    %3758 = vmatpush.bf16.msra.mxu0 %v2942
    %3759 = vmatpush.bf16.msra.mxu0 %v2934
    %3760 = vmatpush.bf16.msra.mxu0 %v2926
    %3761 = vmatpush.bf16.msra.mxu0 %v2918
    %3762 = vmatpush.bf16.msra.mxu0 %v2910
    %3763 = vmatpush.bf16.msra.mxu0 %v2902
    %3764 = vmatpush.bf16.msra.mxu0 %v2894
    %3765 = vmatpush.bf16.msra.mxu0 %v2886
    %3766 = vmatmul.bf16.gmra.mxu0 %v496
    %v3767 = vpop.f32.mrf.mxu0
    %v3768 = vadd.f32 %v3755, %v3767
    %v3769 = vpop.f32.mrf.mxu0
    %3770 = vdwg.mxu0
    %3771 = vmatpush.bf16.msra.mxu0 %v3006
    %3772 = vmatpush.bf16.msra.mxu0 %v2998
    %3773 = vmatpush.bf16.msra.mxu0 %v2990
    %3774 = vmatpush.bf16.msra.mxu0 %v2982
    %3775 = vmatpush.bf16.msra.mxu0 %v2974
    %3776 = vmatpush.bf16.msra.mxu0 %v2966
    %3777 = vmatpush.bf16.msra.mxu0 %v2958
    %3778 = vmatpush.bf16.msra.mxu0 %v2950
    %3779 = vmatmul.bf16.gmra.mxu0 %v497
    %v3780 = vpop.f32.mrf.mxu0
    %v3781 = vadd.f32 %v3768, %v3780
    %v3782 = vpop.f32.mrf.mxu0
    %3783 = vdwg.mxu0
    %3784 = vmatpush.bf16.msra.mxu0 %v3070
    %3785 = vmatpush.bf16.msra.mxu0 %v3062
    %3786 = vmatpush.bf16.msra.mxu0 %v3054
    %3787 = vmatpush.bf16.msra.mxu0 %v3046
    %3788 = vmatpush.bf16.msra.mxu0 %v3038
    %3789 = vmatpush.bf16.msra.mxu0 %v3030
    %3790 = vmatpush.bf16.msra.mxu0 %v3022
    %3791 = vmatpush.bf16.msra.mxu0 %v3014
    %3792 = vmatmul.bf16.gmra.mxu0 %v498
    %v3793 = vpop.f32.mrf.mxu0
    %v3794 = vadd.f32 %v3781, %v3793
    %v3795 = vpop.f32.mrf.mxu0
    %3796 = vdwg.mxu0
    %3797 = vmatpush.bf16.msra.mxu0 %v2623
    %3798 = vmatpush.bf16.msra.mxu0 %v2615
    %3799 = vmatpush.bf16.msra.mxu0 %v2607
    %3800 = vmatpush.bf16.msra.mxu0 %v2599
    %3801 = vmatpush.bf16.msra.mxu0 %v2591
    %3802 = vmatpush.bf16.msra.mxu0 %v2583
    %3803 = vmatpush.bf16.msra.mxu0 %v2575
    %3804 = vmatpush.bf16.msra.mxu0 %v2567
    %3805 = vmatmul.bf16.gmra.mxu0 %v491
    %v3806 = vpop.f32.mrf.mxu0
    %v3807 = vadd.f32 %v1015, %v3806
    %v3808 = vpop.f32.mrf.mxu0
    %3809 = vdwg.mxu0
    %3810 = vmatpush.bf16.msra.mxu0 %v2687
    %3811 = vmatpush.bf16.msra.mxu0 %v2679
    %3812 = vmatpush.bf16.msra.mxu0 %v2671
    %3813 = vmatpush.bf16.msra.mxu0 %v2663
    %3814 = vmatpush.bf16.msra.mxu0 %v2655
    %3815 = vmatpush.bf16.msra.mxu0 %v2647
    %3816 = vmatpush.bf16.msra.mxu0 %v2639
    %3817 = vmatpush.bf16.msra.mxu0 %v2631
    %3818 = vmatmul.bf16.gmra.mxu0 %v492
    %v3819 = vpop.f32.mrf.mxu0
    %v3820 = vadd.f32 %v3807, %v3819
    %v3821 = vpop.f32.mrf.mxu0
    %3822 = vdwg.mxu0
    %3823 = vmatpush.bf16.msra.mxu0 %v2751
    %3824 = vmatpush.bf16.msra.mxu0 %v2743
    %3825 = vmatpush.bf16.msra.mxu0 %v2735
    %3826 = vmatpush.bf16.msra.mxu0 %v2727
    %3827 = vmatpush.bf16.msra.mxu0 %v2719
    %3828 = vmatpush.bf16.msra.mxu0 %v2711
    %3829 = vmatpush.bf16.msra.mxu0 %v2703
    %3830 = vmatpush.bf16.msra.mxu0 %v2695
    %3831 = vmatmul.bf16.gmra.mxu0 %v493
    %v3832 = vpop.f32.mrf.mxu0
    %v3833 = vadd.f32 %v3820, %v3832
    %v3834 = vpop.f32.mrf.mxu0
    %3835 = vdwg.mxu0
    %3836 = vmatpush.bf16.msra.mxu0 %v2815
    %3837 = vmatpush.bf16.msra.mxu0 %v2807
    %3838 = vmatpush.bf16.msra.mxu0 %v2799
    %3839 = vmatpush.bf16.msra.mxu0 %v2791
    %3840 = vmatpush.bf16.msra.mxu0 %v2783
    %3841 = vmatpush.bf16.msra.mxu0 %v2775
    %3842 = vmatpush.bf16.msra.mxu0 %v2767
    %3843 = vmatpush.bf16.msra.mxu0 %v2759
    %3844 = vmatmul.bf16.gmra.mxu0 %v494
    %v3845 = vpop.f32.mrf.mxu0
    %v3846 = vadd.f32 %v3833, %v3845
    %v3847 = vpop.f32.mrf.mxu0
    %3848 = vdwg.mxu0
    %3849 = vmatpush.bf16.msra.mxu0 %v2879
    %3850 = vmatpush.bf16.msra.mxu0 %v2871
    %3851 = vmatpush.bf16.msra.mxu0 %v2863
    %3852 = vmatpush.bf16.msra.mxu0 %v2855
    %3853 = vmatpush.bf16.msra.mxu0 %v2847
    %3854 = vmatpush.bf16.msra.mxu0 %v2839
    %3855 = vmatpush.bf16.msra.mxu0 %v2831
    %3856 = vmatpush.bf16.msra.mxu0 %v2823
    %3857 = vmatmul.bf16.gmra.mxu0 %v495
    %v3858 = vpop.f32.mrf.mxu0
    %v3859 = vadd.f32 %v3846, %v3858
    %v3860 = vpop.f32.mrf.mxu0
    %3861 = vdwg.mxu0
    %3862 = vmatpush.bf16.msra.mxu0 %v2943
    %3863 = vmatpush.bf16.msra.mxu0 %v2935
    %3864 = vmatpush.bf16.msra.mxu0 %v2927
    %3865 = vmatpush.bf16.msra.mxu0 %v2919
    %3866 = vmatpush.bf16.msra.mxu0 %v2911
    %3867 = vmatpush.bf16.msra.mxu0 %v2903
    %3868 = vmatpush.bf16.msra.mxu0 %v2895
    %3869 = vmatpush.bf16.msra.mxu0 %v2887
    %3870 = vmatmul.bf16.gmra.mxu0 %v496
    %v3871 = vpop.f32.mrf.mxu0
    %v3872 = vadd.f32 %v3859, %v3871
    %v3873 = vpop.f32.mrf.mxu0
    %3874 = vdwg.mxu0
    %3875 = vmatpush.bf16.msra.mxu0 %v3007
    %3876 = vmatpush.bf16.msra.mxu0 %v2999
    %3877 = vmatpush.bf16.msra.mxu0 %v2991
    %3878 = vmatpush.bf16.msra.mxu0 %v2983
    %3879 = vmatpush.bf16.msra.mxu0 %v2975
    %3880 = vmatpush.bf16.msra.mxu0 %v2967
    %3881 = vmatpush.bf16.msra.mxu0 %v2959
    %3882 = vmatpush.bf16.msra.mxu0 %v2951
    %3883 = vmatmul.bf16.gmra.mxu0 %v497
    %v3884 = vpop.f32.mrf.mxu0
    %v3885 = vadd.f32 %v3872, %v3884
    %v3886 = vpop.f32.mrf.mxu0
    %3887 = vdwg.mxu0
    %3888 = vmatpush.bf16.msra.mxu0 %v3071
    %3889 = vmatpush.bf16.msra.mxu0 %v3063
    %3890 = vmatpush.bf16.msra.mxu0 %v3055
    %3891 = vmatpush.bf16.msra.mxu0 %v3047
    %3892 = vmatpush.bf16.msra.mxu0 %v3039
    %3893 = vmatpush.bf16.msra.mxu0 %v3031
    %3894 = vmatpush.bf16.msra.mxu0 %v3023
    %3895 = vmatpush.bf16.msra.mxu0 %v3015
    %3896 = vmatmul.bf16.gmra.mxu0 %v498
    %v3897 = vpop.f32.mrf.mxu0
    %v3898 = vadd.f32 %v3885, %v3897
    %v3899 = vpop.f32.mrf.mxu0
    %3900 = vdwg.mxu0
    %3901 = vmatpush.bf16.msra.mxu0 %v2624
    %3902 = vmatpush.bf16.msra.mxu0 %v2616
    %3903 = vmatpush.bf16.msra.mxu0 %v2608
    %3904 = vmatpush.bf16.msra.mxu0 %v2600
    %3905 = vmatpush.bf16.msra.mxu0 %v2592
    %3906 = vmatpush.bf16.msra.mxu0 %v2584
    %3907 = vmatpush.bf16.msra.mxu0 %v2576
    %3908 = vmatpush.bf16.msra.mxu0 %v2568
    %3909 = vmatmul.bf16.gmra.mxu0 %v491
    %v3910 = vpop.f32.mrf.mxu0
    %v3911 = vadd.f32 %v1016, %v3910
    %v3912 = vpop.f32.mrf.mxu0
    %3913 = vdwg.mxu0
    %3914 = vmatpush.bf16.msra.mxu0 %v2688
    %3915 = vmatpush.bf16.msra.mxu0 %v2680
    %3916 = vmatpush.bf16.msra.mxu0 %v2672
    %3917 = vmatpush.bf16.msra.mxu0 %v2664
    %3918 = vmatpush.bf16.msra.mxu0 %v2656
    %3919 = vmatpush.bf16.msra.mxu0 %v2648
    %3920 = vmatpush.bf16.msra.mxu0 %v2640
    %3921 = vmatpush.bf16.msra.mxu0 %v2632
    %3922 = vmatmul.bf16.gmra.mxu0 %v492
    %v3923 = vpop.f32.mrf.mxu0
    %v3924 = vadd.f32 %v3911, %v3923
    %v3925 = vpop.f32.mrf.mxu0
    %3926 = vdwg.mxu0
    %3927 = vmatpush.bf16.msra.mxu0 %v2752
    %3928 = vmatpush.bf16.msra.mxu0 %v2744
    %3929 = vmatpush.bf16.msra.mxu0 %v2736
    %3930 = vmatpush.bf16.msra.mxu0 %v2728
    %3931 = vmatpush.bf16.msra.mxu0 %v2720
    %3932 = vmatpush.bf16.msra.mxu0 %v2712
    %3933 = vmatpush.bf16.msra.mxu0 %v2704
    %3934 = vmatpush.bf16.msra.mxu0 %v2696
    %3935 = vmatmul.bf16.gmra.mxu0 %v493
    %v3936 = vpop.f32.mrf.mxu0
    %v3937 = vadd.f32 %v3924, %v3936
    %v3938 = vpop.f32.mrf.mxu0
    %3939 = vdwg.mxu0
    %3940 = vmatpush.bf16.msra.mxu0 %v2816
    %3941 = vmatpush.bf16.msra.mxu0 %v2808
    %3942 = vmatpush.bf16.msra.mxu0 %v2800
    %3943 = vmatpush.bf16.msra.mxu0 %v2792
    %3944 = vmatpush.bf16.msra.mxu0 %v2784
    %3945 = vmatpush.bf16.msra.mxu0 %v2776
    %3946 = vmatpush.bf16.msra.mxu0 %v2768
    %3947 = vmatpush.bf16.msra.mxu0 %v2760
    %3948 = vmatmul.bf16.gmra.mxu0 %v494
    %v3949 = vpop.f32.mrf.mxu0
    %v3950 = vadd.f32 %v3937, %v3949
    %v3951 = vpop.f32.mrf.mxu0
    %3952 = vdwg.mxu0
    %3953 = vmatpush.bf16.msra.mxu0 %v2880
    %3954 = vmatpush.bf16.msra.mxu0 %v2872
    %3955 = vmatpush.bf16.msra.mxu0 %v2864
    %3956 = vmatpush.bf16.msra.mxu0 %v2856
    %3957 = vmatpush.bf16.msra.mxu0 %v2848
    %3958 = vmatpush.bf16.msra.mxu0 %v2840
    %3959 = vmatpush.bf16.msra.mxu0 %v2832
    %3960 = vmatpush.bf16.msra.mxu0 %v2824
    %3961 = vmatmul.bf16.gmra.mxu0 %v495
    %v3962 = vpop.f32.mrf.mxu0
    %v3963 = vadd.f32 %v3950, %v3962
    %v3964 = vpop.f32.mrf.mxu0
    %3965 = vdwg.mxu0
    %3966 = vmatpush.bf16.msra.mxu0 %v2944
    %3967 = vmatpush.bf16.msra.mxu0 %v2936
    %3968 = vmatpush.bf16.msra.mxu0 %v2928
    %3969 = vmatpush.bf16.msra.mxu0 %v2920
    %3970 = vmatpush.bf16.msra.mxu0 %v2912
    %3971 = vmatpush.bf16.msra.mxu0 %v2904
    %3972 = vmatpush.bf16.msra.mxu0 %v2896
    %3973 = vmatpush.bf16.msra.mxu0 %v2888
    %3974 = vmatmul.bf16.gmra.mxu0 %v496
    %v3975 = vpop.f32.mrf.mxu0
    %v3976 = vadd.f32 %v3963, %v3975
    %v3977 = vpop.f32.mrf.mxu0
    %3978 = vdwg.mxu0
    %3979 = vmatpush.bf16.msra.mxu0 %v3008
    %3980 = vmatpush.bf16.msra.mxu0 %v3000
    %3981 = vmatpush.bf16.msra.mxu0 %v2992
    %3982 = vmatpush.bf16.msra.mxu0 %v2984
    %3983 = vmatpush.bf16.msra.mxu0 %v2976
    %3984 = vmatpush.bf16.msra.mxu0 %v2968
    %3985 = vmatpush.bf16.msra.mxu0 %v2960
    %3986 = vmatpush.bf16.msra.mxu0 %v2952
    %3987 = vmatmul.bf16.gmra.mxu0 %v497
    %v3988 = vpop.f32.mrf.mxu0
    %v3989 = vadd.f32 %v3976, %v3988
    %v3990 = vpop.f32.mrf.mxu0
    %3991 = vdwg.mxu0
    %3992 = vmatpush.bf16.msra.mxu0 %v3072
    %3993 = vmatpush.bf16.msra.mxu0 %v3064
    %3994 = vmatpush.bf16.msra.mxu0 %v3056
    %3995 = vmatpush.bf16.msra.mxu0 %v3048
    %3996 = vmatpush.bf16.msra.mxu0 %v3040
    %3997 = vmatpush.bf16.msra.mxu0 %v3032
    %3998 = vmatpush.bf16.msra.mxu0 %v3024
    %3999 = vmatpush.bf16.msra.mxu0 %v3016
    %4000 = vmatmul.bf16.gmra.mxu0 %v498
    %v4001 = vpop.f32.mrf.mxu0
    %v4002 = vadd.f32 %v3989, %v4001
    %v4003 = vpop.f32.mrf.mxu0
    %4004 = vdwg.mxu0
    %4005 = vmatpush.bf16.msra.mxu0 %v2625
    %4006 = vmatpush.bf16.msra.mxu0 %v2617
    %4007 = vmatpush.bf16.msra.mxu0 %v2609
    %4008 = vmatpush.bf16.msra.mxu0 %v2601
    %4009 = vmatpush.bf16.msra.mxu0 %v2593
    %4010 = vmatpush.bf16.msra.mxu0 %v2585
    %4011 = vmatpush.bf16.msra.mxu0 %v2577
    %4012 = vmatpush.bf16.msra.mxu0 %v2569
    %4013 = vmatmul.bf16.gmra.mxu0 %v491
    %v4014 = vpop.f32.mrf.mxu0
    %v4015 = vadd.f32 %v1017, %v4014
    %v4016 = vpop.f32.mrf.mxu0
    %4017 = vdwg.mxu0
    %4018 = vmatpush.bf16.msra.mxu0 %v2689
    %4019 = vmatpush.bf16.msra.mxu0 %v2681
    %4020 = vmatpush.bf16.msra.mxu0 %v2673
    %4021 = vmatpush.bf16.msra.mxu0 %v2665
    %4022 = vmatpush.bf16.msra.mxu0 %v2657
    %4023 = vmatpush.bf16.msra.mxu0 %v2649
    %4024 = vmatpush.bf16.msra.mxu0 %v2641
    %4025 = vmatpush.bf16.msra.mxu0 %v2633
    %4026 = vmatmul.bf16.gmra.mxu0 %v492
    %v4027 = vpop.f32.mrf.mxu0
    %v4028 = vadd.f32 %v4015, %v4027
    %v4029 = vpop.f32.mrf.mxu0
    %4030 = vdwg.mxu0
    %4031 = vmatpush.bf16.msra.mxu0 %v2753
    %4032 = vmatpush.bf16.msra.mxu0 %v2745
    %4033 = vmatpush.bf16.msra.mxu0 %v2737
    %4034 = vmatpush.bf16.msra.mxu0 %v2729
    %4035 = vmatpush.bf16.msra.mxu0 %v2721
    %4036 = vmatpush.bf16.msra.mxu0 %v2713
    %4037 = vmatpush.bf16.msra.mxu0 %v2705
    %4038 = vmatpush.bf16.msra.mxu0 %v2697
    %4039 = vmatmul.bf16.gmra.mxu0 %v493
    %v4040 = vpop.f32.mrf.mxu0
    %v4041 = vadd.f32 %v4028, %v4040
    %v4042 = vpop.f32.mrf.mxu0
    %4043 = vdwg.mxu0
    %4044 = vmatpush.bf16.msra.mxu0 %v2817
    %4045 = vmatpush.bf16.msra.mxu0 %v2809
    %4046 = vmatpush.bf16.msra.mxu0 %v2801
    %4047 = vmatpush.bf16.msra.mxu0 %v2793
    %4048 = vmatpush.bf16.msra.mxu0 %v2785
    %4049 = vmatpush.bf16.msra.mxu0 %v2777
    %4050 = vmatpush.bf16.msra.mxu0 %v2769
    %4051 = vmatpush.bf16.msra.mxu0 %v2761
    %4052 = vmatmul.bf16.gmra.mxu0 %v494
    %v4053 = vpop.f32.mrf.mxu0
    %v4054 = vadd.f32 %v4041, %v4053
    %v4055 = vpop.f32.mrf.mxu0
    %4056 = vdwg.mxu0
    %4057 = vmatpush.bf16.msra.mxu0 %v2881
    %4058 = vmatpush.bf16.msra.mxu0 %v2873
    %4059 = vmatpush.bf16.msra.mxu0 %v2865
    %4060 = vmatpush.bf16.msra.mxu0 %v2857
    %4061 = vmatpush.bf16.msra.mxu0 %v2849
    %4062 = vmatpush.bf16.msra.mxu0 %v2841
    %4063 = vmatpush.bf16.msra.mxu0 %v2833
    %4064 = vmatpush.bf16.msra.mxu0 %v2825
    %4065 = vmatmul.bf16.gmra.mxu0 %v495
    %v4066 = vpop.f32.mrf.mxu0
    %v4067 = vadd.f32 %v4054, %v4066
    %v4068 = vpop.f32.mrf.mxu0
    %4069 = vdwg.mxu0
    %4070 = vmatpush.bf16.msra.mxu0 %v2945
    %4071 = vmatpush.bf16.msra.mxu0 %v2937
    %4072 = vmatpush.bf16.msra.mxu0 %v2929
    %4073 = vmatpush.bf16.msra.mxu0 %v2921
    %4074 = vmatpush.bf16.msra.mxu0 %v2913
    %4075 = vmatpush.bf16.msra.mxu0 %v2905
    %4076 = vmatpush.bf16.msra.mxu0 %v2897
    %4077 = vmatpush.bf16.msra.mxu0 %v2889
    %4078 = vmatmul.bf16.gmra.mxu0 %v496
    %v4079 = vpop.f32.mrf.mxu0
    %v4080 = vadd.f32 %v4067, %v4079
    %v4081 = vpop.f32.mrf.mxu0
    %4082 = vdwg.mxu0
    %4083 = vmatpush.bf16.msra.mxu0 %v3009
    %4084 = vmatpush.bf16.msra.mxu0 %v3001
    %4085 = vmatpush.bf16.msra.mxu0 %v2993
    %4086 = vmatpush.bf16.msra.mxu0 %v2985
    %4087 = vmatpush.bf16.msra.mxu0 %v2977
    %4088 = vmatpush.bf16.msra.mxu0 %v2969
    %4089 = vmatpush.bf16.msra.mxu0 %v2961
    %4090 = vmatpush.bf16.msra.mxu0 %v2953
    %4091 = vmatmul.bf16.gmra.mxu0 %v497
    %v4092 = vpop.f32.mrf.mxu0
    %v4093 = vadd.f32 %v4080, %v4092
    %v4094 = vpop.f32.mrf.mxu0
    %4095 = vdwg.mxu0
    %4096 = vmatpush.bf16.msra.mxu0 %v3073
    %4097 = vmatpush.bf16.msra.mxu0 %v3065
    %4098 = vmatpush.bf16.msra.mxu0 %v3057
    %4099 = vmatpush.bf16.msra.mxu0 %v3049
    %4100 = vmatpush.bf16.msra.mxu0 %v3041
    %4101 = vmatpush.bf16.msra.mxu0 %v3033
    %4102 = vmatpush.bf16.msra.mxu0 %v3025
    %4103 = vmatpush.bf16.msra.mxu0 %v3017
    %4104 = vmatmul.bf16.gmra.mxu0 %v498
    %v4105 = vpop.f32.mrf.mxu0
    %v4106 = vadd.f32 %v4093, %v4105
    %v4107 = vpop.f32.mrf.mxu0
    %4108 = vdwg.mxu0
    %4109 = vmatpush.bf16.msra.mxu0 %v2626
    %4110 = vmatpush.bf16.msra.mxu0 %v2618
    %4111 = vmatpush.bf16.msra.mxu0 %v2610
    %4112 = vmatpush.bf16.msra.mxu0 %v2602
    %4113 = vmatpush.bf16.msra.mxu0 %v2594
    %4114 = vmatpush.bf16.msra.mxu0 %v2586
    %4115 = vmatpush.bf16.msra.mxu0 %v2578
    %4116 = vmatpush.bf16.msra.mxu0 %v2570
    %4117 = vmatmul.bf16.gmra.mxu0 %v491
    %v4118 = vpop.f32.mrf.mxu0
    %v4119 = vadd.f32 %v1018, %v4118
    %v4120 = vpop.f32.mrf.mxu0
    %4121 = vdwg.mxu0
    %4122 = vmatpush.bf16.msra.mxu0 %v2690
    %4123 = vmatpush.bf16.msra.mxu0 %v2682
    %4124 = vmatpush.bf16.msra.mxu0 %v2674
    %4125 = vmatpush.bf16.msra.mxu0 %v2666
    %4126 = vmatpush.bf16.msra.mxu0 %v2658
    %4127 = vmatpush.bf16.msra.mxu0 %v2650
    %4128 = vmatpush.bf16.msra.mxu0 %v2642
    %4129 = vmatpush.bf16.msra.mxu0 %v2634
    %4130 = vmatmul.bf16.gmra.mxu0 %v492
    %v4131 = vpop.f32.mrf.mxu0
    %v4132 = vadd.f32 %v4119, %v4131
    %v4133 = vpop.f32.mrf.mxu0
    %4134 = vdwg.mxu0
    %4135 = vmatpush.bf16.msra.mxu0 %v2754
    %4136 = vmatpush.bf16.msra.mxu0 %v2746
    %4137 = vmatpush.bf16.msra.mxu0 %v2738
    %4138 = vmatpush.bf16.msra.mxu0 %v2730
    %4139 = vmatpush.bf16.msra.mxu0 %v2722
    %4140 = vmatpush.bf16.msra.mxu0 %v2714
    %4141 = vmatpush.bf16.msra.mxu0 %v2706
    %4142 = vmatpush.bf16.msra.mxu0 %v2698
    %4143 = vmatmul.bf16.gmra.mxu0 %v493
    %v4144 = vpop.f32.mrf.mxu0
    %v4145 = vadd.f32 %v4132, %v4144
    %v4146 = vpop.f32.mrf.mxu0
    %4147 = vdwg.mxu0
    %4148 = vmatpush.bf16.msra.mxu0 %v2818
    %4149 = vmatpush.bf16.msra.mxu0 %v2810
    %4150 = vmatpush.bf16.msra.mxu0 %v2802
    %4151 = vmatpush.bf16.msra.mxu0 %v2794
    %4152 = vmatpush.bf16.msra.mxu0 %v2786
    %4153 = vmatpush.bf16.msra.mxu0 %v2778
    %4154 = vmatpush.bf16.msra.mxu0 %v2770
    %4155 = vmatpush.bf16.msra.mxu0 %v2762
    %4156 = vmatmul.bf16.gmra.mxu0 %v494
    %v4157 = vpop.f32.mrf.mxu0
    %v4158 = vadd.f32 %v4145, %v4157
    %v4159 = vpop.f32.mrf.mxu0
    %4160 = vdwg.mxu0
    %4161 = vmatpush.bf16.msra.mxu0 %v2882
    %4162 = vmatpush.bf16.msra.mxu0 %v2874
    %4163 = vmatpush.bf16.msra.mxu0 %v2866
    %4164 = vmatpush.bf16.msra.mxu0 %v2858
    %4165 = vmatpush.bf16.msra.mxu0 %v2850
    %4166 = vmatpush.bf16.msra.mxu0 %v2842
    %4167 = vmatpush.bf16.msra.mxu0 %v2834
    %4168 = vmatpush.bf16.msra.mxu0 %v2826
    %4169 = vmatmul.bf16.gmra.mxu0 %v495
    %v4170 = vpop.f32.mrf.mxu0
    %v4171 = vadd.f32 %v4158, %v4170
    %v4172 = vpop.f32.mrf.mxu0
    %4173 = vdwg.mxu0
    %4174 = vmatpush.bf16.msra.mxu0 %v2946
    %4175 = vmatpush.bf16.msra.mxu0 %v2938
    %4176 = vmatpush.bf16.msra.mxu0 %v2930
    %4177 = vmatpush.bf16.msra.mxu0 %v2922
    %4178 = vmatpush.bf16.msra.mxu0 %v2914
    %4179 = vmatpush.bf16.msra.mxu0 %v2906
    %4180 = vmatpush.bf16.msra.mxu0 %v2898
    %4181 = vmatpush.bf16.msra.mxu0 %v2890
    %4182 = vmatmul.bf16.gmra.mxu0 %v496
    %v4183 = vpop.f32.mrf.mxu0
    %v4184 = vadd.f32 %v4171, %v4183
    %v4185 = vpop.f32.mrf.mxu0
    %4186 = vdwg.mxu0
    %4187 = vmatpush.bf16.msra.mxu0 %v3010
    %4188 = vmatpush.bf16.msra.mxu0 %v3002
    %4189 = vmatpush.bf16.msra.mxu0 %v2994
    %4190 = vmatpush.bf16.msra.mxu0 %v2986
    %4191 = vmatpush.bf16.msra.mxu0 %v2978
    %4192 = vmatpush.bf16.msra.mxu0 %v2970
    %4193 = vmatpush.bf16.msra.mxu0 %v2962
    %4194 = vmatpush.bf16.msra.mxu0 %v2954
    %4195 = vmatmul.bf16.gmra.mxu0 %v497
    %v4196 = vpop.f32.mrf.mxu0
    %v4197 = vadd.f32 %v4184, %v4196
    %v4198 = vpop.f32.mrf.mxu0
    %4199 = vdwg.mxu0
    %4200 = vmatpush.bf16.msra.mxu0 %v3074
    %4201 = vmatpush.bf16.msra.mxu0 %v3066
    %4202 = vmatpush.bf16.msra.mxu0 %v3058
    %4203 = vmatpush.bf16.msra.mxu0 %v3050
    %4204 = vmatpush.bf16.msra.mxu0 %v3042
    %4205 = vmatpush.bf16.msra.mxu0 %v3034
    %4206 = vmatpush.bf16.msra.mxu0 %v3026
    %4207 = vmatpush.bf16.msra.mxu0 %v3018
    %4208 = vmatmul.bf16.gmra.mxu0 %v498
    %v4209 = vpop.f32.mrf.mxu0
    %v4210 = vadd.f32 %v4197, %v4209
    %v4211 = vpop.f32.mrf.mxu0
    %4212 = vdwg.mxu0
    %4213 = vmatpush.bf16.msra.mxu0 %v2627
    %4214 = vmatpush.bf16.msra.mxu0 %v2619
    %4215 = vmatpush.bf16.msra.mxu0 %v2611
    %4216 = vmatpush.bf16.msra.mxu0 %v2603
    %4217 = vmatpush.bf16.msra.mxu0 %v2595
    %4218 = vmatpush.bf16.msra.mxu0 %v2587
    %4219 = vmatpush.bf16.msra.mxu0 %v2579
    %4220 = vmatpush.bf16.msra.mxu0 %v2571
    %4221 = vmatmul.bf16.gmra.mxu0 %v491
    %v4222 = vpop.f32.mrf.mxu0
    %v4223 = vadd.f32 %v1019, %v4222
    %v4224 = vpop.f32.mrf.mxu0
    %4225 = vdwg.mxu0
    %4226 = vmatpush.bf16.msra.mxu0 %v2691
    %4227 = vmatpush.bf16.msra.mxu0 %v2683
    %4228 = vmatpush.bf16.msra.mxu0 %v2675
    %4229 = vmatpush.bf16.msra.mxu0 %v2667
    %4230 = vmatpush.bf16.msra.mxu0 %v2659
    %4231 = vmatpush.bf16.msra.mxu0 %v2651
    %4232 = vmatpush.bf16.msra.mxu0 %v2643
    %4233 = vmatpush.bf16.msra.mxu0 %v2635
    %4234 = vmatmul.bf16.gmra.mxu0 %v492
    %v4235 = vpop.f32.mrf.mxu0
    %v4236 = vadd.f32 %v4223, %v4235
    %v4237 = vpop.f32.mrf.mxu0
    %4238 = vdwg.mxu0
    %4239 = vmatpush.bf16.msra.mxu0 %v2755
    %4240 = vmatpush.bf16.msra.mxu0 %v2747
    %4241 = vmatpush.bf16.msra.mxu0 %v2739
    %4242 = vmatpush.bf16.msra.mxu0 %v2731
    %4243 = vmatpush.bf16.msra.mxu0 %v2723
    %4244 = vmatpush.bf16.msra.mxu0 %v2715
    %4245 = vmatpush.bf16.msra.mxu0 %v2707
    %4246 = vmatpush.bf16.msra.mxu0 %v2699
    %4247 = vmatmul.bf16.gmra.mxu0 %v493
    %v4248 = vpop.f32.mrf.mxu0
    %v4249 = vadd.f32 %v4236, %v4248
    %v4250 = vpop.f32.mrf.mxu0
    %4251 = vdwg.mxu0
    %4252 = vmatpush.bf16.msra.mxu0 %v2819
    %4253 = vmatpush.bf16.msra.mxu0 %v2811
    %4254 = vmatpush.bf16.msra.mxu0 %v2803
    %4255 = vmatpush.bf16.msra.mxu0 %v2795
    %4256 = vmatpush.bf16.msra.mxu0 %v2787
    %4257 = vmatpush.bf16.msra.mxu0 %v2779
    %4258 = vmatpush.bf16.msra.mxu0 %v2771
    %4259 = vmatpush.bf16.msra.mxu0 %v2763
    %4260 = vmatmul.bf16.gmra.mxu0 %v494
    %v4261 = vpop.f32.mrf.mxu0
    %v4262 = vadd.f32 %v4249, %v4261
    %v4263 = vpop.f32.mrf.mxu0
    %4264 = vdwg.mxu0
    %4265 = vmatpush.bf16.msra.mxu0 %v2883
    %4266 = vmatpush.bf16.msra.mxu0 %v2875
    %4267 = vmatpush.bf16.msra.mxu0 %v2867
    %4268 = vmatpush.bf16.msra.mxu0 %v2859
    %4269 = vmatpush.bf16.msra.mxu0 %v2851
    %4270 = vmatpush.bf16.msra.mxu0 %v2843
    %4271 = vmatpush.bf16.msra.mxu0 %v2835
    %4272 = vmatpush.bf16.msra.mxu0 %v2827
    %4273 = vmatmul.bf16.gmra.mxu0 %v495
    %v4274 = vpop.f32.mrf.mxu0
    %v4275 = vadd.f32 %v4262, %v4274
    %v4276 = vpop.f32.mrf.mxu0
    %4277 = vdwg.mxu0
    %4278 = vmatpush.bf16.msra.mxu0 %v2947
    %4279 = vmatpush.bf16.msra.mxu0 %v2939
    %4280 = vmatpush.bf16.msra.mxu0 %v2931
    %4281 = vmatpush.bf16.msra.mxu0 %v2923
    %4282 = vmatpush.bf16.msra.mxu0 %v2915
    %4283 = vmatpush.bf16.msra.mxu0 %v2907
    %4284 = vmatpush.bf16.msra.mxu0 %v2899
    %4285 = vmatpush.bf16.msra.mxu0 %v2891
    %4286 = vmatmul.bf16.gmra.mxu0 %v496
    %v4287 = vpop.f32.mrf.mxu0
    %v4288 = vadd.f32 %v4275, %v4287
    %v4289 = vpop.f32.mrf.mxu0
    %4290 = vdwg.mxu0
    %4291 = vmatpush.bf16.msra.mxu0 %v3011
    %4292 = vmatpush.bf16.msra.mxu0 %v3003
    %4293 = vmatpush.bf16.msra.mxu0 %v2995
    %4294 = vmatpush.bf16.msra.mxu0 %v2987
    %4295 = vmatpush.bf16.msra.mxu0 %v2979
    %4296 = vmatpush.bf16.msra.mxu0 %v2971
    %4297 = vmatpush.bf16.msra.mxu0 %v2963
    %4298 = vmatpush.bf16.msra.mxu0 %v2955
    %4299 = vmatmul.bf16.gmra.mxu0 %v497
    %v4300 = vpop.f32.mrf.mxu0
    %v4301 = vadd.f32 %v4288, %v4300
    %v4302 = vpop.f32.mrf.mxu0
    %4303 = vdwg.mxu0
    %4304 = vmatpush.bf16.msra.mxu0 %v3075
    %4305 = vmatpush.bf16.msra.mxu0 %v3067
    %4306 = vmatpush.bf16.msra.mxu0 %v3059
    %4307 = vmatpush.bf16.msra.mxu0 %v3051
    %4308 = vmatpush.bf16.msra.mxu0 %v3043
    %4309 = vmatpush.bf16.msra.mxu0 %v3035
    %4310 = vmatpush.bf16.msra.mxu0 %v3027
    %4311 = vmatpush.bf16.msra.mxu0 %v3019
    %4312 = vmatmul.bf16.gmra.mxu0 %v498
    %v4313 = vpop.f32.mrf.mxu0
    %v4314 = vadd.f32 %v4301, %v4313
    %v4315 = vpop.f32.mrf.mxu0
    %4316 = vdwg.mxu0
    %4317 = vmatpush.bf16.msra.mxu0 %v2628
    %4318 = vmatpush.bf16.msra.mxu0 %v2620
    %4319 = vmatpush.bf16.msra.mxu0 %v2612
    %4320 = vmatpush.bf16.msra.mxu0 %v2604
    %4321 = vmatpush.bf16.msra.mxu0 %v2596
    %4322 = vmatpush.bf16.msra.mxu0 %v2588
    %4323 = vmatpush.bf16.msra.mxu0 %v2580
    %4324 = vmatpush.bf16.msra.mxu0 %v2572
    %4325 = vmatmul.bf16.gmra.mxu0 %v491
    %v4326 = vpop.f32.mrf.mxu0
    %v4327 = vadd.f32 %v1020, %v4326
    %v4328 = vpop.f32.mrf.mxu0
    %4329 = vdwg.mxu0
    %4330 = vmatpush.bf16.msra.mxu0 %v2692
    %4331 = vmatpush.bf16.msra.mxu0 %v2684
    %4332 = vmatpush.bf16.msra.mxu0 %v2676
    %4333 = vmatpush.bf16.msra.mxu0 %v2668
    %4334 = vmatpush.bf16.msra.mxu0 %v2660
    %4335 = vmatpush.bf16.msra.mxu0 %v2652
    %4336 = vmatpush.bf16.msra.mxu0 %v2644
    %4337 = vmatpush.bf16.msra.mxu0 %v2636
    %4338 = vmatmul.bf16.gmra.mxu0 %v492
    %v4339 = vpop.f32.mrf.mxu0
    %v4340 = vadd.f32 %v4327, %v4339
    %v4341 = vpop.f32.mrf.mxu0
    %4342 = vdwg.mxu0
    %4343 = vmatpush.bf16.msra.mxu0 %v2756
    %4344 = vmatpush.bf16.msra.mxu0 %v2748
    %4345 = vmatpush.bf16.msra.mxu0 %v2740
    %4346 = vmatpush.bf16.msra.mxu0 %v2732
    %4347 = vmatpush.bf16.msra.mxu0 %v2724
    %4348 = vmatpush.bf16.msra.mxu0 %v2716
    %4349 = vmatpush.bf16.msra.mxu0 %v2708
    %4350 = vmatpush.bf16.msra.mxu0 %v2700
    %4351 = vmatmul.bf16.gmra.mxu0 %v493
    %v4352 = vpop.f32.mrf.mxu0
    %v4353 = vadd.f32 %v4340, %v4352
    %v4354 = vpop.f32.mrf.mxu0
    %4355 = vdwg.mxu0
    %4356 = vmatpush.bf16.msra.mxu0 %v2820
    %4357 = vmatpush.bf16.msra.mxu0 %v2812
    %4358 = vmatpush.bf16.msra.mxu0 %v2804
    %4359 = vmatpush.bf16.msra.mxu0 %v2796
    %4360 = vmatpush.bf16.msra.mxu0 %v2788
    %4361 = vmatpush.bf16.msra.mxu0 %v2780
    %4362 = vmatpush.bf16.msra.mxu0 %v2772
    %4363 = vmatpush.bf16.msra.mxu0 %v2764
    %4364 = vmatmul.bf16.gmra.mxu0 %v494
    %v4365 = vpop.f32.mrf.mxu0
    %v4366 = vadd.f32 %v4353, %v4365
    %v4367 = vpop.f32.mrf.mxu0
    %4368 = vdwg.mxu0
    %4369 = vmatpush.bf16.msra.mxu0 %v2884
    %4370 = vmatpush.bf16.msra.mxu0 %v2876
    %4371 = vmatpush.bf16.msra.mxu0 %v2868
    %4372 = vmatpush.bf16.msra.mxu0 %v2860
    %4373 = vmatpush.bf16.msra.mxu0 %v2852
    %4374 = vmatpush.bf16.msra.mxu0 %v2844
    %4375 = vmatpush.bf16.msra.mxu0 %v2836
    %4376 = vmatpush.bf16.msra.mxu0 %v2828
    %4377 = vmatmul.bf16.gmra.mxu0 %v495
    %v4378 = vpop.f32.mrf.mxu0
    %v4379 = vadd.f32 %v4366, %v4378
    %v4380 = vpop.f32.mrf.mxu0
    %4381 = vdwg.mxu0
    %4382 = vmatpush.bf16.msra.mxu0 %v2948
    %4383 = vmatpush.bf16.msra.mxu0 %v2940
    %4384 = vmatpush.bf16.msra.mxu0 %v2932
    %4385 = vmatpush.bf16.msra.mxu0 %v2924
    %4386 = vmatpush.bf16.msra.mxu0 %v2916
    %4387 = vmatpush.bf16.msra.mxu0 %v2908
    %4388 = vmatpush.bf16.msra.mxu0 %v2900
    %4389 = vmatpush.bf16.msra.mxu0 %v2892
    %4390 = vmatmul.bf16.gmra.mxu0 %v496
    %v4391 = vpop.f32.mrf.mxu0
    %v4392 = vadd.f32 %v4379, %v4391
    %v4393 = vpop.f32.mrf.mxu0
    %4394 = vdwg.mxu0
    %4395 = vmatpush.bf16.msra.mxu0 %v3012
    %4396 = vmatpush.bf16.msra.mxu0 %v3004
    %4397 = vmatpush.bf16.msra.mxu0 %v2996
    %4398 = vmatpush.bf16.msra.mxu0 %v2988
    %4399 = vmatpush.bf16.msra.mxu0 %v2980
    %4400 = vmatpush.bf16.msra.mxu0 %v2972
    %4401 = vmatpush.bf16.msra.mxu0 %v2964
    %4402 = vmatpush.bf16.msra.mxu0 %v2956
    %4403 = vmatmul.bf16.gmra.mxu0 %v497
    %v4404 = vpop.f32.mrf.mxu0
    %v4405 = vadd.f32 %v4392, %v4404
    %v4406 = vpop.f32.mrf.mxu0
    %4407 = vdwg.mxu0
    %4408 = vmatpush.bf16.msra.mxu0 %v3076
    %4409 = vmatpush.bf16.msra.mxu0 %v3068
    %4410 = vmatpush.bf16.msra.mxu0 %v3060
    %4411 = vmatpush.bf16.msra.mxu0 %v3052
    %4412 = vmatpush.bf16.msra.mxu0 %v3044
    %4413 = vmatpush.bf16.msra.mxu0 %v3036
    %4414 = vmatpush.bf16.msra.mxu0 %v3028
    %4415 = vmatpush.bf16.msra.mxu0 %v3020
    %4416 = vmatmul.bf16.gmra.mxu0 %v498
    %v4417 = vpop.f32.mrf.mxu0
    %v4418 = vadd.f32 %v4405, %v4417
    %v4419 = vpop.f32.mrf.mxu0
    %4420 = vdwg.mxu0
    %v4421 = vmul.f32 %v3690, 0.01
    %v4422 = vmul.f32 %v3794, 0.01
    %v4423 = vmul.f32 %v3898, 0.01
    %v4424 = vmul.f32 %v4002, 0.01
    %v4425 = vmul.f32 %v4106, 0.01
    %v4426 = vmul.f32 %v4210, 0.01
    %v4427 = vmul.f32 %v4314, 0.01
    %v4428 = vmul.f32 %v4418, 0.01
    %v4429 = vmax.f32 %v3690, %v4421
    %v4430 = vmax.f32 %v3794, %v4422
    %v4431 = vmax.f32 %v3898, %v4423
    %v4432 = vmax.f32 %v4002, %v4424
    %v4433 = vmax.f32 %v4106, %v4425
    %v4434 = vmax.f32 %v4210, %v4426
    %v4435 = vmax.f32 %v4314, %v4427
    %v4436 = vmax.f32 %v4418, %v4428
    %v4437 = vpack.c.bf16 %v4429, %v4429
    %v4438 = vpack.c.bf16 %v4430, %v4430
    %v4439 = vpack.c.bf16 %v4431, %v4431
    %v4440 = vpack.c.bf16 %v4432, %v4432
    %v4441 = vpack.c.bf16 %v4433, %v4433
    %v4442 = vpack.c.bf16 %v4434, %v4434
    %v4443 = vpack.c.bf16 %v4435, %v4435
    %v4444 = vpack.c.bf16 %v4436, %v4436
    %v4445 = vld [vmem:[#allocation13] sm:$0xf]
    %v4446 = vld [vmem:[#allocation13 + $0x4] sm:$0xf]
    %v4447 = vld [vmem:[#allocation13 + $0x8] sm:$0xf]
    %v4448 = vld [vmem:[#allocation13 + $0xc] sm:$0xf]
    %v4449 = vld [vmem:[#allocation13 + $0x10] sm:$0xf]
    %v4450 = vld [vmem:[#allocation13 + $0x14] sm:$0xf]
    %v4451 = vld [vmem:[#allocation13 + $0x18] sm:$0xf]
    %v4452 = vld [vmem:[#allocation13 + $0x1c] sm:$0xf]
    %v4453 = vld [vmem:[#allocation13 + $0x20] sm:$0xf]
    %v4454 = vld [vmem:[#allocation13 + $0x24] sm:$0xf]
    %v4455 = vld [vmem:[#allocation13 + $0x28] sm:$0xf]
    %v4456 = vld [vmem:[#allocation13 + $0x2c] sm:$0xf]
    %v4457 = vld [vmem:[#allocation13 + $0x30] sm:$0xf]
    %v4458 = vld [vmem:[#allocation13 + $0x34] sm:$0xf]
    %v4459 = vld [vmem:[#allocation13 + $0x38] sm:$0xf]
    %v4460 = vld [vmem:[#allocation13 + $0x3c] sm:$0xf]
    %v4461 = vld [vmem:[#allocation13 + $0x40] sm:$0xf]
    %v4462 = vld [vmem:[#allocation13 + $0x44] sm:$0xf]
    %v4463 = vld [vmem:[#allocation13 + $0x48] sm:$0xf]
    %v4464 = vld [vmem:[#allocation13 + $0x4c] sm:$0xf]
    %v4465 = vld [vmem:[#allocation13 + $0x50] sm:$0xf]
    %v4466 = vld [vmem:[#allocation13 + $0x54] sm:$0xf]
    %v4467 = vld [vmem:[#allocation13 + $0x58] sm:$0xf]
    %v4468 = vld [vmem:[#allocation13 + $0x5c] sm:$0xf]
    %v4469 = vld [vmem:[#allocation13 + $0x60] sm:$0xf]
    %v4470 = vld [vmem:[#allocation13 + $0x64] sm:$0xf]
    %v4471 = vld [vmem:[#allocation13 + $0x68] sm:$0xf]
    %v4472 = vld [vmem:[#allocation13 + $0x6c] sm:$0xf]
    %v4473 = vld [vmem:[#allocation13 + $0x70] sm:$0xf]
    %v4474 = vld [vmem:[#allocation13 + $0x74] sm:$0xf]
    %v4475 = vld [vmem:[#allocation13 + $0x78] sm:$0xf]
    %v4476 = vld [vmem:[#allocation13 + $0x7c] sm:$0xf]
    %v4477 = vld [vmem:[#allocation13 + $0x80] sm:$0xf]
    %v4478 = vld [vmem:[#allocation13 + $0x84] sm:$0xf]
    %v4479 = vld [vmem:[#allocation13 + $0x88] sm:$0xf]
    %v4480 = vld [vmem:[#allocation13 + $0x8c] sm:$0xf]
    %v4481 = vld [vmem:[#allocation13 + $0x90] sm:$0xf]
    %v4482 = vld [vmem:[#allocation13 + $0x94] sm:$0xf]
    %v4483 = vld [vmem:[#allocation13 + $0x98] sm:$0xf]
    %v4484 = vld [vmem:[#allocation13 + $0x9c] sm:$0xf]
    %v4485 = vld [vmem:[#allocation13 + $0xa0] sm:$0xf]
    %v4486 = vld [vmem:[#allocation13 + $0xa4] sm:$0xf]
    %v4487 = vld [vmem:[#allocation13 + $0xa8] sm:$0xf]
    %v4488 = vld [vmem:[#allocation13 + $0xac] sm:$0xf]
    %v4489 = vld [vmem:[#allocation13 + $0xb0] sm:$0xf]
    %v4490 = vld [vmem:[#allocation13 + $0xb4] sm:$0xf]
    %v4491 = vld [vmem:[#allocation13 + $0xb8] sm:$0xf]
    %v4492 = vld [vmem:[#allocation13 + $0xbc] sm:$0xf]
    %v4493 = vld [vmem:[#allocation13 + $0xc0] sm:$0xf]
    %v4494 = vld [vmem:[#allocation13 + $0xc4] sm:$0xf]
    %v4495 = vld [vmem:[#allocation13 + $0xc8] sm:$0xf]
    %v4496 = vld [vmem:[#allocation13 + $0xcc] sm:$0xf]
    %v4497 = vld [vmem:[#allocation13 + $0xd0] sm:$0xf]
    %v4498 = vld [vmem:[#allocation13 + $0xd4] sm:$0xf]
    %v4499 = vld [vmem:[#allocation13 + $0xd8] sm:$0xf]
    %v4500 = vld [vmem:[#allocation13 + $0xdc] sm:$0xf]
    %v4501 = vld [vmem:[#allocation13 + $0xe0] sm:$0xf]
    %v4502 = vld [vmem:[#allocation13 + $0xe4] sm:$0xf]
    %v4503 = vld [vmem:[#allocation13 + $0xe8] sm:$0xf]
    %v4504 = vld [vmem:[#allocation13 + $0xec] sm:$0xf]
    %v4505 = vld [vmem:[#allocation13 + $0xf0] sm:$0xf]
    %v4506 = vld [vmem:[#allocation13 + $0xf4] sm:$0xf]
    %v4507 = vld [vmem:[#allocation13 + $0xf8] sm:$0xf]
    %v4508 = vld [vmem:[#allocation13 + $0xfc] sm:$0xf]
    %v4509 = vld [vmem:[#allocation13 + $0x100] sm:$0xf]
    %v4510 = vld [vmem:[#allocation13 + $0x104] sm:$0xf]
    %v4511 = vld [vmem:[#allocation13 + $0x108] sm:$0xf]
    %v4512 = vld [vmem:[#allocation13 + $0x10c] sm:$0xf]
    %v4513 = vld [vmem:[#allocation13 + $0x110] sm:$0xf]
    %v4514 = vld [vmem:[#allocation13 + $0x114] sm:$0xf]
    %v4515 = vld [vmem:[#allocation13 + $0x118] sm:$0xf]
    %v4516 = vld [vmem:[#allocation13 + $0x11c] sm:$0xf]
    %v4517 = vld [vmem:[#allocation13 + $0x120] sm:$0xf]
    %v4518 = vld [vmem:[#allocation13 + $0x124] sm:$0xf]
    %v4519 = vld [vmem:[#allocation13 + $0x128] sm:$0xf]
    %v4520 = vld [vmem:[#allocation13 + $0x12c] sm:$0xf]
    %v4521 = vld [vmem:[#allocation13 + $0x130] sm:$0xf]
    %v4522 = vld [vmem:[#allocation13 + $0x134] sm:$0xf]
    %v4523 = vld [vmem:[#allocation13 + $0x138] sm:$0xf]
    %v4524 = vld [vmem:[#allocation13 + $0x13c] sm:$0xf]
    %v4525 = vld [vmem:[#allocation13 + $0x140] sm:$0xf]
    %v4526 = vld [vmem:[#allocation13 + $0x144] sm:$0xf]
    %v4527 = vld [vmem:[#allocation13 + $0x148] sm:$0xf]
    %v4528 = vld [vmem:[#allocation13 + $0x14c] sm:$0xf]
    %v4529 = vld [vmem:[#allocation13 + $0x150] sm:$0xf]
    %v4530 = vld [vmem:[#allocation13 + $0x154] sm:$0xf]
    %v4531 = vld [vmem:[#allocation13 + $0x158] sm:$0xf]
    %v4532 = vld [vmem:[#allocation13 + $0x15c] sm:$0xf]
    %v4533 = vld [vmem:[#allocation13 + $0x160] sm:$0xf]
    %v4534 = vld [vmem:[#allocation13 + $0x164] sm:$0xf]
    %v4535 = vld [vmem:[#allocation13 + $0x168] sm:$0xf]
    %v4536 = vld [vmem:[#allocation13 + $0x16c] sm:$0xf]
    %v4537 = vld [vmem:[#allocation13 + $0x170] sm:$0xf]
    %v4538 = vld [vmem:[#allocation13 + $0x174] sm:$0xf]
    %v4539 = vld [vmem:[#allocation13 + $0x178] sm:$0xf]
    %v4540 = vld [vmem:[#allocation13 + $0x17c] sm:$0xf]
    %v4541 = vld [vmem:[#allocation13 + $0x180] sm:$0xf]
    %v4542 = vld [vmem:[#allocation13 + $0x184] sm:$0xf]
    %v4543 = vld [vmem:[#allocation13 + $0x188] sm:$0xf]
    %v4544 = vld [vmem:[#allocation13 + $0x18c] sm:$0xf]
    %v4545 = vld [vmem:[#allocation13 + $0x190] sm:$0xf]
    %v4546 = vld [vmem:[#allocation13 + $0x194] sm:$0xf]
    %v4547 = vld [vmem:[#allocation13 + $0x198] sm:$0xf]
    %v4548 = vld [vmem:[#allocation13 + $0x19c] sm:$0xf]
    %v4549 = vld [vmem:[#allocation13 + $0x1a0] sm:$0xf]
    %v4550 = vld [vmem:[#allocation13 + $0x1a4] sm:$0xf]
    %v4551 = vld [vmem:[#allocation13 + $0x1a8] sm:$0xf]
    %v4552 = vld [vmem:[#allocation13 + $0x1ac] sm:$0xf]
    %v4553 = vld [vmem:[#allocation13 + $0x1b0] sm:$0xf]
    %v4554 = vld [vmem:[#allocation13 + $0x1b4] sm:$0xf]
    %v4555 = vld [vmem:[#allocation13 + $0x1b8] sm:$0xf]
    %v4556 = vld [vmem:[#allocation13 + $0x1bc] sm:$0xf]
    %v4557 = vld [vmem:[#allocation13 + $0x1c0] sm:$0xf]
    %v4558 = vld [vmem:[#allocation13 + $0x1c4] sm:$0xf]
    %v4559 = vld [vmem:[#allocation13 + $0x1c8] sm:$0xf]
    %v4560 = vld [vmem:[#allocation13 + $0x1cc] sm:$0xf]
    %v4561 = vld [vmem:[#allocation13 + $0x1d0] sm:$0xf]
    %v4562 = vld [vmem:[#allocation13 + $0x1d4] sm:$0xf]
    %v4563 = vld [vmem:[#allocation13 + $0x1d8] sm:$0xf]
    %v4564 = vld [vmem:[#allocation13 + $0x1dc] sm:$0xf]
    %v4565 = vld [vmem:[#allocation13 + $0x1e0] sm:$0xf]
    %v4566 = vld [vmem:[#allocation13 + $0x1e4] sm:$0xf]
    %v4567 = vld [vmem:[#allocation13 + $0x1e8] sm:$0xf]
    %v4568 = vld [vmem:[#allocation13 + $0x1ec] sm:$0xf]
    %v4569 = vld [vmem:[#allocation13 + $0x1f0] sm:$0xf]
    %v4570 = vld [vmem:[#allocation13 + $0x1f4] sm:$0xf]
    %v4571 = vld [vmem:[#allocation13 + $0x1f8] sm:$0xf]
    %v4572 = vld [vmem:[#allocation13 + $0x1fc] sm:$0xf]
    %v4573 = vld [vmem:[#allocation14] sm:$0x1]
    %v4575 = vperm.slane %v4573, 0
    %v4705 = vunpack.c.l.b16 %v4445
    %v4706 = vunpack.c.l.b16 %v4446
    %v4707 = vunpack.c.l.b16 %v4447
    %v4708 = vunpack.c.l.b16 %v4448
    %v4709 = vunpack.c.l.b16 %v4449
    %v4710 = vunpack.c.l.b16 %v4450
    %v4711 = vunpack.c.l.b16 %v4451
    %v4712 = vunpack.c.l.b16 %v4452
    %v4713 = vunpack.c.l.b16 %v4453
    %v4714 = vunpack.c.l.b16 %v4454
    %v4715 = vunpack.c.l.b16 %v4455
    %v4716 = vunpack.c.l.b16 %v4456
    %v4717 = vunpack.c.l.b16 %v4457
    %v4718 = vunpack.c.l.b16 %v4458
    %v4719 = vunpack.c.l.b16 %v4459
    %v4720 = vunpack.c.l.b16 %v4460
    %v4721 = vunpack.c.l.b16 %v4461
    %v4722 = vunpack.c.l.b16 %v4462
    %v4723 = vunpack.c.l.b16 %v4463
    %v4724 = vunpack.c.l.b16 %v4464
    %v4725 = vunpack.c.l.b16 %v4465
    %v4726 = vunpack.c.l.b16 %v4466
    %v4727 = vunpack.c.l.b16 %v4467
    %v4728 = vunpack.c.l.b16 %v4468
    %v4729 = vunpack.c.l.b16 %v4469
    %v4730 = vunpack.c.l.b16 %v4470
    %v4731 = vunpack.c.l.b16 %v4471
    %v4732 = vunpack.c.l.b16 %v4472
    %v4733 = vunpack.c.l.b16 %v4473
    %v4734 = vunpack.c.l.b16 %v4474
    %v4735 = vunpack.c.l.b16 %v4475
    %v4736 = vunpack.c.l.b16 %v4476
    %v4737 = vunpack.c.l.b16 %v4477
    %v4738 = vunpack.c.l.b16 %v4478
    %v4739 = vunpack.c.l.b16 %v4479
    %v4740 = vunpack.c.l.b16 %v4480
    %v4741 = vunpack.c.l.b16 %v4481
    %v4742 = vunpack.c.l.b16 %v4482
    %v4743 = vunpack.c.l.b16 %v4483
    %v4744 = vunpack.c.l.b16 %v4484
    %v4745 = vunpack.c.l.b16 %v4485
    %v4746 = vunpack.c.l.b16 %v4486
    %v4747 = vunpack.c.l.b16 %v4487
    %v4748 = vunpack.c.l.b16 %v4488
    %v4749 = vunpack.c.l.b16 %v4489
    %v4750 = vunpack.c.l.b16 %v4490
    %v4751 = vunpack.c.l.b16 %v4491
    %v4752 = vunpack.c.l.b16 %v4492
    %v4753 = vunpack.c.l.b16 %v4493
    %v4754 = vunpack.c.l.b16 %v4494
    %v4755 = vunpack.c.l.b16 %v4495
    %v4756 = vunpack.c.l.b16 %v4496
    %v4757 = vunpack.c.l.b16 %v4497
    %v4758 = vunpack.c.l.b16 %v4498
    %v4759 = vunpack.c.l.b16 %v4499
    %v4760 = vunpack.c.l.b16 %v4500
    %v4761 = vunpack.c.l.b16 %v4501
    %v4762 = vunpack.c.l.b16 %v4502
    %v4763 = vunpack.c.l.b16 %v4503
    %v4764 = vunpack.c.l.b16 %v4504
    %v4765 = vunpack.c.l.b16 %v4505
    %v4766 = vunpack.c.l.b16 %v4506
    %v4767 = vunpack.c.l.b16 %v4507
    %v4768 = vunpack.c.l.b16 %v4508
    %v4769 = vunpack.c.l.b16 %v4509
    %v4770 = vunpack.c.l.b16 %v4510
    %v4771 = vunpack.c.l.b16 %v4511
    %v4772 = vunpack.c.l.b16 %v4512
    %v4773 = vunpack.c.l.b16 %v4513
    %v4774 = vunpack.c.l.b16 %v4514
    %v4775 = vunpack.c.l.b16 %v4515
    %v4776 = vunpack.c.l.b16 %v4516
    %v4777 = vunpack.c.l.b16 %v4517
    %v4778 = vunpack.c.l.b16 %v4518
    %v4779 = vunpack.c.l.b16 %v4519
    %v4780 = vunpack.c.l.b16 %v4520
    %v4781 = vunpack.c.l.b16 %v4521
    %v4782 = vunpack.c.l.b16 %v4522
    %v4783 = vunpack.c.l.b16 %v4523
    %v4784 = vunpack.c.l.b16 %v4524
    %v4785 = vunpack.c.l.b16 %v4525
    %v4786 = vunpack.c.l.b16 %v4526
    %v4787 = vunpack.c.l.b16 %v4527
    %v4788 = vunpack.c.l.b16 %v4528
    %v4789 = vunpack.c.l.b16 %v4529
    %v4790 = vunpack.c.l.b16 %v4530
    %v4791 = vunpack.c.l.b16 %v4531
    %v4792 = vunpack.c.l.b16 %v4532
    %v4793 = vunpack.c.l.b16 %v4533
    %v4794 = vunpack.c.l.b16 %v4534
    %v4795 = vunpack.c.l.b16 %v4535
    %v4796 = vunpack.c.l.b16 %v4536
    %v4797 = vunpack.c.l.b16 %v4537
    %v4798 = vunpack.c.l.b16 %v4538
    %v4799 = vunpack.c.l.b16 %v4539
    %v4800 = vunpack.c.l.b16 %v4540
    %v4801 = vunpack.c.l.b16 %v4541
    %v4802 = vunpack.c.l.b16 %v4542
    %v4803 = vunpack.c.l.b16 %v4543
    %v4804 = vunpack.c.l.b16 %v4544
    %v4805 = vunpack.c.l.b16 %v4545
    %v4806 = vunpack.c.l.b16 %v4546
    %v4807 = vunpack.c.l.b16 %v4547
    %v4808 = vunpack.c.l.b16 %v4548
    %v4809 = vunpack.c.l.b16 %v4549
    %v4810 = vunpack.c.l.b16 %v4550
    %v4811 = vunpack.c.l.b16 %v4551
    %v4812 = vunpack.c.l.b16 %v4552
    %v4813 = vunpack.c.l.b16 %v4553
    %v4814 = vunpack.c.l.b16 %v4554
    %v4815 = vunpack.c.l.b16 %v4555
    %v4816 = vunpack.c.l.b16 %v4556
    %v4817 = vunpack.c.l.b16 %v4557
    %v4818 = vunpack.c.l.b16 %v4558
    %v4819 = vunpack.c.l.b16 %v4559
    %v4820 = vunpack.c.l.b16 %v4560
    %v4821 = vunpack.c.l.b16 %v4561
    %v4822 = vunpack.c.l.b16 %v4562
    %v4823 = vunpack.c.l.b16 %v4563
    %v4824 = vunpack.c.l.b16 %v4564
    %v4825 = vunpack.c.l.b16 %v4565
    %v4826 = vunpack.c.l.b16 %v4566
    %v4827 = vunpack.c.l.b16 %v4567
    %v4828 = vunpack.c.l.b16 %v4568
    %v4829 = vunpack.c.l.b16 %v4569
    %v4830 = vunpack.c.l.b16 %v4570
    %v4831 = vunpack.c.l.b16 %v4571
    %v4832 = vunpack.c.l.b16 %v4572
    %v4833 = vpack.c.b16 %v4706, %v4705
    %v4834 = vpack.c.b16 %v4708, %v4707
    %v4835 = vpack.c.b16 %v4710, %v4709
    %v4836 = vpack.c.b16 %v4712, %v4711
    %v4837 = vpack.c.b16 %v4714, %v4713
    %v4838 = vpack.c.b16 %v4716, %v4715
    %v4839 = vpack.c.b16 %v4718, %v4717
    %v4840 = vpack.c.b16 %v4720, %v4719
    %v4841 = vpack.c.b16 %v4722, %v4721
    %v4842 = vpack.c.b16 %v4724, %v4723
    %v4843 = vpack.c.b16 %v4726, %v4725
    %v4844 = vpack.c.b16 %v4728, %v4727
    %v4845 = vpack.c.b16 %v4730, %v4729
    %v4846 = vpack.c.b16 %v4732, %v4731
    %v4847 = vpack.c.b16 %v4734, %v4733
    %v4848 = vpack.c.b16 %v4736, %v4735
    %v4849 = vpack.c.b16 %v4738, %v4737
    %v4850 = vpack.c.b16 %v4740, %v4739
    %v4851 = vpack.c.b16 %v4742, %v4741
    %v4852 = vpack.c.b16 %v4744, %v4743
    %v4853 = vpack.c.b16 %v4746, %v4745
    %v4854 = vpack.c.b16 %v4748, %v4747
    %v4855 = vpack.c.b16 %v4750, %v4749
    %v4856 = vpack.c.b16 %v4752, %v4751
    %v4857 = vpack.c.b16 %v4754, %v4753
    %v4858 = vpack.c.b16 %v4756, %v4755
    %v4859 = vpack.c.b16 %v4758, %v4757
    %v4860 = vpack.c.b16 %v4760, %v4759
    %v4861 = vpack.c.b16 %v4762, %v4761
    %v4862 = vpack.c.b16 %v4764, %v4763
    %v4863 = vpack.c.b16 %v4766, %v4765
    %v4864 = vpack.c.b16 %v4768, %v4767
    %v4865 = vpack.c.b16 %v4770, %v4769
    %v4866 = vpack.c.b16 %v4772, %v4771
    %v4867 = vpack.c.b16 %v4774, %v4773
    %v4868 = vpack.c.b16 %v4776, %v4775
    %v4869 = vpack.c.b16 %v4778, %v4777
    %v4870 = vpack.c.b16 %v4780, %v4779
    %v4871 = vpack.c.b16 %v4782, %v4781
    %v4872 = vpack.c.b16 %v4784, %v4783
    %v4873 = vpack.c.b16 %v4786, %v4785
    %v4874 = vpack.c.b16 %v4788, %v4787
    %v4875 = vpack.c.b16 %v4790, %v4789
    %v4876 = vpack.c.b16 %v4792, %v4791
    %v4877 = vpack.c.b16 %v4794, %v4793
    %v4878 = vpack.c.b16 %v4796, %v4795
    %v4879 = vpack.c.b16 %v4798, %v4797
    %v4880 = vpack.c.b16 %v4800, %v4799
    %v4881 = vpack.c.b16 %v4802, %v4801
    %v4882 = vpack.c.b16 %v4804, %v4803
    %v4883 = vpack.c.b16 %v4806, %v4805
    %v4884 = vpack.c.b16 %v4808, %v4807
    %v4885 = vpack.c.b16 %v4810, %v4809
    %v4886 = vpack.c.b16 %v4812, %v4811
    %v4887 = vpack.c.b16 %v4814, %v4813
    %v4888 = vpack.c.b16 %v4816, %v4815
    %v4889 = vpack.c.b16 %v4818, %v4817
    %v4890 = vpack.c.b16 %v4820, %v4819
    %v4891 = vpack.c.b16 %v4822, %v4821
    %v4892 = vpack.c.b16 %v4824, %v4823
    %v4893 = vpack.c.b16 %v4826, %v4825
    %v4894 = vpack.c.b16 %v4828, %v4827
    %v4895 = vpack.c.b16 %v4830, %v4829
    %v4896 = vpack.c.b16 %v4832, %v4831
    %4961 = vmatpush.bf16.msra.mxu0 %v4840
    %4962 = vmatpush.bf16.msra.mxu0 %v4839
    %4963 = vmatpush.bf16.msra.mxu0 %v4838
    %4964 = vmatpush.bf16.msra.mxu0 %v4837
    %4965 = vmatpush.bf16.msra.mxu0 %v4836
    %4966 = vmatpush.bf16.msra.mxu0 %v4835
    %4967 = vmatpush.bf16.msra.mxu0 %v4834
    %4968 = vmatpush.bf16.msra.mxu0 %v4833
    %4969 = vmatmul.bf16.gmra.mxu0 %v4437
    %v4970 = vpop.f32.mrf.mxu0
    %v4971 = vadd.f32 %v4575, %v4970
    %v4972 = vpop.f32.mrf.mxu0
    %4973 = vdwg.mxu0
    %4974 = vmatpush.bf16.msra.mxu0 %v4848
    %4975 = vmatpush.bf16.msra.mxu0 %v4847
    %4976 = vmatpush.bf16.msra.mxu0 %v4846
    %4977 = vmatpush.bf16.msra.mxu0 %v4845
    %4978 = vmatpush.bf16.msra.mxu0 %v4844
    %4979 = vmatpush.bf16.msra.mxu0 %v4843
    %4980 = vmatpush.bf16.msra.mxu0 %v4842
    %4981 = vmatpush.bf16.msra.mxu0 %v4841
    %4982 = vmatmul.bf16.gmra.mxu0 %v4438
    %v4983 = vpop.f32.mrf.mxu0
    %v4984 = vadd.f32 %v4971, %v4983
    %v4985 = vpop.f32.mrf.mxu0
    %4986 = vdwg.mxu0
    %4987 = vmatpush.bf16.msra.mxu0 %v4856
    %4988 = vmatpush.bf16.msra.mxu0 %v4855
    %4989 = vmatpush.bf16.msra.mxu0 %v4854
    %4990 = vmatpush.bf16.msra.mxu0 %v4853
    %4991 = vmatpush.bf16.msra.mxu0 %v4852
    %4992 = vmatpush.bf16.msra.mxu0 %v4851
    %4993 = vmatpush.bf16.msra.mxu0 %v4850
    %4994 = vmatpush.bf16.msra.mxu0 %v4849
    %4995 = vmatmul.bf16.gmra.mxu0 %v4439
    %v4996 = vpop.f32.mrf.mxu0
    %v4997 = vadd.f32 %v4984, %v4996
    %v4998 = vpop.f32.mrf.mxu0
    %4999 = vdwg.mxu0
    %5000 = vmatpush.bf16.msra.mxu0 %v4864
    %5001 = vmatpush.bf16.msra.mxu0 %v4863
    %5002 = vmatpush.bf16.msra.mxu0 %v4862
    %5003 = vmatpush.bf16.msra.mxu0 %v4861
    %5004 = vmatpush.bf16.msra.mxu0 %v4860
    %5005 = vmatpush.bf16.msra.mxu0 %v4859
    %5006 = vmatpush.bf16.msra.mxu0 %v4858
    %5007 = vmatpush.bf16.msra.mxu0 %v4857
    %5008 = vmatmul.bf16.gmra.mxu0 %v4440
    %v5009 = vpop.f32.mrf.mxu0
    %v5010 = vadd.f32 %v4997, %v5009
    %v5011 = vpop.f32.mrf.mxu0
    %5012 = vdwg.mxu0
    %5013 = vmatpush.bf16.msra.mxu0 %v4872
    %5014 = vmatpush.bf16.msra.mxu0 %v4871
    %5015 = vmatpush.bf16.msra.mxu0 %v4870
    %5016 = vmatpush.bf16.msra.mxu0 %v4869
    %5017 = vmatpush.bf16.msra.mxu0 %v4868
    %5018 = vmatpush.bf16.msra.mxu0 %v4867
    %5019 = vmatpush.bf16.msra.mxu0 %v4866
    %5020 = vmatpush.bf16.msra.mxu0 %v4865
    %5021 = vmatmul.bf16.gmra.mxu0 %v4441
    %v5022 = vpop.f32.mrf.mxu0
    %v5023 = vadd.f32 %v5010, %v5022
    %v5024 = vpop.f32.mrf.mxu0
    %5025 = vdwg.mxu0
    %5026 = vmatpush.bf16.msra.mxu0 %v4880
    %5027 = vmatpush.bf16.msra.mxu0 %v4879
    %5028 = vmatpush.bf16.msra.mxu0 %v4878
    %5029 = vmatpush.bf16.msra.mxu0 %v4877
    %5030 = vmatpush.bf16.msra.mxu0 %v4876
    %5031 = vmatpush.bf16.msra.mxu0 %v4875
    %5032 = vmatpush.bf16.msra.mxu0 %v4874
    %5033 = vmatpush.bf16.msra.mxu0 %v4873
    %5034 = vmatmul.bf16.gmra.mxu0 %v4442
    %v5035 = vpop.f32.mrf.mxu0
    %v5036 = vadd.f32 %v5023, %v5035
    %v5037 = vpop.f32.mrf.mxu0
    %5038 = vdwg.mxu0
    %5039 = vmatpush.bf16.msra.mxu0 %v4888
    %5040 = vmatpush.bf16.msra.mxu0 %v4887
    %5041 = vmatpush.bf16.msra.mxu0 %v4886
    %5042 = vmatpush.bf16.msra.mxu0 %v4885
    %5043 = vmatpush.bf16.msra.mxu0 %v4884
    %5044 = vmatpush.bf16.msra.mxu0 %v4883
    %5045 = vmatpush.bf16.msra.mxu0 %v4882
    %5046 = vmatpush.bf16.msra.mxu0 %v4881
    %5047 = vmatmul.bf16.gmra.mxu0 %v4443
    %v5048 = vpop.f32.mrf.mxu0
    %v5049 = vadd.f32 %v5036, %v5048
    %v5050 = vpop.f32.mrf.mxu0
    %5051 = vdwg.mxu0
    %5052 = vmatpush.bf16.msra.mxu0 %v4896
    %5053 = vmatpush.bf16.msra.mxu0 %v4895
    %5054 = vmatpush.bf16.msra.mxu0 %v4894
    %5055 = vmatpush.bf16.msra.mxu0 %v4893
    %5056 = vmatpush.bf16.msra.mxu0 %v4892
    %5057 = vmatpush.bf16.msra.mxu0 %v4891
    %5058 = vmatpush.bf16.msra.mxu0 %v4890
    %5059 = vmatpush.bf16.msra.mxu0 %v4889
    %5060 = vmatmul.bf16.gmra.mxu0 %v4444
    %v5061 = vpop.f32.mrf.mxu0
    %v5062 = vadd.f32 %v5049, %v5061
    %v5063 = vpop.f32.mrf.mxu0
    %5064 = vdwg.mxu0
    %5065 = vst [vmem:[%s11] sm:$0xff] %v5062
    // Predicated region
    $region78: #{diffusion_denoiser_forward.1} parent=1 // pred_check
      _
    $region79: #{diffusion_denoiser_forward.1} parent=1 // pred_check_branch
      %5067 = sbr.rel (0) target = $region81
    $region80: #{diffusion_denoiser_forward.1} parent=1 // pred_region
      _
    $region81: #{diffusion_denoiser_forward.1} parent=1 // pred_fallthru
      _
    // Predicated region
    $region82: #{diffusion_denoiser_forward.1} parent=1 // pred_check
      _
    $region83: #{diffusion_denoiser_forward.1} parent=1 // pred_check_branch
      %5069 = sbr.rel (0) target = $region85
    $region84: #{diffusion_denoiser_forward.1} parent=1 // pred_region
      _
    $region85: #{diffusion_denoiser_forward.1} parent=1 // pred_fallthru
      _
    %5070 = vsyncpa [#allocation4], 1
    %5071 = vsyncpa [#allocation6], 1
    %5072 = vsyncpa [#allocation9], 1
    %5073 = vsyncpa [#allocation12], 1
    %5074 = vsyncpa [#allocation15], 1

</llo_original>
